<compile_context>
chip_gen: v6e
topology: v6e:2x2x1
jax: 0.10.0
libtpu: 0.0.40
codegen_flags: <defaults>
</compile_context>

<pallas_src>
import functools
import numpy as np
import jax
import jax.numpy as jnp
from jax.experimental import pallas as pl
from jax.experimental.pallas import tpu as pltpu


_TM_MAX = 256          # rows (im2col) tile
_TN_MAX = 256          # output-channel tile
_TK_MAX = 1024         # reduction tile; K below this is a single full block
_VMEM_LIMIT = 32 * 1024 * 1024   # fits v5e/v6e (128 MiB) and v7x (64 MiB physical)


def _round_up(x, m):
    return (x + m - 1) // m * m


# ----------------------------------------------------------------------------
# Fused GEMM kernel:  out = act2( act1(x @ w + b) [@ w2 + b2] )
# ----------------------------------------------------------------------------
def _make_gemm_kernel(*, relu, fuse2, relu2, multi_k):
    def kernel(*refs):
        if fuse2:
            x_ref, w_ref, b_ref, w2_ref, b2_ref = refs[:5]
            rest = refs[5:]
        else:
            x_ref, w_ref, b_ref = refs[:3]
            w2_ref = b2_ref = None
            rest = refs[3:]
        if multi_k:
            o_ref, acc_ref = rest
        else:
            (o_ref,) = rest
            acc_ref = None

        def epilogue(acc):
            y = acc + b_ref[...]
            if relu:
                y = jnp.maximum(y, 0.0)
            if fuse2:
                y = jnp.dot(y.astype(w2_ref.dtype), w2_ref[...],
                            preferred_element_type=jnp.float32) + b2_ref[...]
                if relu2:
                    y = jnp.maximum(y, 0.0)
            o_ref[...] = y.astype(o_ref.dtype)

        if not multi_k:
            # K fits one block: no cross-step accumulation / scratch needed.
            epilogue(jnp.dot(x_ref[...], w_ref[...],
                             preferred_element_type=jnp.float32))
        else:
            k = pl.program_id(2)

            @pl.when(k == 0)
            def _():
                acc_ref[...] = jnp.zeros_like(acc_ref)

            acc_ref[...] += jnp.dot(x_ref[...], w_ref[...],
                                    preferred_element_type=jnp.float32)

            @pl.when(k == pl.num_programs(2) - 1)
            def _():
                epilogue(acc_ref[...])

    return kernel


def gemm_bias_act(x, w, b, *, relu=False, w2=None, b2=None, relu2=False,
                  out_dtype=jnp.bfloat16):
    """y = act(x @ w + b), optionally followed by a fused (y @ w2 + b2) epilogue.

    x: [M, K], w: [K, N], b: [N]; w2: [N, N2], b2: [N2].  bf16 MXU operands,
    f32 accumulation/epilogue.  Tiled grid (M, N, K) with a VMEM accumulator
    when K is tiled.
    """
    M, K = x.shape
    Kw, N = w.shape
    assert K == Kw
    fuse2 = w2 is not None

    tm = min(_TM_MAX, _round_up(M, 8))
    Mp = _round_up(M, tm)
    if K <= _TK_MAX:
        tk, Kp = K, K
    else:
        tk = _TK_MAX
        Kp = _round_up(K, tk)
    if N <= _TN_MAX:
        tn, Np = N, N
    else:
        tn = _TN_MAX
        Np = _round_up(N, tn)
    if fuse2:
        assert tn == N and Np == N, "fused epilogue matmul needs untiled N"
    multi_k = (Kp // tk) > 1

    xb = x.astype(jnp.bfloat16)
    wb = w.astype(jnp.bfloat16)
    if (Mp, Kp) != (M, K):
        xb = jnp.pad(xb, ((0, Mp - M), (0, Kp - K)))
    if (Kp, Np) != (K, N):
        wb = jnp.pad(wb, ((0, Kp - K), (0, Np - N)))
    bb = jnp.reshape(b, (1, N)).astype(jnp.float32)
    if Np != N:
        bb = jnp.pad(bb, ((0, 0), (0, Np - N)))

    in_specs = [
        pl.BlockSpec((tm, tk), lambda i, j, k: (i, k)),
        pl.BlockSpec((tk, tn), lambda i, j, k: (k, j)),
        pl.BlockSpec((1, tn), lambda i, j, k: (0, j)),
    ]
    operands = [xb, wb, bb]

    if fuse2:
        N2 = w2.shape[1]
        in_specs += [
            pl.BlockSpec((N, N2), lambda i, j, k: (0, 0)),
            pl.BlockSpec((1, N2), lambda i, j, k: (0, 0)),
        ]
        operands += [w2.astype(jnp.bfloat16),
                     jnp.reshape(b2, (1, N2)).astype(jnp.float32)]
        n_out, out_block_n = N2, N2
    else:
        n_out, out_block_n = Np, tn

    kernel = _make_gemm_kernel(relu=relu, fuse2=fuse2, relu2=relu2,
                               multi_k=multi_k)
    scratch = [pltpu.VMEM((tm, tn), jnp.float32)] if multi_k else []

    out = pl.pallas_call(
        kernel,
        out_shape=jax.ShapeDtypeStruct((Mp, n_out), out_dtype),
        grid=(Mp // tm, Np // tn, Kp // tk),
        in_specs=in_specs,
        out_specs=pl.BlockSpec((tm, out_block_n), lambda i, j, k: (i, j)),
        scratch_shapes=scratch,
        compiler_params=pltpu.CompilerParams(
            dimension_semantics=("parallel", "parallel", "arbitrary"),
            vmem_limit_bytes=_VMEM_LIMIT),
    )(*operands)

    if Mp != M:
        out = out[:M]
    if (not fuse2) and Np != N:
        out = out[:, :N]
    return out


# ----------------------------------------------------------------------------
# Convolution = im2col (XLA glue, bf16) + fused Pallas GEMM
# ----------------------------------------------------------------------------
def extract_patches(x, kh, kw, stride=1, dilation=1, padding=0):
    """x: [B,H,W,C] -> [B,OH,OW,kh*kw*C] (pure slicing/concat glue, bf16)."""
    B, H, W, C = x.shape
    xp = jnp.pad(x, ((0, 0), (padding, padding), (padding, padding), (0, 0)))
    Hp, Wp = H + 2 * padding, W + 2 * padding
    OH = (Hp - dilation * (kh - 1) - 1) // stride + 1
    OW = (Wp - dilation * (kw - 1) - 1) // stride + 1
    cols = []
    for ky in range(kh):
        for kx in range(kw):
            ys, xs = ky * dilation, kx * dilation
            cols.append(xp[:, ys:ys + (OH - 1) * stride + 1:stride,
                            xs:xs + (OW - 1) * stride + 1:stride, :])
    return jnp.concatenate(cols, axis=-1)


def conv2d(x, w, bias, *, stride=1, dilation=1, padding=0, relu=False,
           w2=None, b2=None, relu2=False, out_dtype=jnp.bfloat16):
    """x: [B,H,W,Cin] (bf16); w: [kh,kw,Cin,Cout]; bias: [Cout].
    Optionally fuses a following 1x1 conv (w2:[Cout,C2], b2:[C2]) as an epilogue."""
    kh, kw, Cin, Cout = w.shape
    B = x.shape[0]
    if kh == 1 and kw == 1 and stride == 1 and padding == 0:
        _, OH, OW, _ = x.shape
        patches = x.reshape(B * OH * OW, Cin)
    else:
        p = extract_patches(x, kh, kw, stride, dilation, padding)
        _, OH, OW, _ = p.shape
        patches = p.reshape(B * OH * OW, kh * kw * Cin)
    wmat = w.reshape(kh * kw * Cin, Cout)
    y = gemm_bias_act(patches, wmat, bias, relu=relu,
                      w2=w2, b2=b2, relu2=relu2, out_dtype=out_dtype)
    return y.reshape(B, OH, OW, y.shape[1])


def fold_bn(w, bn, eps=1e-5):
    """Fold eval-mode BatchNorm into conv weight/bias (exact)."""
    scale = bn['gamma'] / jnp.sqrt(bn['var'] + eps)
    return w * scale[None, None, None, :], bn['beta'] - bn['mean'] * scale


def conv_bn_relu(x, w, bn, *, stride=1, dilation=1, padding=0, relu=True,
                 w2=None, b2=None, relu2=False, out_dtype=jnp.bfloat16):
    wf, bf = fold_bn(w, bn)
    return conv2d(x, wf, bf, stride=stride, dilation=dilation, padding=padding,
                  relu=relu, w2=w2, b2=b2, relu2=relu2, out_dtype=out_dtype)


# ----------------------------------------------------------------------------
# Fused global-average-pool + 1x1 conv (+ BN folded) + ReLU  (ASPP pooling branch)
# ----------------------------------------------------------------------------
def _make_gap_linear_kernel(*, inv_hw, relu, multi):
    def kernel(*refs):
        x_ref, w_ref, b_ref = refs[:3]
        if multi:
            o_ref, acc_ref = refs[3:]
        else:
            (o_ref,) = refs[3:]
            acc_ref = None

        def finish(total):
            mean = (total * inv_hw).astype(w_ref.dtype)
            y = jnp.dot(mean, w_ref[...],
                        preferred_element_type=jnp.float32) + b_ref[...]
            if relu:
                y = jnp.maximum(y, 0.0)
            o_ref[...] = y.astype(o_ref.dtype)

        if not multi:
            finish(jnp.sum(x_ref[...].astype(jnp.float32), axis=1))
        else:
            i = pl.program_id(0)

            @pl.when(i == 0)
            def _():
                acc_ref[...] = jnp.zeros_like(acc_ref)

            acc_ref[...] += jnp.sum(x_ref[...].astype(jnp.float32), axis=1)

            @pl.when(i == pl.num_programs(0) - 1)
            def _():
                finish(acc_ref[...])

    return kernel


def gap_linear(x, w, b, *, relu=True, out_dtype=jnp.bfloat16):
    """x: [B, HW, C] -> relu(mean_HW(x) @ w + b) : [B, N], all in one kernel."""
    B, HW, C = x.shape
    N = w.shape[1]
    if HW <= 512:
        t, HWp = HW, HW
    else:
        t = 512
        HWp = _round_up(HW, t)
        x = jnp.pad(x, ((0, 0), (0, HWp - HW), (0, 0)))   # zeros don't change the sum
    multi = (HWp // t) > 1
    kernel = _make_gap_linear_kernel(inv_hw=1.0 / HW, relu=relu, multi=multi)
    scratch = [pltpu.VMEM((B, C), jnp.float32)] if multi else []
    return pl.pallas_call(
        kernel,
        out_shape=jax.ShapeDtypeStruct((B, N), out_dtype),
        grid=(HWp // t,),
        in_specs=[pl.BlockSpec((B, t, C), lambda i: (0, i, 0)),
                  pl.BlockSpec((C, N), lambda i: (0, 0)),
                  pl.BlockSpec((1, N), lambda i: (0, 0))],
        out_specs=pl.BlockSpec((B, N), lambda i: (0, 0)),
        scratch_shapes=scratch,
        compiler_params=pltpu.CompilerParams(
            dimension_semantics=("arbitrary",),
            vmem_limit_bytes=_VMEM_LIMIT),
    )(x.astype(jnp.bfloat16), w.astype(jnp.bfloat16),
      jnp.reshape(b, (1, N)).astype(jnp.float32))


# ----------------------------------------------------------------------------
# Fused separable bilinear upsample (align_corners=False), emits NCHW directly.
# Channel-tiled: `tc` channels per grid step (statically unrolled 2-D matmuls)
# to amortize per-step overhead and weight fetches.
# ----------------------------------------------------------------------------
def bilinear_matrix(in_size, out_size):
    scale = in_size / out_size
    dst = np.arange(out_size, dtype=np.float64)
    src = np.maximum((dst + 0.5) * scale - 0.5, 0.0)     # PyTorch align_corners=False
    i0 = np.minimum(np.floor(src).astype(np.int64), in_size - 1)
    i1 = np.minimum(i0 + 1, in_size - 1)
    w1 = (src - i0).astype(np.float32)
    w0 = 1.0 - w1
    W = np.zeros((out_size, in_size), dtype=np.float32)
    W[np.arange(out_size), i0] += w0
    W[np.arange(out_size), i1] += w1
    return jnp.asarray(W)


def _make_bilinear_kernel(tc):
    def kernel(x_ref, wy_ref, wxt_ref, o_ref):
        # x: [tc, hp, wp]; wy: [out_h, hp]; wxt: [wp, out_w]
        for c in range(tc):   # static unroll over the channel tile
            t = jnp.dot(wy_ref[...], x_ref[c],
                        preferred_element_type=jnp.float32)          # [out_h, wp]
            o_ref[c] = jnp.dot(t, wxt_ref[...],
                               preferred_element_type=jnp.float32)   # [out_h, out_w]
    return kernel


def _pick_channel_tile(bc, hp, wp, out_h, out_w):
    # f32 bytes per channel for input block, VMEM intermediate and output block;
    # keep roughly within an 8 MiB per-buffer budget (blocks are double-buffered).
    per_chan = 4 * (hp * wp + out_h * wp + out_h * out_w)
    budget = 8 * 1024 * 1024
    return int(max(1, min(8, bc, budget // max(per_chan, 1))))


def bilinear_resize_to_nchw(x_nhwc, out_h, out_w):
    """x: [B,h,w,C] (f32 logits) -> [B,C,out_h,out_w], matching
    F.interpolate(mode='bilinear', align_corners=False)."""
    B, h, w, C = x_nhwc.shape
    xs = jnp.transpose(x_nhwc, (0, 3, 1, 2)).reshape(B * C, h, w).astype(jnp.float32)
    hp, wp = _round_up(h, 8), _round_up(w, 8)
    if (hp, wp) != (h, w):
        xs = jnp.pad(xs, ((0, 0), (0, hp - h), (0, wp - w)))
    BC = B * C
    tc = _pick_channel_tile(BC, hp, wp, out_h, out_w)
    BCp = _round_up(BC, tc)
    if BCp != BC:
        xs = jnp.pad(xs, ((0, BCp - BC), (0, 0), (0, 0)))
    Wy = jnp.pad(bilinear_matrix(h, out_h), ((0, 0), (0, hp - h)))        # [out_h, hp]
    WxT = jnp.pad(bilinear_matrix(w, out_w), ((0, 0), (0, wp - w))).T     # [wp, out_w]
    out = pl.pallas_call(
        _make_bilinear_kernel(tc),
        out_shape=jax.ShapeDtypeStruct((BCp, out_h, out_w), jnp.float32),
        grid=(BCp // tc,),
        in_specs=[pl.BlockSpec((tc, hp, wp), lambda i: (i, 0, 0)),
                  pl.BlockSpec((out_h, hp), lambda i: (0, 0)),
                  pl.BlockSpec((wp, out_w), lambda i: (0, 0))],
        out_specs=pl.BlockSpec((tc, out_h, out_w), lambda i: (i, 0, 0)),
        compiler_params=pltpu.CompilerParams(
            dimension_semantics=("parallel",),
            vmem_limit_bytes=_VMEM_LIMIT),
    )(xs, Wy, WxT)
    if BCp != BC:
        out = out[:BC]
    return out.reshape(B, C, out_h, out_w)


# ----------------------------------------------------------------------------
# DeepLabV3: backbone + ASPP classifier + aux FCN head
# ----------------------------------------------------------------------------
def backbone(x, p):
    x = conv_bn_relu(x, p['c1_w'], p['c1_bn'], stride=2, padding=1)        # /2, 3->16
    x = conv_bn_relu(x, p['c2_w'], p['c2_bn'], stride=2, padding=1)        # /4, 16->32
    aux = x
    x = conv_bn_relu(x, p['c3_w'], p['c3_bn'], dilation=2, padding=2)      # 32->64 atrous
    return {'out': x, 'aux': aux}


def aspp(x, p):
    b0 = conv_bn_relu(x, p['b0_w'], p['b0_bn'])                            # 1x1
    b1 = conv_bn_relu(x, p['b1_w'], p['b1_bn'], dilation=2, padding=2)     # atrous 3x3
    b2 = conv_bn_relu(x, p['b2_w'], p['b2_bn'], dilation=4, padding=4)     # atrous 3x3
    B, H, W, C = x.shape
    # ASPP pooling branch: GAP + 1x1 conv + BN + ReLU fused into one kernel;
    # bilinear 1x1 -> HxW upsample is exactly a broadcast.
    wp_f, bp_f = fold_bn(p['bp_w'], p['bp_bn'])
    pooled = gap_linear(x.reshape(B, H * W, C), wp_f[0, 0], bp_f, relu=True)   # [B, a]
    pool_feat = jnp.broadcast_to(pooled[:, None, None, :],
                                 (B, H, W, pooled.shape[-1]))
    cat = jnp.concatenate([b0, b1, b2, pool_feat], axis=-1)
    # TODO(synk): ASPP Dropout is identity in eval mode; omitted.
    return conv_bn_relu(cat, p['proj_w'], p['proj_bn'])                    # project 1x1


def classifier(x, p):
    x = aspp(x, p['aspp'])
    # 3x3 conv + BN + ReLU with the final 1x1 class conv fused as an epilogue matmul.
    return conv_bn_relu(x, p['head_w'], p['head_bn'], padding=1, relu=True,
                        w2=p['cls_w'][0, 0], b2=p['cls_b'], relu2=False,
                        out_dtype=jnp.float32)


def aux_classifier(x, p):
    # FCNHead: 3x3 conv + BN + ReLU (+dropout=identity in eval) + fused 1x1 conv.
    # TODO(synk): FCNHead Dropout is identity in eval mode; omitted.
    return conv_bn_relu(x, p['a1_w'], p['a1_bn'], padding=1, relu=True,
                        w2=p['a2_w'][0, 0], b2=p['a2_b'], relu2=False,
                        out_dtype=jnp.float32)


def deeplabv3_forward(x_nchw, params):
    B, C, H, W = x_nchw.shape
    x = jnp.transpose(x_nchw, (0, 2, 3, 1)).astype(jnp.bfloat16)   # NCHW -> NHWC, bf16
    feats = backbone(x, params['backbone'])
    out_logits = classifier(feats['out'], params['classifier'])    # [B,h,w,ncls] f32
    aux_logits = aux_classifier(feats['aux'], params['aux'])       # [B,h,w,ncls] f32
    ncls = out_logits.shape[-1]
    if out_logits.shape[1:3] == aux_logits.shape[1:3]:
        # Upsample both heads in a single fused kernel call (channels concatenated).
        both = jnp.concatenate([out_logits, aux_logits], axis=-1)  # [B,h,w,2*ncls]
        up = bilinear_resize_to_nchw(both, H, W)                   # [B,2*ncls,H,W]
        out, aux = up[:, :ncls], up[:, ncls:]
    else:
        out = bilinear_resize_to_nchw(out_logits, H, W)
        aux = bilinear_resize_to_nchw(aux_logits, H, W)
    return {'out': out, 'aux': aux}


# ----------------------------------------------------------------------------
# Deterministic parameter initialization
# ----------------------------------------------------------------------------
def init_params(key, num_classes=5):
    it = iter(jax.random.split(key, 64))

    def conv_w(kh, kw, cin, cout):
        fan_in = kh * kw * cin
        return jax.random.normal(next(it), (kh, kw, cin, cout), jnp.float32) / np.sqrt(fan_in)

    def bn(c):
        return dict(
            gamma=1.0 + 0.1 * jax.random.normal(next(it), (c,), jnp.float32),
            beta=0.1 * jax.random.normal(next(it), (c,), jnp.float32),
            mean=0.1 * jax.random.normal(next(it), (c,), jnp.float32),
            var=jnp.abs(1.0 + 0.1 * jax.random.normal(next(it), (c,), jnp.float32)),
        )

    a = 32  # ASPP branch width
    return {
        'backbone': {
            'c1_w': conv_w(3, 3, 3, 16),  'c1_bn': bn(16),
            'c2_w': conv_w(3, 3, 16, 32), 'c2_bn': bn(32),
            'c3_w': conv_w(3, 3, 32, 64), 'c3_bn': bn(64),
        },
        'classifier': {
            'aspp': {
                'b0_w': conv_w(1, 1, 64, a), 'b0_bn': bn(a),
                'b1_w': conv_w(3, 3, 64, a), 'b1_bn': bn(a),
                'b2_w': conv_w(3, 3, 64, a), 'b2_bn': bn(a),
                'bp_w': conv_w(1, 1, 64, a), 'bp_bn': bn(a),
                'proj_w': conv_w(1, 1, 4 * a, a), 'proj_bn': bn(a),
            },
            'head_w': conv_w(3, 3, a, a), 'head_bn': bn(a),
            'cls_w': conv_w(1, 1, a, num_classes),
            'cls_b': 0.1 * jax.random.normal(next(it), (num_classes,), jnp.float32),
        },
        'aux': {
            'a1_w': conv_w(3, 3, 32, 8), 'a1_bn': bn(8),
            'a2_w': conv_w(1, 1, 8, num_classes),
            'a2_b': 0.1 * jax.random.normal(next(it), (num_classes,), jnp.float32),
        },
    }


if __name__ == "__main__":
    num_classes = 5
    key = jax.random.PRNGKey(0)
    pkey, xkey = jax.random.split(key)
    params = init_params(pkey, num_classes=num_classes)
    x = jax.random.normal(xkey, (2, 3, 16, 16), jnp.float32)     # NCHW, like PyTorch

    fwd = jax.jit(functools.partial(deeplabv3_forward, params=params))
    result = fwd(x)
    jax.block_until_ready(result)

    assert result['out'].shape == (2, num_classes, 16, 16), result['out'].shape
    assert result['aux'].shape == (2, num_classes, 16, 16), result['aux'].shape
    assert jnp.all(jnp.isfinite(result['out'])) and jnp.all(jnp.isfinite(result['aux']))
    print("KERNEL_OK")
</pallas_src>

<mosaic_0001>
module attributes {stable_mosaic.version = 11 : i64} {
  func.func @kernel(%arg0: i32, %arg1: i32, %arg2: i32, %arg3: memref<128x27xbf16, #tpu.memory_space<vmem>>, %arg4: memref<27x16xbf16, #tpu.memory_space<vmem>>, %arg5: memref<1x16xf32, #tpu.memory_space<vmem>>, %arg6: memref<128x16xbf16, #tpu.memory_space<vmem>>) attributes {dimension_semantics = [#tpu.dimension_semantics<parallel>, #tpu.dimension_semantics<parallel>, #tpu.dimension_semantics<arbitrary>], iteration_bounds = array<i64: 1, 1, 1>, scalar_prefetch = 0 : i64, scratch_operands = 0 : i64, tpu.core_type = #tpu.core_type<tc>, window_params = [{transform_indices = @transform_0, window_bounds = array<i64: 128, 27>}, {transform_indices = @transform_1, window_bounds = array<i64: 27, 16>}, {transform_indices = @transform_2, window_bounds = array<i64: 1, 16>}, {transform_indices = @transform_3, window_bounds = array<i64: 128, 16>}]} {
    %c0 = arith.constant 0 : index
    %c0_0 = arith.constant 0 : index
    %0 = vector.load %arg3[%c0, %c0_0] : memref<128x27xbf16, #tpu.memory_space<vmem>>, vector<128x27xbf16>
    %c0_1 = arith.constant 0 : index
    %c0_2 = arith.constant 0 : index
    %1 = vector.load %arg4[%c0_1, %c0_2] : memref<27x16xbf16, #tpu.memory_space<vmem>>, vector<27x16xbf16>
    %cst = arith.constant dense<0.000000e+00> : vector<128x16xf32>
    %2 = tpu.matmul %0, %1, %cst {dimension_numbers = #tpu.dot_dimension_numbers<[1], [0], [0], [1], [0, 0, 1, 1], [], []>} : vector<128x27xbf16>, vector<27x16xbf16>, vector<128x16xf32> -> vector<128x16xf32>
    %c0_3 = arith.constant 0 : index
    %c0_4 = arith.constant 0 : index
    %3 = vector.load %arg5[%c0_3, %c0_4] : memref<1x16xf32, #tpu.memory_space<vmem>>, vector<1x16xf32>
    %4 = vector.broadcast %3 : vector<1x16xf32> to vector<128x16xf32>
    %5 = arith.addf %2, %4 : vector<128x16xf32>
    %cst_5 = arith.constant 0.000000e+00 : f32
    %6 = vector.broadcast %cst_5 : f32 to vector<128x16xf32>
    %7 = arith.maximumf %5, %6 : vector<128x16xf32>
    %8 = arith.truncf %7 : vector<128x16xf32> to vector<128x16xbf16>
    %c0_6 = arith.constant 0 : index
    %c0_7 = arith.constant 0 : index
    %9 = vector.load %arg6[%c0_6, %c0_7] : memref<128x16xbf16, #tpu.memory_space<vmem>>, vector<128x16xbf16>
    tpu.vector_store %arg6[%c0_6, %c0_7], %8 {strides = array<i32>} : memref<128x16xbf16, #tpu.memory_space<vmem>>, vector<128x16xbf16>,
    return
  }
  func.func @transform_0(%arg0: i32, %arg1: i32, %arg2: i32) -> (i32, i32) {
    %c0_i32 = arith.constant 0 : i32
    return %arg0, %arg2 : i32, i32
  }
  func.func @transform_1(%arg0: i32, %arg1: i32, %arg2: i32) -> (i32, i32) {
    %c0_i32 = arith.constant 0 : i32
    return %arg2, %arg1 : i32, i32
  }
  func.func @transform_2(%arg0: i32, %arg1: i32, %arg2: i32) -> (i32, i32) {
    %c0_i32 = arith.constant 0 : i32
    %c0_i32_0 = arith.constant 0 : i32
    return %c0_i32, %arg1 : i32, i32
  }
  func.func @transform_3(%arg0: i32, %arg1: i32, %arg2: i32) -> (i32, i32) {
    %c0_i32 = arith.constant 0 : i32
    return %arg0, %arg1 : i32, i32
  }
}

module attributes {stable_mosaic.version = 11 : i64} {
  func.func @kernel(%arg0: i32, %arg1: i32, %arg2: i32, %arg3: memref<32x144xbf16, #tpu.memory_space<vmem>>, %arg4: memref<144x32xbf16, #tpu.memory_space<vmem>>, %arg5: memref<1x32xf32, #tpu.memory_space<vmem>>, %arg6: memref<32x32xbf16, #tpu.memory_space<vmem>>) attributes {dimension_semantics = [#tpu.dimension_semantics<parallel>, #tpu.dimension_semantics<parallel>, #tpu.dimension_semantics<arbitrary>], iteration_bounds = array<i64: 1, 1, 1>, scalar_prefetch = 0 : i64, scratch_operands = 0 : i64, tpu.core_type = #tpu.core_type<tc>, window_params = [{transform_indices = @transform_0, window_bounds = array<i64: 32, 144>}, {transform_indices = @transform_1, window_bounds = array<i64: 144, 32>}, {transform_indices = @transform_2, window_bounds = array<i64: 1, 32>}, {transform_indices = @transform_3, window_bounds = array<i64: 32, 32>}]} {
    %c0 = arith.constant 0 : index
    %c0_0 = arith.constant 0 : index
    %0 = vector.load %arg3[%c0, %c0_0] : memref<32x144xbf16, #tpu.memory_space<vmem>>, vector<32x144xbf16>
    %c0_1 = arith.constant 0 : index
    %c0_2 = arith.constant 0 : index
    %1 = vector.load %arg4[%c0_1, %c0_2] : memref<144x32xbf16, #tpu.memory_space<vmem>>, vector<144x32xbf16>
    %cst = arith.constant dense<0.000000e+00> : vector<32x32xf32>
    %2 = tpu.matmul %0, %1, %cst {dimension_numbers = #tpu.dot_dimension_numbers<[1], [0], [0], [1], [0, 0, 1, 1], [], []>} : vector<32x144xbf16>, vector<144x32xbf16>, vector<32x32xf32> -> vector<32x32xf32>
    %c0_3 = arith.constant 0 : index
    %c0_4 = arith.constant 0 : index
    %3 = vector.load %arg5[%c0_3, %c0_4] : memref<1x32xf32, #tpu.memory_space<vmem>>, vector<1x32xf32>
    %4 = vector.broadcast %3 : vector<1x32xf32> to vector<32x32xf32>
    %5 = arith.addf %2, %4 : vector<32x32xf32>
    %cst_5 = arith.constant 0.000000e+00 : f32
    %6 = vector.broadcast %cst_5 : f32 to vector<32x32xf32>
    %7 = arith.maximumf %5, %6 : vector<32x32xf32>
    %8 = arith.truncf %7 : vector<32x32xf32> to vector<32x32xbf16>
    %c0_6 = arith.constant 0 : index
    %c0_7 = arith.constant 0 : index
    %9 = vector.load %arg6[%c0_6, %c0_7] : memref<32x32xbf16, #tpu.memory_space<vmem>>, vector<32x32xbf16>
    tpu.vector_store %arg6[%c0_6, %c0_7], %8 {strides = array<i32>} : memref<32x32xbf16, #tpu.memory_space<vmem>>, vector<32x32xbf16>,
    return
  }
  func.func @transform_0(%arg0: i32, %arg1: i32, %arg2: i32) -> (i32, i32) {
    %c0_i32 = arith.constant 0 : i32
    return %arg0, %arg2 : i32, i32
  }
  func.func @transform_1(%arg0: i32, %arg1: i32, %arg2: i32) -> (i32, i32) {
    %c0_i32 = arith.constant 0 : i32
    return %arg2, %arg1 : i32, i32
  }
  func.func @transform_2(%arg0: i32, %arg1: i32, %arg2: i32) -> (i32, i32) {
    %c0_i32 = arith.constant 0 : i32
    %c0_i32_0 = arith.constant 0 : i32
    return %c0_i32, %arg1 : i32, i32
  }
  func.func @transform_3(%arg0: i32, %arg1: i32, %arg2: i32) -> (i32, i32) {
    %c0_i32 = arith.constant 0 : i32
    return %arg0, %arg1 : i32, i32
  }
}

module attributes {stable_mosaic.version = 11 : i64} {
  func.func @kernel(%arg0: i32, %arg1: i32, %arg2: i32, %arg3: memref<32x288xbf16, #tpu.memory_space<vmem>>, %arg4: memref<288x64xbf16, #tpu.memory_space<vmem>>, %arg5: memref<1x64xf32, #tpu.memory_space<vmem>>, %arg6: memref<32x64xbf16, #tpu.memory_space<vmem>>) attributes {dimension_semantics = [#tpu.dimension_semantics<parallel>, #tpu.dimension_semantics<parallel>, #tpu.dimension_semantics<arbitrary>], iteration_bounds = array<i64: 1, 1, 1>, scalar_prefetch = 0 : i64, scratch_operands = 0 : i64, tpu.core_type = #tpu.core_type<tc>, window_params = [{transform_indices = @transform_0, window_bounds = array<i64: 32, 288>}, {transform_indices = @transform_1, window_bounds = array<i64: 288, 64>}, {transform_indices = @transform_2, window_bounds = array<i64: 1, 64>}, {transform_indices = @transform_3, window_bounds = array<i64: 32, 64>}]} {
    %c0 = arith.constant 0 : index
    %c0_0 = arith.constant 0 : index
    %0 = vector.load %arg3[%c0, %c0_0] : memref<32x288xbf16, #tpu.memory_space<vmem>>, vector<32x288xbf16>
    %c0_1 = arith.constant 0 : index
    %c0_2 = arith.constant 0 : index
    %1 = vector.load %arg4[%c0_1, %c0_2] : memref<288x64xbf16, #tpu.memory_space<vmem>>, vector<288x64xbf16>
    %cst = arith.constant dense<0.000000e+00> : vector<32x64xf32>
    %2 = tpu.matmul %0, %1, %cst {dimension_numbers = #tpu.dot_dimension_numbers<[1], [0], [0], [1], [0, 0, 1, 1], [], []>} : vector<32x288xbf16>, vector<288x64xbf16>, vector<32x64xf32> -> vector<32x64xf32>
    %c0_3 = arith.constant 0 : index
    %c0_4 = arith.constant 0 : index
    %3 = vector.load %arg5[%c0_3, %c0_4] : memref<1x64xf32, #tpu.memory_space<vmem>>, vector<1x64xf32>
    %4 = vector.broadcast %3 : vector<1x64xf32> to vector<32x64xf32>
    %5 = arith.addf %2, %4 : vector<32x64xf32>
    %cst_5 = arith.constant 0.000000e+00 : f32
    %6 = vector.broadcast %cst_5 : f32 to vector<32x64xf32>
    %7 = arith.maximumf %5, %6 : vector<32x64xf32>
    %8 = arith.truncf %7 : vector<32x64xf32> to vector<32x64xbf16>
    %c0_6 = arith.constant 0 : index
    %c0_7 = arith.constant 0 : index
    %9 = vector.load %arg6[%c0_6, %c0_7] : memref<32x64xbf16, #tpu.memory_space<vmem>>, vector<32x64xbf16>
    tpu.vector_store %arg6[%c0_6, %c0_7], %8 {strides = array<i32>} : memref<32x64xbf16, #tpu.memory_space<vmem>>, vector<32x64xbf16>,
    return
  }
  func.func @transform_0(%arg0: i32, %arg1: i32, %arg2: i32) -> (i32, i32) {
    %c0_i32 = arith.constant 0 : i32
    return %arg0, %arg2 : i32, i32
  }
  func.func @transform_1(%arg0: i32, %arg1: i32, %arg2: i32) -> (i32, i32) {
    %c0_i32 = arith.constant 0 : i32
    return %arg2, %arg1 : i32, i32
  }
  func.func @transform_2(%arg0: i32, %arg1: i32, %arg2: i32) -> (i32, i32) {
    %c0_i32 = arith.constant 0 : i32
    %c0_i32_0 = arith.constant 0 : i32
    return %c0_i32, %arg1 : i32, i32
  }
  func.func @transform_3(%arg0: i32, %arg1: i32, %arg2: i32) -> (i32, i32) {
    %c0_i32 = arith.constant 0 : i32
    return %arg0, %arg1 : i32, i32
  }
}

module attributes {stable_mosaic.version = 11 : i64} {
  func.func @kernel(%arg0: i32, %arg1: i32, %arg2: i32, %arg3: memref<32x288xbf16, #tpu.memory_space<vmem>>, %arg4: memref<288x8xbf16, #tpu.memory_space<vmem>>, %arg5: memref<1x8xf32, #tpu.memory_space<vmem>>, %arg6: memref<8x5xbf16, #tpu.memory_space<vmem>>, %arg7: memref<1x5xf32, #tpu.memory_space<vmem>>, %arg8: memref<32x5xf32, #tpu.memory_space<vmem>>) attributes {dimension_semantics = [#tpu.dimension_semantics<parallel>, #tpu.dimension_semantics<parallel>, #tpu.dimension_semantics<arbitrary>], iteration_bounds = array<i64: 1, 1, 1>, scalar_prefetch = 0 : i64, scratch_operands = 0 : i64, tpu.core_type = #tpu.core_type<tc>, window_params = [{transform_indices = @transform_0, window_bounds = array<i64: 32, 288>}, {transform_indices = @transform_1, window_bounds = array<i64: 288, 8>}, {transform_indices = @transform_2, window_bounds = array<i64: 1, 8>}, {pipeline_mode = #tpu.pipeline_mode<synchronous>, transform_indices = @transform_3, window_bounds = array<i64: 8, 5>}, {pipeline_mode = #tpu.pipeline_mode<synchronous>, transform_indices = @transform_4, window_bounds = array<i64: 1, 5>}, {transform_indices = @transform_5, window_bounds = array<i64: 32, 5>}]} {
    %c0 = arith.constant 0 : index
    %c0_0 = arith.constant 0 : index
    %0 = vector.load %arg3[%c0, %c0_0] : memref<32x288xbf16, #tpu.memory_space<vmem>>, vector<32x288xbf16>
    %c0_1 = arith.constant 0 : index
    %c0_2 = arith.constant 0 : index
    %1 = vector.load %arg4[%c0_1, %c0_2] : memref<288x8xbf16, #tpu.memory_space<vmem>>, vector<288x8xbf16>
    %cst = arith.constant dense<0.000000e+00> : vector<32x8xf32>
    %2 = tpu.matmul %0, %1, %cst {dimension_numbers = #tpu.dot_dimension_numbers<[1], [0], [0], [1], [0, 0, 1, 1], [], []>} : vector<32x288xbf16>, vector<288x8xbf16>, vector<32x8xf32> -> vector<32x8xf32>
    %c0_3 = arith.constant 0 : index
    %c0_4 = arith.constant 0 : index
    %3 = vector.load %arg5[%c0_3, %c0_4] : memref<1x8xf32, #tpu.memory_space<vmem>>, vector<1x8xf32>
    %4 = vector.broadcast %3 : vector<1x8xf32> to vector<32x8xf32>
    %5 = arith.addf %2, %4 : vector<32x8xf32>
    %cst_5 = arith.constant 0.000000e+00 : f32
    %6 = vector.broadcast %cst_5 : f32 to vector<32x8xf32>
    %7 = arith.maximumf %5, %6 : vector<32x8xf32>
    %8 = arith.truncf %7 : vector<32x8xf32> to vector<32x8xbf16>
    %c0_6 = arith.constant 0 : index
    %c0_7 = arith.constant 0 : index
    %9 = vector.load %arg6[%c0_6, %c0_7] : memref<8x5xbf16, #tpu.memory_space<vmem>>, vector<8x5xbf16>
    %cst_8 = arith.constant dense<0.000000e+00> : vector<32x5xf32>
    %10 = tpu.matmul %8, %9, %cst_8 {dimension_numbers = #tpu.dot_dimension_numbers<[1], [0], [0], [1], [0, 0, 1, 1], [], []>} : vector<32x8xbf16>, vector<8x5xbf16>, vector<32x5xf32> -> vector<32x5xf32>
    %c0_9 = arith.constant 0 : index
    %c0_10 = arith.constant 0 : index
    %11 = vector.load %arg7[%c0_9, %c0_10] : memref<1x5xf32, #tpu.memory_space<vmem>>, vector<1x5xf32>
    %12 = vector.broadcast %11 : vector<1x5xf32> to vector<32x5xf32>
    %13 = arith.addf %10, %12 : vector<32x5xf32>
    %c0_11 = arith.constant 0 : index
    %c0_12 = arith.constant 0 : index
    %14 = vector.load %arg8[%c0_11, %c0_12] : memref<32x5xf32, #tpu.memory_space<vmem>>, vector<32x5xf32>
    tpu.vector_store %arg8[%c0_11, %c0_12], %13 {strides = array<i32>} : memref<32x5xf32, #tpu.memory_space<vmem>>, vector<32x5xf32>,
    return
  }
  func.func @transform_0(%arg0: i32, %arg1: i32, %arg2: i32) -> (i32, i32) {
    %c0_i32 = arith.constant 0 : i32
    return %arg0, %arg2 : i32, i32
  }
  func.func @transform_1(%arg0: i32, %arg1: i32, %arg2: i32) -> (i32, i32) {
    %c0_i32 = arith.constant 0 : i32
    return %arg2, %arg1 : i32, i32
  }
  func.func @transform_2(%arg0: i32, %arg1: i32, %arg2: i32) -> (i32, i32) {
    %c0_i32 = arith.constant 0 : i32
    %c0_i32_0 = arith.constant 0 : i32
    return %c0_i32, %arg1 : i32, i32
  }
  func.func @transform_3(%arg0: i32, %arg1: i32, %arg2: i32) -> (i32, i32) {
    %c0_i32 = arith.constant 0 : i32
    %c0_i32_0 = arith.constant 0 : i32
    %c0_i32_1 = arith.constant 0 : i32
    return %c0_i32, %c0_i32_0 : i32, i32
  }
  func.func @transform_4(%arg0: i32, %arg1: i32, %arg2: i32) -> (i32, i32) {
    %c0_i32 = arith.constant 0 : i32
    %c0_i32_0 = arith.constant 0 : i32
    %c0_i32_1 = arith.constant 0 : i32
    return %c0_i32, %c0_i32_0 : i32, i32
  }
  func.func @transform_5(%arg0: i32, %arg1: i32, %arg2: i32) -> (i32, i32) {
    %c0_i32 = arith.constant 0 : i32
    return %arg0, %arg1 : i32, i32
  }
}

module attributes {stable_mosaic.version = 11 : i64} {
  func.func @kernel(%arg0: i32, %arg1: memref<2x16x64xbf16, #tpu.memory_space<vmem>>, %arg2: memref<64x32xbf16, #tpu.memory_space<vmem>>, %arg3: memref<1x32xf32, #tpu.memory_space<vmem>>, %arg4: memref<2x32xbf16, #tpu.memory_space<vmem>>) attributes {dimension_semantics = [#tpu.dimension_semantics<arbitrary>], iteration_bounds = array<i64: 1>, scalar_prefetch = 0 : i64, scratch_operands = 0 : i64, tpu.core_type = #tpu.core_type<tc>, window_params = [{transform_indices = @transform_0, window_bounds = array<i64: 2, 16, 64>}, {pipeline_mode = #tpu.pipeline_mode<synchronous>, transform_indices = @transform_1, window_bounds = array<i64: 64, 32>}, {pipeline_mode = #tpu.pipeline_mode<synchronous>, transform_indices = @transform_2, window_bounds = array<i64: 1, 32>}, {pipeline_mode = #tpu.pipeline_mode<synchronous>, transform_indices = @transform_3, window_bounds = array<i64: 2, 32>}]} {
    %c0 = arith.constant 0 : index
    %c0_0 = arith.constant 0 : index
    %c0_1 = arith.constant 0 : index
    %0 = vector.load %arg1[%c0, %c0_0, %c0_1] : memref<2x16x64xbf16, #tpu.memory_space<vmem>>, vector<2x16x64xbf16>
    %1 = arith.extf %0 : vector<2x16x64xbf16> to vector<2x16x64xf32>
    %cst = arith.constant dense<0.000000e+00> : vector<2x64xf32>
    %2 = vector.multi_reduction <add>, %1, %cst [1] : vector<2x16x64xf32> to vector<2x64xf32>
    %cst_2 = arith.constant 6.250000e-02 : f32
    %3 = vector.broadcast %cst_2 : f32 to vector<2x64xf32>
    %4 = arith.mulf %2, %3 : vector<2x64xf32>
    %5 = arith.truncf %4 : vector<2x64xf32> to vector<2x64xbf16>
    %c0_3 = arith.constant 0 : index
    %c0_4 = arith.constant 0 : index
    %6 = vector.load %arg2[%c0_3, %c0_4] : memref<64x32xbf16, #tpu.memory_space<vmem>>, vector<64x32xbf16>
    %cst_5 = arith.constant dense<0.000000e+00> : vector<2x32xf32>
    %7 = tpu.matmul %5, %6, %cst_5 {dimension_numbers = #tpu.dot_dimension_numbers<[1], [0], [0], [1], [0, 0, 1, 1], [], []>} : vector<2x64xbf16>, vector<64x32xbf16>, vector<2x32xf32> -> vector<2x32xf32>
    %c0_6 = arith.constant 0 : index
    %c0_7 = arith.constant 0 : index
    %8 = vector.load %arg3[%c0_6, %c0_7] : memref<1x32xf32, #tpu.memory_space<vmem>>, vector<1x32xf32>
    %9 = vector.broadcast %8 : vector<1x32xf32> to vector<2x32xf32>
    %10 = arith.addf %7, %9 : vector<2x32xf32>
    %cst_8 = arith.constant 0.000000e+00 : f32
    %11 = vector.broadcast %cst_8 : f32 to vector<2x32xf32>
    %12 = arith.maximumf %10, %11 : vector<2x32xf32>
    %13 = arith.truncf %12 : vector<2x32xf32> to vector<2x32xbf16>
    %c0_9 = arith.constant 0 : index
    %c0_10 = arith.constant 0 : index
    %14 = vector.load %arg4[%c0_9, %c0_10] : memref<2x32xbf16, #tpu.memory_space<vmem>>, vector<2x32xbf16>
    tpu.vector_store %arg4[%c0_9, %c0_10], %13 {strides = array<i32>} : memref<2x32xbf16, #tpu.memory_space<vmem>>, vector<2x32xbf16>,
    return
  }
  func.func @transform_0(%arg0: i32) -> (i32, i32, i32) {
    %c0_i32 = arith.constant 0 : i32
    %c0_i32_0 = arith.constant 0 : i32
    %c0_i32_1 = arith.constant 0 : i32
    return %c0_i32, %arg0, %c0_i32_0 : i32, i32, i32
  }
  func.func @transform_1(%arg0: i32) -> (i32, i32) {
    %c0_i32 = arith.constant 0 : i32
    %c0_i32_0 = arith.constant 0 : i32
    %c0_i32_1 = arith.constant 0 : i32
    return %c0_i32, %c0_i32_0 : i32, i32
  }
  func.func @transform_2(%arg0: i32) -> (i32, i32) {
    %c0_i32 = arith.constant 0 : i32
    %c0_i32_0 = arith.constant 0 : i32
    %c0_i32_1 = arith.constant 0 : i32
    return %c0_i32, %c0_i32_0 : i32, i32
  }
  func.func @transform_3(%arg0: i32) -> (i32, i32) {
    %c0_i32 = arith.constant 0 : i32
    %c0_i32_0 = arith.constant 0 : i32
    %c0_i32_1 = arith.constant 0 : i32
    return %c0_i32, %c0_i32_0 : i32, i32
  }
}

module attributes {stable_mosaic.version = 11 : i64} {
  func.func @kernel(%arg0: i32, %arg1: i32, %arg2: i32, %arg3: memref<32x64xbf16, #tpu.memory_space<vmem>>, %arg4: memref<64x32xbf16, #tpu.memory_space<vmem>>, %arg5: memref<1x32xf32, #tpu.memory_space<vmem>>, %arg6: memref<32x32xbf16, #tpu.memory_space<vmem>>) attributes {dimension_semantics = [#tpu.dimension_semantics<parallel>, #tpu.dimension_semantics<parallel>, #tpu.dimension_semantics<arbitrary>], iteration_bounds = array<i64: 1, 1, 1>, scalar_prefetch = 0 : i64, scratch_operands = 0 : i64, tpu.core_type = #tpu.core_type<tc>, window_params = [{transform_indices = @transform_0, window_bounds = array<i64: 32, 64>}, {transform_indices = @transform_1, window_bounds = array<i64: 64, 32>}, {transform_indices = @transform_2, window_bounds = array<i64: 1, 32>}, {transform_indices = @transform_3, window_bounds = array<i64: 32, 32>}]} {
    %c0 = arith.constant 0 : index
    %c0_0 = arith.constant 0 : index
    %0 = vector.load %arg3[%c0, %c0_0] : memref<32x64xbf16, #tpu.memory_space<vmem>>, vector<32x64xbf16>
    %c0_1 = arith.constant 0 : index
    %c0_2 = arith.constant 0 : index
    %1 = vector.load %arg4[%c0_1, %c0_2] : memref<64x32xbf16, #tpu.memory_space<vmem>>, vector<64x32xbf16>
    %cst = arith.constant dense<0.000000e+00> : vector<32x32xf32>
    %2 = tpu.matmul %0, %1, %cst {dimension_numbers = #tpu.dot_dimension_numbers<[1], [0], [0], [1], [0, 0, 1, 1], [], []>} : vector<32x64xbf16>, vector<64x32xbf16>, vector<32x32xf32> -> vector<32x32xf32>
    %c0_3 = arith.constant 0 : index
    %c0_4 = arith.constant 0 : index
    %3 = vector.load %arg5[%c0_3, %c0_4] : memref<1x32xf32, #tpu.memory_space<vmem>>, vector<1x32xf32>
    %4 = vector.broadcast %3 : vector<1x32xf32> to vector<32x32xf32>
    %5 = arith.addf %2, %4 : vector<32x32xf32>
    %cst_5 = arith.constant 0.000000e+00 : f32
    %6 = vector.broadcast %cst_5 : f32 to vector<32x32xf32>
    %7 = arith.maximumf %5, %6 : vector<32x32xf32>
    %8 = arith.truncf %7 : vector<32x32xf32> to vector<32x32xbf16>
    %c0_6 = arith.constant 0 : index
    %c0_7 = arith.constant 0 : index
    %9 = vector.load %arg6[%c0_6, %c0_7] : memref<32x32xbf16, #tpu.memory_space<vmem>>, vector<32x32xbf16>
    tpu.vector_store %arg6[%c0_6, %c0_7], %8 {strides = array<i32>} : memref<32x32xbf16, #tpu.memory_space<vmem>>, vector<32x32xbf16>,
    return
  }
  func.func @transform_0(%arg0: i32, %arg1: i32, %arg2: i32) -> (i32, i32) {
    %c0_i32 = arith.constant 0 : i32
    return %arg0, %arg2 : i32, i32
  }
  func.func @transform_1(%arg0: i32, %arg1: i32, %arg2: i32) -> (i32, i32) {
    %c0_i32 = arith.constant 0 : i32
    return %arg2, %arg1 : i32, i32
  }
  func.func @transform_2(%arg0: i32, %arg1: i32, %arg2: i32) -> (i32, i32) {
    %c0_i32 = arith.constant 0 : i32
    %c0_i32_0 = arith.constant 0 : i32
    return %c0_i32, %arg1 : i32, i32
  }
  func.func @transform_3(%arg0: i32, %arg1: i32, %arg2: i32) -> (i32, i32) {
    %c0_i32 = arith.constant 0 : i32
    return %arg0, %arg1 : i32, i32
  }
}

module attributes {stable_mosaic.version = 11 : i64} {
  func.func @kernel(%arg0: i32, %arg1: i32, %arg2: i32, %arg3: memref<32x576xbf16, #tpu.memory_space<vmem>>, %arg4: memref<576x32xbf16, #tpu.memory_space<vmem>>, %arg5: memref<1x32xf32, #tpu.memory_space<vmem>>, %arg6: memref<32x32xbf16, #tpu.memory_space<vmem>>) attributes {dimension_semantics = [#tpu.dimension_semantics<parallel>, #tpu.dimension_semantics<parallel>, #tpu.dimension_semantics<arbitrary>], iteration_bounds = array<i64: 1, 1, 1>, scalar_prefetch = 0 : i64, scratch_operands = 0 : i64, tpu.core_type = #tpu.core_type<tc>, window_params = [{transform_indices = @transform_0, window_bounds = array<i64: 32, 576>}, {transform_indices = @transform_1, window_bounds = array<i64: 576, 32>}, {transform_indices = @transform_2, window_bounds = array<i64: 1, 32>}, {transform_indices = @transform_3, window_bounds = array<i64: 32, 32>}]} {
    %c0 = arith.constant 0 : index
    %c0_0 = arith.constant 0 : index
    %0 = vector.load %arg3[%c0, %c0_0] : memref<32x576xbf16, #tpu.memory_space<vmem>>, vector<32x576xbf16>
    %c0_1 = arith.constant 0 : index
    %c0_2 = arith.constant 0 : index
    %1 = vector.load %arg4[%c0_1, %c0_2] : memref<576x32xbf16, #tpu.memory_space<vmem>>, vector<576x32xbf16>
    %cst = arith.constant dense<0.000000e+00> : vector<32x32xf32>
    %2 = tpu.matmul %0, %1, %cst {dimension_numbers = #tpu.dot_dimension_numbers<[1], [0], [0], [1], [0, 0, 1, 1], [], []>} : vector<32x576xbf16>, vector<576x32xbf16>, vector<32x32xf32> -> vector<32x32xf32>
    %c0_3 = arith.constant 0 : index
    %c0_4 = arith.constant 0 : index
    %3 = vector.load %arg5[%c0_3, %c0_4] : memref<1x32xf32, #tpu.memory_space<vmem>>, vector<1x32xf32>
    %4 = vector.broadcast %3 : vector<1x32xf32> to vector<32x32xf32>
    %5 = arith.addf %2, %4 : vector<32x32xf32>
    %cst_5 = arith.constant 0.000000e+00 : f32
    %6 = vector.broadcast %cst_5 : f32 to vector<32x32xf32>
    %7 = arith.maximumf %5, %6 : vector<32x32xf32>
    %8 = arith.truncf %7 : vector<32x32xf32> to vector<32x32xbf16>
    %c0_6 = arith.constant 0 : index
    %c0_7 = arith.constant 0 : index
    %9 = vector.load %arg6[%c0_6, %c0_7] : memref<32x32xbf16, #tpu.memory_space<vmem>>, vector<32x32xbf16>
    tpu.vector_store %arg6[%c0_6, %c0_7], %8 {strides = array<i32>} : memref<32x32xbf16, #tpu.memory_space<vmem>>, vector<32x32xbf16>,
    return
  }
  func.func @transform_0(%arg0: i32, %arg1: i32, %arg2: i32) -> (i32, i32) {
    %c0_i32 = arith.constant 0 : i32
    return %arg0, %arg2 : i32, i32
  }
  func.func @transform_1(%arg0: i32, %arg1: i32, %arg2: i32) -> (i32, i32) {
    %c0_i32 = arith.constant 0 : i32
    return %arg2, %arg1 : i32, i32
  }
  func.func @transform_2(%arg0: i32, %arg1: i32, %arg2: i32) -> (i32, i32) {
    %c0_i32 = arith.constant 0 : i32
    %c0_i32_0 = arith.constant 0 : i32
    return %c0_i32, %arg1 : i32, i32
  }
  func.func @transform_3(%arg0: i32, %arg1: i32, %arg2: i32) -> (i32, i32) {
    %c0_i32 = arith.constant 0 : i32
    return %arg0, %arg1 : i32, i32
  }
}

module attributes {stable_mosaic.version = 11 : i64} {
  func.func @kernel(%arg0: i32, %arg1: i32, %arg2: i32, %arg3: memref<32x128xbf16, #tpu.memory_space<vmem>>, %arg4: memref<128x32xbf16, #tpu.memory_space<vmem>>, %arg5: memref<1x32xf32, #tpu.memory_space<vmem>>, %arg6: memref<32x32xbf16, #tpu.memory_space<vmem>>) attributes {dimension_semantics = [#tpu.dimension_semantics<parallel>, #tpu.dimension_semantics<parallel>, #tpu.dimension_semantics<arbitrary>], iteration_bounds = array<i64: 1, 1, 1>, scalar_prefetch = 0 : i64, scratch_operands = 0 : i64, tpu.core_type = #tpu.core_type<tc>, window_params = [{transform_indices = @transform_0, window_bounds = array<i64: 32, 128>}, {transform_indices = @transform_1, window_bounds = array<i64: 128, 32>}, {transform_indices = @transform_2, window_bounds = array<i64: 1, 32>}, {transform_indices = @transform_3, window_bounds = array<i64: 32, 32>}]} {
    %c0 = arith.constant 0 : index
    %c0_0 = arith.constant 0 : index
    %0 = vector.load %arg3[%c0, %c0_0] : memref<32x128xbf16, #tpu.memory_space<vmem>>, vector<32x128xbf16>
    %c0_1 = arith.constant 0 : index
    %c0_2 = arith.constant 0 : index
    %1 = vector.load %arg4[%c0_1, %c0_2] : memref<128x32xbf16, #tpu.memory_space<vmem>>, vector<128x32xbf16>
    %cst = arith.constant dense<0.000000e+00> : vector<32x32xf32>
    %2 = tpu.matmul %0, %1, %cst {dimension_numbers = #tpu.dot_dimension_numbers<[1], [0], [0], [1], [0, 0, 1, 1], [], []>} : vector<32x128xbf16>, vector<128x32xbf16>, vector<32x32xf32> -> vector<32x32xf32>
    %c0_3 = arith.constant 0 : index
    %c0_4 = arith.constant 0 : index
    %3 = vector.load %arg5[%c0_3, %c0_4] : memref<1x32xf32, #tpu.memory_space<vmem>>, vector<1x32xf32>
    %4 = vector.broadcast %3 : vector<1x32xf32> to vector<32x32xf32>
    %5 = arith.addf %2, %4 : vector<32x32xf32>
    %cst_5 = arith.constant 0.000000e+00 : f32
    %6 = vector.broadcast %cst_5 : f32 to vector<32x32xf32>
    %7 = arith.maximumf %5, %6 : vector<32x32xf32>
    %8 = arith.truncf %7 : vector<32x32xf32> to vector<32x32xbf16>
    %c0_6 = arith.constant 0 : index
    %c0_7 = arith.constant 0 : index
    %9 = vector.load %arg6[%c0_6, %c0_7] : memref<32x32xbf16, #tpu.memory_space<vmem>>, vector<32x32xbf16>
    tpu.vector_store %arg6[%c0_6, %c0_7], %8 {strides = array<i32>} : memref<32x32xbf16, #tpu.memory_space<vmem>>, vector<32x32xbf16>,
    return
  }
  func.func @transform_0(%arg0: i32, %arg1: i32, %arg2: i32) -> (i32, i32) {
    %c0_i32 = arith.constant 0 : i32
    return %arg0, %arg2 : i32, i32
  }
  func.func @transform_1(%arg0: i32, %arg1: i32, %arg2: i32) -> (i32, i32) {
    %c0_i32 = arith.constant 0 : i32
    return %arg2, %arg1 : i32, i32
  }
  func.func @transform_2(%arg0: i32, %arg1: i32, %arg2: i32) -> (i32, i32) {
    %c0_i32 = arith.constant 0 : i32
    %c0_i32_0 = arith.constant 0 : i32
    return %c0_i32, %arg1 : i32, i32
  }
  func.func @transform_3(%arg0: i32, %arg1: i32, %arg2: i32) -> (i32, i32) {
    %c0_i32 = arith.constant 0 : i32
    return %arg0, %arg1 : i32, i32
  }
}

module attributes {stable_mosaic.version = 11 : i64} {
  func.func @kernel(%arg0: i32, %arg1: i32, %arg2: i32, %arg3: memref<32x288xbf16, #tpu.memory_space<vmem>>, %arg4: memref<288x32xbf16, #tpu.memory_space<vmem>>, %arg5: memref<1x32xf32, #tpu.memory_space<vmem>>, %arg6: memref<32x5xbf16, #tpu.memory_space<vmem>>, %arg7: memref<1x5xf32, #tpu.memory_space<vmem>>, %arg8: memref<32x5xf32, #tpu.memory_space<vmem>>) attributes {dimension_semantics = [#tpu.dimension_semantics<parallel>, #tpu.dimension_semantics<parallel>, #tpu.dimension_semantics<arbitrary>], iteration_bounds = array<i64: 1, 1, 1>, scalar_prefetch = 0 : i64, scratch_operands = 0 : i64, tpu.core_type = #tpu.core_type<tc>, window_params = [{transform_indices = @transform_0, window_bounds = array<i64: 32, 288>}, {transform_indices = @transform_1, window_bounds = array<i64: 288, 32>}, {transform_indices = @transform_2, window_bounds = array<i64: 1, 32>}, {pipeline_mode = #tpu.pipeline_mode<synchronous>, transform_indices = @transform_3, window_bounds = array<i64: 32, 5>}, {pipeline_mode = #tpu.pipeline_mode<synchronous>, transform_indices = @transform_4, window_bounds = array<i64: 1, 5>}, {transform_indices = @transform_5, window_bounds = array<i64: 32, 5>}]} {
    %c0 = arith.constant 0 : index
    %c0_0 = arith.constant 0 : index
    %0 = vector.load %arg3[%c0, %c0_0] : memref<32x288xbf16, #tpu.memory_space<vmem>>, vector<32x288xbf16>
    %c0_1 = arith.constant 0 : index
    %c0_2 = arith.constant 0 : index
    %1 = vector.load %arg4[%c0_1, %c0_2] : memref<288x32xbf16, #tpu.memory_space<vmem>>, vector<288x32xbf16>
    %cst = arith.constant dense<0.000000e+00> : vector<32x32xf32>
    %2 = tpu.matmul %0, %1, %cst {dimension_numbers = #tpu.dot_dimension_numbers<[1], [0], [0], [1], [0, 0, 1, 1], [], []>} : vector<32x288xbf16>, vector<288x32xbf16>, vector<32x32xf32> -> vector<32x32xf32>
    %c0_3 = arith.constant 0 : index
    %c0_4 = arith.constant 0 : index
    %3 = vector.load %arg5[%c0_3, %c0_4] : memref<1x32xf32, #tpu.memory_space<vmem>>, vector<1x32xf32>
    %4 = vector.broadcast %3 : vector<1x32xf32> to vector<32x32xf32>
    %5 = arith.addf %2, %4 : vector<32x32xf32>
    %cst_5 = arith.constant 0.000000e+00 : f32
    %6 = vector.broadcast %cst_5 : f32 to vector<32x32xf32>
    %7 = arith.maximumf %5, %6 : vector<32x32xf32>
    %8 = arith.truncf %7 : vector<32x32xf32> to vector<32x32xbf16>
    %c0_6 = arith.constant 0 : index
    %c0_7 = arith.constant 0 : index
    %9 = vector.load %arg6[%c0_6, %c0_7] : memref<32x5xbf16, #tpu.memory_space<vmem>>, vector<32x5xbf16>
    %cst_8 = arith.constant dense<0.000000e+00> : vector<32x5xf32>
    %10 = tpu.matmul %8, %9, %cst_8 {dimension_numbers = #tpu.dot_dimension_numbers<[1], [0], [0], [1], [0, 0, 1, 1], [], []>} : vector<32x32xbf16>, vector<32x5xbf16>, vector<32x5xf32> -> vector<32x5xf32>
    %c0_9 = arith.constant 0 : index
    %c0_10 = arith.constant 0 : index
    %11 = vector.load %arg7[%c0_9, %c0_10] : memref<1x5xf32, #tpu.memory_space<vmem>>, vector<1x5xf32>
    %12 = vector.broadcast %11 : vector<1x5xf32> to vector<32x5xf32>
    %13 = arith.addf %10, %12 : vector<32x5xf32>
    %c0_11 = arith.constant 0 : index
    %c0_12 = arith.constant 0 : index
    %14 = vector.load %arg8[%c0_11, %c0_12] : memref<32x5xf32, #tpu.memory_space<vmem>>, vector<32x5xf32>
    tpu.vector_store %arg8[%c0_11, %c0_12], %13 {strides = array<i32>} : memref<32x5xf32, #tpu.memory_space<vmem>>, vector<32x5xf32>,
    return
  }
  func.func @transform_0(%arg0: i32, %arg1: i32, %arg2: i32) -> (i32, i32) {
    %c0_i32 = arith.constant 0 : i32
    return %arg0, %arg2 : i32, i32
  }
  func.func @transform_1(%arg0: i32, %arg1: i32, %arg2: i32) -> (i32, i32) {
    %c0_i32 = arith.constant 0 : i32
    return %arg2, %arg1 : i32, i32
  }
  func.func @transform_2(%arg0: i32, %arg1: i32, %arg2: i32) -> (i32, i32) {
    %c0_i32 = arith.constant 0 : i32
    %c0_i32_0 = arith.constant 0 : i32
    return %c0_i32, %arg1 : i32, i32
  }
  func.func @transform_3(%arg0: i32, %arg1: i32, %arg2: i32) -> (i32, i32) {
    %c0_i32 = arith.constant 0 : i32
    %c0_i32_0 = arith.constant 0 : i32
    %c0_i32_1 = arith.constant 0 : i32
    return %c0_i32, %c0_i32_0 : i32, i32
  }
  func.func @transform_4(%arg0: i32, %arg1: i32, %arg2: i32) -> (i32, i32) {
    %c0_i32 = arith.constant 0 : i32
    %c0_i32_0 = arith.constant 0 : i32
    %c0_i32_1 = arith.constant 0 : i32
    return %c0_i32, %c0_i32_0 : i32, i32
  }
  func.func @transform_5(%arg0: i32, %arg1: i32, %arg2: i32) -> (i32, i32) {
    %c0_i32 = arith.constant 0 : i32
    return %arg0, %arg1 : i32, i32
  }
}

module attributes {stable_mosaic.version = 11 : i64} {
  func.func @kernel(%arg0: i32, %arg1: memref<8x8x8xf32, #tpu.memory_space<vmem>>, %arg2: memref<16x8xf32, #tpu.memory_space<vmem>>, %arg3: memref<8x16xf32, #tpu.memory_space<vmem>>, %arg4: memref<8x16x16xf32, #tpu.memory_space<vmem>>) attributes {dimension_semantics = [#tpu.dimension_semantics<parallel>], iteration_bounds = array<i64: 3>, scalar_prefetch = 0 : i64, scratch_operands = 0 : i64, tpu.core_type = #tpu.core_type<tc>, window_params = [{transform_indices = @transform_0, window_bounds = array<i64: 8, 8, 8>}, {pipeline_mode = #tpu.pipeline_mode<synchronous>, transform_indices = @transform_1, window_bounds = array<i64: 16, 8>}, {pipeline_mode = #tpu.pipeline_mode<synchronous>, transform_indices = @transform_2, window_bounds = array<i64: 8, 16>}, {transform_indices = @transform_3, window_bounds = array<i64: 8, 16, 16>}]} {
    %c0 = arith.constant 0 : index
    %c0_0 = arith.constant 0 : index
    %0 = vector.load %arg2[%c0, %c0_0] : memref<16x8xf32, #tpu.memory_space<vmem>>, vector<16x8xf32>
    %c0_1 = arith.constant 0 : index
    %c0_2 = arith.constant 0 : index
    %c0_3 = arith.constant 0 : index
    %1 = vector.load %arg1[%c0_1, %c0_2, %c0_3] : memref<8x8x8xf32, #tpu.memory_space<vmem>>, vector<1x8x8xf32>
    %2 = vector.shape_cast %1 : vector<1x8x8xf32> to vector<8x8xf32>
    %cst = arith.constant dense<0.000000e+00> : vector<16x8xf32>
    %3 = tpu.matmul %0, %2, %cst {dimension_numbers = #tpu.dot_dimension_numbers<[1], [0], [0], [1], [0, 0, 1, 1], [], []>} : vector<16x8xf32>, vector<8x8xf32>, vector<16x8xf32> -> vector<16x8xf32>
    %c0_4 = arith.constant 0 : index
    %c0_5 = arith.constant 0 : index
    %4 = vector.load %arg3[%c0_4, %c0_5] : memref<8x16xf32, #tpu.memory_space<vmem>>, vector<8x16xf32>
    %cst_6 = arith.constant dense<0.000000e+00> : vector<16x16xf32>
    %5 = tpu.matmul %3, %4, %cst_6 {dimension_numbers = #tpu.dot_dimension_numbers<[1], [0], [0], [1], [0, 0, 1, 1], [], []>} : vector<16x8xf32>, vector<8x16xf32>, vector<16x16xf32> -> vector<16x16xf32>
    %c0_7 = arith.constant 0 : index
    %c0_8 = arith.constant 0 : index
    %c0_9 = arith.constant 0 : index
    %6 = vector.load %arg4[%c0_7, %c0_8, %c0_9] : memref<8x16x16xf32, #tpu.memory_space<vmem>>, vector<1x16x16xf32>
    %7 = vector.shape_cast %6 : vector<1x16x16xf32> to vector<16x16xf32>
    %8 = vector.shape_cast %5 : vector<16x16xf32> to vector<1x16x16xf32>
    tpu.vector_store %arg4[%c0_7, %c0_8, %c0_9], %8 {strides = array<i32>} : memref<8x16x16xf32, #tpu.memory_space<vmem>>, vector<1x16x16xf32>,
    %c0_10 = arith.constant 0 : index
    %c0_11 = arith.constant 0 : index
    %9 = vector.load %arg2[%c0_10, %c0_11] : memref<16x8xf32, #tpu.memory_space<vmem>>, vector<16x8xf32>
    %c1 = arith.constant 1 : index
    %c0_12 = arith.constant 0 : index
    %c0_13 = arith.constant 0 : index
    %10 = vector.load %arg1[%c1, %c0_12, %c0_13] : memref<8x8x8xf32, #tpu.memory_space<vmem>>, vector<1x8x8xf32>
    %11 = vector.shape_cast %10 : vector<1x8x8xf32> to vector<8x8xf32>
    %cst_14 = arith.constant dense<0.000000e+00> : vector<16x8xf32>
    %12 = tpu.matmul %9, %11, %cst_14 {dimension_numbers = #tpu.dot_dimension_numbers<[1], [0], [0], [1], [0, 0, 1, 1], [], []>} : vector<16x8xf32>, vector<8x8xf32>, vector<16x8xf32> -> vector<16x8xf32>
    %c0_15 = arith.constant 0 : index
    %c0_16 = arith.constant 0 : index
    %13 = vector.load %arg3[%c0_15, %c0_16] : memref<8x16xf32, #tpu.memory_space<vmem>>, vector<8x16xf32>
    %cst_17 = arith.constant dense<0.000000e+00> : vector<16x16xf32>
    %14 = tpu.matmul %12, %13, %cst_17 {dimension_numbers = #tpu.dot_dimension_numbers<[1], [0], [0], [1], [0, 0, 1, 1], [], []>} : vector<16x8xf32>, vector<8x16xf32>, vector<16x16xf32> -> vector<16x16xf32>
    %c1_18 = arith.constant 1 : index
    %c0_19 = arith.constant 0 : index
    %c0_20 = arith.constant 0 : index
    %15 = vector.load %arg4[%c1_18, %c0_19, %c0_20] : memref<8x16x16xf32, #tpu.memory_space<vmem>>, vector<1x16x16xf32>
    %16 = vector.shape_cast %15 : vector<1x16x16xf32> to vector<16x16xf32>
    %17 = vector.shape_cast %14 : vector<16x16xf32> to vector<1x16x16xf32>
    tpu.vector_store %arg4[%c1_18, %c0_19, %c0_20], %17 {strides = array<i32>} : memref<8x16x16xf32, #tpu.memory_space<vmem>>, vector<1x16x16xf32>,
    %c0_21 = arith.constant 0 : index
    %c0_22 = arith.constant 0 : index
    %18 = vector.load %arg2[%c0_21, %c0_22] : memref<16x8xf32, #tpu.memory_space<vmem>>, vector<16x8xf32>
    %c2 = arith.constant 2 : index
    %c0_23 = arith.constant 0 : index
    %c0_24 = arith.constant 0 : index
    %19 = vector.load %arg1[%c2, %c0_23, %c0_24] : memref<8x8x8xf32, #tpu.memory_space<vmem>>, vector<1x8x8xf32>
    %20 = vector.shape_cast %19 : vector<1x8x8xf32> to vector<8x8xf32>
    %cst_25 = arith.constant dense<0.000000e+00> : vector<16x8xf32>
    %21 = tpu.matmul %18, %20, %cst_25 {dimension_numbers = #tpu.dot_dimension_numbers<[1], [0], [0], [1], [0, 0, 1, 1], [], []>} : vector<16x8xf32>, vector<8x8xf32>, vector<16x8xf32> -> vector<16x8xf32>
    %c0_26 = arith.constant 0 : index
    %c0_27 = arith.constant 0 : index
    %22 = vector.load %arg3[%c0_26, %c0_27] : memref<8x16xf32, #tpu.memory_space<vmem>>, vector<8x16xf32>
    %cst_28 = arith.constant dense<0.000000e+00> : vector<16x16xf32>
    %23 = tpu.matmul %21, %22, %cst_28 {dimension_numbers = #tpu.dot_dimension_numbers<[1], [0], [0], [1], [0, 0, 1, 1], [], []>} : vector<16x8xf32>, vector<8x16xf32>, vector<16x16xf32> -> vector<16x16xf32>
    %c2_29 = arith.constant 2 : index
    %c0_30 = arith.constant 0 : index
    %c0_31 = arith.constant 0 : index
    %24 = vector.load %arg4[%c2_29, %c0_30, %c0_31] : memref<8x16x16xf32, #tpu.memory_space<vmem>>, vector<1x16x16xf32>
    %25 = vector.shape_cast %24 : vector<1x16x16xf32> to vector<16x16xf32>
    %26 = vector.shape_cast %23 : vector<16x16xf32> to vector<1x16x16xf32>
    tpu.vector_store %arg4[%c2_29, %c0_30, %c0_31], %26 {strides = array<i32>} : memref<8x16x16xf32, #tpu.memory_space<vmem>>, vector<1x16x16xf32>,
    %c0_32 = arith.constant 0 : index
    %c0_33 = arith.constant 0 : index
    %27 = vector.load %arg2[%c0_32, %c0_33] : memref<16x8xf32, #tpu.memory_space<vmem>>, vector<16x8xf32>
    %c3 = arith.constant 3 : index
    %c0_34 = arith.constant 0 : index
    %c0_35 = arith.constant 0 : index
    %28 = vector.load %arg1[%c3, %c0_34, %c0_35] : memref<8x8x8xf32, #tpu.memory_space<vmem>>, vector<1x8x8xf32>
    %29 = vector.shape_cast %28 : vector<1x8x8xf32> to vector<8x8xf32>
    %cst_36 = arith.constant dense<0.000000e+00> : vector<16x8xf32>
    %30 = tpu.matmul %27, %29, %cst_36 {dimension_numbers = #tpu.dot_dimension_numbers<[1], [0], [0], [1], [0, 0, 1, 1], [], []>} : vector<16x8xf32>, vector<8x8xf32>, vector<16x8xf32> -> vector<16x8xf32>
    %c0_37 = arith.constant 0 : index
    %c0_38 = arith.constant 0 : index
    %31 = vector.load %arg3[%c0_37, %c0_38] : memref<8x16xf32, #tpu.memory_space<vmem>>, vector<8x16xf32>
    %cst_39 = arith.constant dense<0.000000e+00> : vector<16x16xf32>
    %32 = tpu.matmul %30, %31, %cst_39 {dimension_numbers = #tpu.dot_dimension_numbers<[1], [0], [0], [1], [0, 0, 1, 1], [], []>} : vector<16x8xf32>, vector<8x16xf32>, vector<16x16xf32> -> vector<16x16xf32>
    %c3_40 = arith.constant 3 : index
    %c0_41 = arith.constant 0 : index
    %c0_42 = arith.constant 0 : index
    %33 = vector.load %arg4[%c3_40, %c0_41, %c0_42] : memref<8x16x16xf32, #tpu.memory_space<vmem>>, vector<1x16x16xf32>
    %34 = vector.shape_cast %33 : vector<1x16x16xf32> to vector<16x16xf32>
    %35 = vector.shape_cast %32 : vector<16x16xf32> to vector<1x16x16xf32>
    tpu.vector_store %arg4[%c3_40, %c0_41, %c0_42], %35 {strides = array<i32>} : memref<8x16x16xf32, #tpu.memory_space<vmem>>, vector<1x16x16xf32>,
    %c0_43 = arith.constant 0 : index
    %c0_44 = arith.constant 0 : index
    %36 = vector.load %arg2[%c0_43, %c0_44] : memref<16x8xf32, #tpu.memory_space<vmem>>, vector<16x8xf32>
    %c4 = arith.constant 4 : index
    %c0_45 = arith.constant 0 : index
    %c0_46 = arith.constant 0 : index
    %37 = vector.load %arg1[%c4, %c0_45, %c0_46] : memref<8x8x8xf32, #tpu.memory_space<vmem>>, vector<1x8x8xf32>
    %38 = vector.shape_cast %37 : vector<1x8x8xf32> to vector<8x8xf32>
    %cst_47 = arith.constant dense<0.000000e+00> : vector<16x8xf32>
    %39 = tpu.matmul %36, %38, %cst_47 {dimension_numbers = #tpu.dot_dimension_numbers<[1], [0], [0], [1], [0, 0, 1, 1], [], []>} : vector<16x8xf32>, vector<8x8xf32>, vector<16x8xf32> -> vector<16x8xf32>
    %c0_48 = arith.constant 0 : index
    %c0_49 = arith.constant 0 : index
    %40 = vector.load %arg3[%c0_48, %c0_49] : memref<8x16xf32, #tpu.memory_space<vmem>>, vector<8x16xf32>
    %cst_50 = arith.constant dense<0.000000e+00> : vector<16x16xf32>
    %41 = tpu.matmul %39, %40, %cst_50 {dimension_numbers = #tpu.dot_dimension_numbers<[1], [0], [0], [1], [0, 0, 1, 1], [], []>} : vector<16x8xf32>, vector<8x16xf32>, vector<16x16xf32> -> vector<16x16xf32>
    %c4_51 = arith.constant 4 : index
    %c0_52 = arith.constant 0 : index
    %c0_53 = arith.constant 0 : index
    %42 = vector.load %arg4[%c4_51, %c0_52, %c0_53] : memref<8x16x16xf32, #tpu.memory_space<vmem>>, vector<1x16x16xf32>
    %43 = vector.shape_cast %42 : vector<1x16x16xf32> to vector<16x16xf32>
    %44 = vector.shape_cast %41 : vector<16x16xf32> to vector<1x16x16xf32>
    tpu.vector_store %arg4[%c4_51, %c0_52, %c0_53], %44 {strides = array<i32>} : memref<8x16x16xf32, #tpu.memory_space<vmem>>, vector<1x16x16xf32>,
    %c0_54 = arith.constant 0 : index
    %c0_55 = arith.constant 0 : index
    %45 = vector.load %arg2[%c0_54, %c0_55] : memref<16x8xf32, #tpu.memory_space<vmem>>, vector<16x8xf32>
    %c5 = arith.constant 5 : index
    %c0_56 = arith.constant 0 : index
    %c0_57 = arith.constant 0 : index
    %46 = vector.load %arg1[%c5, %c0_56, %c0_57] : memref<8x8x8xf32, #tpu.memory_space<vmem>>, vector<1x8x8xf32>
    %47 = vector.shape_cast %46 : vector<1x8x8xf32> to vector<8x8xf32>
    %cst_58 = arith.constant dense<0.000000e+00> : vector<16x8xf32>
    %48 = tpu.matmul %45, %47, %cst_58 {dimension_numbers = #tpu.dot_dimension_numbers<[1], [0], [0], [1], [0, 0, 1, 1], [], []>} : vector<16x8xf32>, vector<8x8xf32>, vector<16x8xf32> -> vector<16x8xf32>
    %c0_59 = arith.constant 0 : index
    %c0_60 = arith.constant 0 : index
    %49 = vector.load %arg3[%c0_59, %c0_60] : memref<8x16xf32, #tpu.memory_space<vmem>>, vector<8x16xf32>
    %cst_61 = arith.constant dense<0.000000e+00> : vector<16x16xf32>
    %50 = tpu.matmul %48, %49, %cst_61 {dimension_numbers = #tpu.dot_dimension_numbers<[1], [0], [0], [1], [0, 0, 1, 1], [], []>} : vector<16x8xf32>, vector<8x16xf32>, vector<16x16xf32> -> vector<16x16xf32>
    %c5_62 = arith.constant 5 : index
    %c0_63 = arith.constant 0 : index
    %c0_64 = arith.constant 0 : index
    %51 = vector.load %arg4[%c5_62, %c0_63, %c0_64] : memref<8x16x16xf32, #tpu.memory_space<vmem>>, vector<1x16x16xf32>
    %52 = vector.shape_cast %51 : vector<1x16x16xf32> to vector<16x16xf32>
    %53 = vector.shape_cast %50 : vector<16x16xf32> to vector<1x16x16xf32>
    tpu.vector_store %arg4[%c5_62, %c0_63, %c0_64], %53 {strides = array<i32>} : memref<8x16x16xf32, #tpu.memory_space<vmem>>, vector<1x16x16xf32>,
    %c0_65 = arith.constant 0 : index
    %c0_66 = arith.constant 0 : index
    %54 = vector.load %arg2[%c0_65, %c0_66] : memref<16x8xf32, #tpu.memory_space<vmem>>, vector<16x8xf32>
    %c6 = arith.constant 6 : index
    %c0_67 = arith.constant 0 : index
    %c0_68 = arith.constant 0 : index
    %55 = vector.load %arg1[%c6, %c0_67, %c0_68] : memref<8x8x8xf32, #tpu.memory_space<vmem>>, vector<1x8x8xf32>
    %56 = vector.shape_cast %55 : vector<1x8x8xf32> to vector<8x8xf32>
    %cst_69 = arith.constant dense<0.000000e+00> : vector<16x8xf32>
    %57 = tpu.matmul %54, %56, %cst_69 {dimension_numbers = #tpu.dot_dimension_numbers<[1], [0], [0], [1], [0, 0, 1, 1], [], []>} : vector<16x8xf32>, vector<8x8xf32>, vector<16x8xf32> -> vector<16x8xf32>
    %c0_70 = arith.constant 0 : index
    %c0_71 = arith.constant 0 : index
    %58 = vector.load %arg3[%c0_70, %c0_71] : memref<8x16xf32, #tpu.memory_space<vmem>>, vector<8x16xf32>
    %cst_72 = arith.constant dense<0.000000e+00> : vector<16x16xf32>
    %59 = tpu.matmul %57, %58, %cst_72 {dimension_numbers = #tpu.dot_dimension_numbers<[1], [0], [0], [1], [0, 0, 1, 1], [], []>} : vector<16x8xf32>, vector<8x16xf32>, vector<16x16xf32> -> vector<16x16xf32>
    %c6_73 = arith.constant 6 : index
    %c0_74 = arith.constant 0 : index
    %c0_75 = arith.constant 0 : index
    %60 = vector.load %arg4[%c6_73, %c0_74, %c0_75] : memref<8x16x16xf32, #tpu.memory_space<vmem>>, vector<1x16x16xf32>
    %61 = vector.shape_cast %60 : vector<1x16x16xf32> to vector<16x16xf32>
    %62 = vector.shape_cast %59 : vector<16x16xf32> to vector<1x16x16xf32>
    tpu.vector_store %arg4[%c6_73, %c0_74, %c0_75], %62 {strides = array<i32>} : memref<8x16x16xf32, #tpu.memory_space<vmem>>, vector<1x16x16xf32>,
    %c0_76 = arith.constant 0 : index
    %c0_77 = arith.constant 0 : index
    %63 = vector.load %arg2[%c0_76, %c0_77] : memref<16x8xf32, #tpu.memory_space<vmem>>, vector<16x8xf32>
    %c7 = arith.constant 7 : index
    %c0_78 = arith.constant 0 : index
    %c0_79 = arith.constant 0 : index
    %64 = vector.load %arg1[%c7, %c0_78, %c0_79] : memref<8x8x8xf32, #tpu.memory_space<vmem>>, vector<1x8x8xf32>
    %65 = vector.shape_cast %64 : vector<1x8x8xf32> to vector<8x8xf32>
    %cst_80 = arith.constant dense<0.000000e+00> : vector<16x8xf32>
    %66 = tpu.matmul %63, %65, %cst_80 {dimension_numbers = #tpu.dot_dimension_numbers<[1], [0], [0], [1], [0, 0, 1, 1], [], []>} : vector<16x8xf32>, vector<8x8xf32>, vector<16x8xf32> -> vector<16x8xf32>
    %c0_81 = arith.constant 0 : index
    %c0_82 = arith.constant 0 : index
    %67 = vector.load %arg3[%c0_81, %c0_82] : memref<8x16xf32, #tpu.memory_space<vmem>>, vector<8x16xf32>
    %cst_83 = arith.constant dense<0.000000e+00> : vector<16x16xf32>
    %68 = tpu.matmul %66, %67, %cst_83 {dimension_numbers = #tpu.dot_dimension_numbers<[1], [0], [0], [1], [0, 0, 1, 1], [], []>} : vector<16x8xf32>, vector<8x16xf32>, vector<16x16xf32> -> vector<16x16xf32>
    %c7_84 = arith.constant 7 : index
    %c0_85 = arith.constant 0 : index
    %c0_86 = arith.constant 0 : index
    %69 = vector.load %arg4[%c7_84, %c0_85, %c0_86] : memref<8x16x16xf32, #tpu.memory_space<vmem>>, vector<1x16x16xf32>
    %70 = vector.shape_cast %69 : vector<1x16x16xf32> to vector<16x16xf32>
    %71 = vector.shape_cast %68 : vector<16x16xf32> to vector<1x16x16xf32>
    tpu.vector_store %arg4[%c7_84, %c0_85, %c0_86], %71 {strides = array<i32>} : memref<8x16x16xf32, #tpu.memory_space<vmem>>, vector<1x16x16xf32>,
    return
  }
  func.func @transform_0(%arg0: i32) -> (i32, i32, i32) {
    %c0_i32 = arith.constant 0 : i32
    %c0_i32_0 = arith.constant 0 : i32
    %c0_i32_1 = arith.constant 0 : i32
    return %arg0, %c0_i32, %c0_i32_0 : i32, i32, i32
  }
  func.func @transform_1(%arg0: i32) -> (i32, i32) {
    %c0_i32 = arith.constant 0 : i32
    %c0_i32_0 = arith.constant 0 : i32
    %c0_i32_1 = arith.constant 0 : i32
    return %c0_i32, %c0_i32_0 : i32, i32
  }
  func.func @transform_2(%arg0: i32) -> (i32, i32) {
    %c0_i32 = arith.constant 0 : i32
    %c0_i32_0 = arith.constant 0 : i32
    %c0_i32_1 = arith.constant 0 : i32
    return %c0_i32, %c0_i32_0 : i32, i32
  }
  func.func @transform_3(%arg0: i32) -> (i32, i32, i32) {
    %c0_i32 = arith.constant 0 : i32
    %c0_i32_0 = arith.constant 0 : i32
    %c0_i32_1 = arith.constant 0 : i32
    return %arg0, %c0_i32, %c0_i32_0 : i32, i32, i32
  }
}

</mosaic_0001>

<llo_original>
// kernel: deeplabv3_forward.11
$region0: #{deeplabv3_forward.11}
  #allocation0 [shape = 'u32[]', space=smem, size = 0x4, offset = 0x4, fixed_abs, tag = 'smem constant byte address 0x4 - core index']
  #allocation1 [shape = 'u32[144,128]{1,0:T(1,128)}', space=vmem, size = 0x12000, scoped, tag = 'internal scratch']
  %s0 = inlined_call_operand.vmem [shape: bf16[128,27], index: 0, kind: input, shape index: {}]
  %s1 = inlined_call_operand.vmem [shape: bf16[27,16], index: 1, kind: input, shape index: {}]
  %s2 = inlined_call_operand.vmem [shape: f32[1,16], index: 2, kind: input, shape index: {}]
  %s3 = inlined_call_operand.vmem [shape: bf16[128,16], index: 3, kind: output, shape index: {}]
  %s4 = sld [smem:[#allocation0]]
  $region22: #{deeplabv3_forward.11} parent=0
    _
  %s6 = ssub.s32 1, %s4
  %s7 = scalar_select 0, %s6, %s4
  // Predicated region
  $region2: #{deeplabv3_forward.11} parent=0 // pred_check
    _
  $region3: #{deeplabv3_forward.11} parent=0 // pred_check_branch
    %9 = sbr.rel (0) target = $region5
  $region4: #{deeplabv3_forward.11} parent=0 // pred_region
    _
  $region5: #{deeplabv3_forward.11} parent=0 // pred_fallthru
    _
  // Predicated region
  $region6: #{deeplabv3_forward.11} parent=0 // pred_check
    _
  $region7: #{deeplabv3_forward.11} parent=0 // pred_check_branch
    %11 = sbr.rel (0) target = $region9
  $region8: #{deeplabv3_forward.11} parent=0 // pred_region
    _
  $region9: #{deeplabv3_forward.11} parent=0 // pred_fallthru
    _
  // Predicated region
  $region10: #{deeplabv3_forward.11} parent=0 // pred_check
    _
  $region11: #{deeplabv3_forward.11} parent=0 // pred_check_branch
    %13 = sbr.rel (0) target = $region13
  $region12: #{deeplabv3_forward.11} parent=0 // pred_region
    _
  $region13: #{deeplabv3_forward.11} parent=0 // pred_fallthru
    _
  %v15 = vld [vmem:[%s0] sm:$0xf]
  %v16 = vld [vmem:[%s0 + $0x4] sm:$0xf]
  %v17 = vld [vmem:[%s0 + $0x8] sm:$0xf]
  %v18 = vld [vmem:[%s0 + $0xc] sm:$0xf]
  %v19 = vld [vmem:[%s0 + $0x10] sm:$0xf]
  %v20 = vld [vmem:[%s0 + $0x14] sm:$0xf]
  %v21 = vld [vmem:[%s0 + $0x18] sm:$0xf]
  %v22 = vld [vmem:[%s0 + $0x1c] sm:$0xf]
  %v23 = vld [vmem:[%s0 + $0x20] sm:$0xf]
  %v24 = vld [vmem:[%s0 + $0x24] sm:$0xf]
  %v25 = vld [vmem:[%s0 + $0x28] sm:$0xf]
  %v26 = vld [vmem:[%s0 + $0x2c] sm:$0xf]
  %v27 = vld [vmem:[%s0 + $0x30] sm:$0xf]
  %v28 = vld [vmem:[%s0 + $0x34] sm:$0xf]
  %v29 = vld [vmem:[%s0 + $0x38] sm:$0xf]
  %v30 = vld [vmem:[%s0 + $0x3c] sm:$0xf]
  %v31 = vld [vmem:[%s1] sm:$0xf]
  %v32 = vld [vmem:[%s1 + $0x4] sm:$0xf]
  %v33 = vld [vmem:[%s1 + $0x8] sm:$0xf]
  %v34 = vld [vmem:[%s1 + $0xc] sm:$0x3]
  %v35 = vld [vmem:[%s2] sm:$0x1]
  %v37 = vlaneseq
  %v38 = vshrl.u32 %v37, 7
  %v39 = vsub.s32 0, %v38
  %v40 = vrot.slane %v35, %v39
  %v58 = vunpack.c.l.b16 %v15
  %v59 = vunpack.c.l.b16 %v16
  %v60 = vunpack.c.l.b16 %v17
  %v61 = vunpack.c.l.b16 %v18
  %v62 = vunpack.c.l.b16 %v19
  %v63 = vunpack.c.l.b16 %v20
  %v64 = vunpack.c.l.b16 %v21
  %v65 = vunpack.c.l.b16 %v22
  %v66 = vunpack.c.l.b16 %v23
  %v67 = vunpack.c.l.b16 %v24
  %v68 = vunpack.c.l.b16 %v25
  %v69 = vunpack.c.l.b16 %v26
  %v70 = vunpack.c.l.b16 %v27
  %v71 = vunpack.c.l.b16 %v28
  %v72 = vunpack.c.l.b16 %v29
  %v73 = vunpack.c.l.b16 %v30
  %v74 = vpack.c.b16 %v59, %v58
  %v75 = vpack.c.b16 %v61, %v60
  %v76 = vpack.c.b16 %v63, %v62
  %v77 = vpack.c.b16 %v65, %v64
  %v78 = vpack.c.b16 %v67, %v66
  %v79 = vpack.c.b16 %v69, %v68
  %v80 = vpack.c.b16 %v71, %v70
  %v81 = vpack.c.b16 %v73, %v72
  %v86 = vunpack.c.l.b16 %v31
  %v87 = vunpack.c.l.b16 %v32
  %v88 = vunpack.c.l.b16 %v33
  %v89 = vunpack.c.l.b16 %v34
  %v90 = vpack.c.b16 %v87, %v86
  %v91 = vpack.c.b16 %v89, %v88
  %vm93 = vcmask 220160
  %v95 = vsel %vm93, %v74, 0
  %v98 = vsel %vm93, %v75, 0
  %v101 = vsel %vm93, %v76, 0
  %v104 = vsel %vm93, %v77, 0
  %v107 = vsel %vm93, %v78, 0
  %v110 = vsel %vm93, %v79, 0
  %v113 = vsel %vm93, %v80, 0
  %v116 = vsel %vm93, %v81, 0
  %vm118 = vcmask 1044480
  %vm119 = vcmask 1045504
  %v120 = vsel %vm118, 4294967295, 65535
  %v121 = vsel %vm119, %v120, 0
  %v123 = vand.u32 %v91, %v121
  %125 = vmatprep.subr.bf16.mxu0 0
  %126 = vmatpush1.bf16.msra.mxu0 0
  %127 = vmatprep.subr.bf16.mxu0 0
  %128 = vmatpush1.bf16.msra.mxu0 0
  %129 = vmatprep.subr.bf16.mxu0 0
  %130 = vmatpush1.bf16.msra.mxu0 0
  %131 = vmatprep.subr.bf16.mxu0 0
  %132 = vmatpush1.bf16.msra.mxu0 0
  %133 = vmatprep.subr.bf16.mxu0 0
  %134 = vmatpush1.bf16.msra.mxu0 0
  %135 = vmatprep.subr.bf16.mxu0 0
  %136 = vmatpush1.bf16.msra.mxu0 0
  %137 = vmatprep.subr.bf16.mxu0 0
  %138 = vmatpush1.bf16.msra.mxu0 %v123
  %139 = vmatprep.subr.bf16.mxu0 0
  %140 = vmatpush1.bf16.msra.mxu0 %v90
  %141 = vmatprep.subr.bf16.mxu0 0
  %142 = vmatpush2.bf16.msra.mxu0 0
  %143 = vmatprep.subr.bf16.mxu0 0
  %144 = vmatpush2.bf16.msra.mxu0 0
  %145 = vmatprep.subr.bf16.mxu0 0
  %146 = vmatpush2.bf16.msra.mxu0 0
  %147 = vmatprep.subr.bf16.mxu0 0
  %148 = vmatpush2.bf16.msra.mxu0 0
  %149 = vmatprep.subr.bf16.mxu0 0
  %150 = vmatpush2.bf16.msra.mxu0 0
  %151 = vmatprep.subr.bf16.mxu0 0
  %152 = vmatpush2.bf16.msra.mxu0 0
  %153 = vmatprep.subr.bf16.mxu0 0
  %154 = vmatpush2.bf16.msra.mxu0 0
  %155 = vmatprep.subr.bf16.mxu0 0
  %156 = vmatpush2.bf16.msra.mxu0 0
  %157 = vmatprep.mubr.bf16.mxu0 0
  %158 = vmatmul.mubr.bf16.gmra.mxu0 %v95
  %v159 = vpop.f32.mrf.mxu0
  %v160 = vadd.f32 %v40, %v159
  %v161 = vpop.f32.mrf.mxu0
  %v162 = vpop.f32.mrf.mxu0
  %v163 = vadd.f32 %v40, %v162
  %v164 = vpop.f32.mrf.mxu0
  %165 = vmatprep.mubr.bf16.mxu0 0
  %166 = vmatmul.mubr.bf16.gmra.mxu0 %v98
  %v167 = vpop.f32.mrf.mxu0
  %v168 = vadd.f32 %v40, %v167
  %v169 = vpop.f32.mrf.mxu0
  %v170 = vpop.f32.mrf.mxu0
  %v171 = vadd.f32 %v40, %v170
  %v172 = vpop.f32.mrf.mxu0
  %173 = vmatprep.mubr.bf16.mxu0 0
  %174 = vmatmul.mubr.bf16.gmra.mxu0 %v101
  %v175 = vpop.f32.mrf.mxu0
  %v176 = vadd.f32 %v40, %v175
  %v177 = vpop.f32.mrf.mxu0
  %v178 = vpop.f32.mrf.mxu0
  %v179 = vadd.f32 %v40, %v178
  %v180 = vpop.f32.mrf.mxu0
  %181 = vmatprep.mubr.bf16.mxu0 0
  %182 = vmatmul.mubr.bf16.gmra.mxu0 %v104
  %v183 = vpop.f32.mrf.mxu0
  %v184 = vadd.f32 %v40, %v183
  %v185 = vpop.f32.mrf.mxu0
  %v186 = vpop.f32.mrf.mxu0
  %v187 = vadd.f32 %v40, %v186
  %v188 = vpop.f32.mrf.mxu0
  %189 = vmatprep.mubr.bf16.mxu0 0
  %190 = vmatmul.mubr.bf16.gmra.mxu0 %v107
  %v191 = vpop.f32.mrf.mxu0
  %v192 = vadd.f32 %v40, %v191
  %v193 = vpop.f32.mrf.mxu0
  %v194 = vpop.f32.mrf.mxu0
  %v195 = vadd.f32 %v40, %v194
  %v196 = vpop.f32.mrf.mxu0
  %197 = vmatprep.mubr.bf16.mxu0 0
  %198 = vmatmul.mubr.bf16.gmra.mxu0 %v110
  %v199 = vpop.f32.mrf.mxu0
  %v200 = vadd.f32 %v40, %v199
  %v201 = vpop.f32.mrf.mxu0
  %v202 = vpop.f32.mrf.mxu0
  %v203 = vadd.f32 %v40, %v202
  %v204 = vpop.f32.mrf.mxu0
  %205 = vmatprep.mubr.bf16.mxu0 0
  %206 = vmatmul.mubr.bf16.gmra.mxu0 %v113
  %v207 = vpop.f32.mrf.mxu0
  %v208 = vadd.f32 %v40, %v207
  %v209 = vpop.f32.mrf.mxu0
  %v210 = vpop.f32.mrf.mxu0
  %v211 = vadd.f32 %v40, %v210
  %v212 = vpop.f32.mrf.mxu0
  %213 = vmatprep.mubr.bf16.mxu0 0
  %214 = vmatmul.mubr.bf16.gmra.mxu0 %v116
  %v215 = vpop.f32.mrf.mxu0
  %v216 = vadd.f32 %v40, %v215
  %v217 = vpop.f32.mrf.mxu0
  %v218 = vpop.f32.mrf.mxu0
  %v219 = vadd.f32 %v40, %v218
  %v220 = vpop.f32.mrf.mxu0
  %221 = vdwg.mxu0
  %v222 = vmax.f32 %v160, 0.0
  %v223 = vmax.f32 %v163, 0.0
  %v224 = vmax.f32 %v168, 0.0
  %v225 = vmax.f32 %v171, 0.0
  %v226 = vmax.f32 %v176, 0.0
  %v227 = vmax.f32 %v179, 0.0
  %v228 = vmax.f32 %v184, 0.0
  %v229 = vmax.f32 %v187, 0.0
  %v230 = vmax.f32 %v192, 0.0
  %v231 = vmax.f32 %v195, 0.0
  %v232 = vmax.f32 %v200, 0.0
  %v233 = vmax.f32 %v203, 0.0
  %v234 = vmax.f32 %v208, 0.0
  %v235 = vmax.f32 %v211, 0.0
  %v236 = vmax.f32 %v216, 0.0
  %v237 = vmax.f32 %v219, 0.0
  %v238 = vpack.c.bf16 %v223, %v222
  %v239 = vpack.c.bf16 %v225, %v224
  %v240 = vpack.c.bf16 %v227, %v226
  %v241 = vpack.c.bf16 %v229, %v228
  %v242 = vpack.c.bf16 %v231, %v230
  %v243 = vpack.c.bf16 %v233, %v232
  %v244 = vpack.c.bf16 %v235, %v234
  %v245 = vpack.c.bf16 %v237, %v236
  %v254 = vunpack.c.l.b16 %v238
  %v255 = vunpack.c.h.b16 %v238
  %v256 = vunpack.c.l.b16 %v239
  %v257 = vunpack.c.h.b16 %v239
  %v258 = vunpack.c.l.b16 %v240
  %v259 = vunpack.c.h.b16 %v240
  %v260 = vunpack.c.l.b16 %v241
  %v261 = vunpack.c.h.b16 %v241
  %v262 = vunpack.c.l.b16 %v242
  %v263 = vunpack.c.h.b16 %v242
  %v264 = vunpack.c.l.b16 %v243
  %v265 = vunpack.c.h.b16 %v243
  %v266 = vunpack.c.l.b16 %v244
  %v267 = vunpack.c.h.b16 %v244
  %v268 = vunpack.c.l.b16 %v245
  %v269 = vunpack.c.h.b16 %v245
  %v270 = vpack.c.b16 %v254, %v254
  %v271 = vpack.c.b16 %v255, %v255
  %v272 = vpack.c.b16 %v256, %v256
  %v273 = vpack.c.b16 %v257, %v257
  %v274 = vpack.c.b16 %v258, %v258
  %v275 = vpack.c.b16 %v259, %v259
  %v276 = vpack.c.b16 %v260, %v260
  %v277 = vpack.c.b16 %v261, %v261
  %v278 = vpack.c.b16 %v262, %v262
  %v279 = vpack.c.b16 %v263, %v263
  %v280 = vpack.c.b16 %v264, %v264
  %v281 = vpack.c.b16 %v265, %v265
  %v282 = vpack.c.b16 %v266, %v266
  %v283 = vpack.c.b16 %v267, %v267
  %v284 = vpack.c.b16 %v268, %v268
  %v285 = vpack.c.b16 %v269, %v269
  %vm302 = vcmask 125952
  %303 = vst.msk [vmem:[%s3] sm:$0xf] %vm302, %v270
  %304 = vst.msk [vmem:[%s3 + $0x4] sm:$0xf] %vm302, %v271
  %305 = vst.msk [vmem:[%s3 + $0x8] sm:$0xf] %vm302, %v272
  %306 = vst.msk [vmem:[%s3 + $0xc] sm:$0xf] %vm302, %v273
  %307 = vst.msk [vmem:[%s3 + $0x10] sm:$0xf] %vm302, %v274
  %308 = vst.msk [vmem:[%s3 + $0x14] sm:$0xf] %vm302, %v275
  %309 = vst.msk [vmem:[%s3 + $0x18] sm:$0xf] %vm302, %v276
  %310 = vst.msk [vmem:[%s3 + $0x1c] sm:$0xf] %vm302, %v277
  %311 = vst.msk [vmem:[%s3 + $0x20] sm:$0xf] %vm302, %v278
  %312 = vst.msk [vmem:[%s3 + $0x24] sm:$0xf] %vm302, %v279
  %313 = vst.msk [vmem:[%s3 + $0x28] sm:$0xf] %vm302, %v280
  %314 = vst.msk [vmem:[%s3 + $0x2c] sm:$0xf] %vm302, %v281
  %315 = vst.msk [vmem:[%s3 + $0x30] sm:$0xf] %vm302, %v282
  %316 = vst.msk [vmem:[%s3 + $0x34] sm:$0xf] %vm302, %v283
  %317 = vst.msk [vmem:[%s3 + $0x38] sm:$0xf] %vm302, %v284
  %318 = vst.msk [vmem:[%s3 + $0x3c] sm:$0xf] %vm302, %v285
  // Predicated region
  $region14: #{deeplabv3_forward.11} parent=0 // pred_check
    _
  $region15: #{deeplabv3_forward.11} parent=0 // pred_check_branch
    %320 = sbr.rel (0) target = $region17
  $region16: #{deeplabv3_forward.11} parent=0 // pred_region
    _
  $region17: #{deeplabv3_forward.11} parent=0 // pred_fallthru
    _
  // Predicated region
  $region18: #{deeplabv3_forward.11} parent=0 // pred_check
    _
  $region19: #{deeplabv3_forward.11} parent=0 // pred_check_branch
    %322 = sbr.rel (0) target = $region21
  $region20: #{deeplabv3_forward.11} parent=0 // pred_region
    _
  $region21: #{deeplabv3_forward.11} parent=0 // pred_fallthru
    _

// kernel: deeplabv3_forward.12
$region0: #{deeplabv3_forward.12}
  #allocation0 [shape = 'u32[]', space=smem, size = 0x4, offset = 0x4, fixed_abs, tag = 'smem constant byte address 0x4 - core index']
  #allocation1 [shape = 'u32[144,128]{1,0:T(1,128)}', space=vmem, size = 0x12000, scoped, tag = 'internal scratch']
  %s0 = inlined_call_operand.vmem [shape: bf16[32,144], index: 0, kind: input, shape index: {}]
  %s1 = inlined_call_operand.vmem [shape: bf16[144,32], index: 1, kind: input, shape index: {}]
  %s2 = inlined_call_operand.vmem [shape: f32[1,32], index: 2, kind: input, shape index: {}]
  %s3 = inlined_call_operand.vmem [shape: bf16[32,32], index: 3, kind: output, shape index: {}]
  %s4 = sld [smem:[#allocation0]]
  $region22: #{deeplabv3_forward.12} parent=0
    _
  %s6 = ssub.s32 1, %s4
  %s7 = scalar_select 0, %s6, %s4
  // Predicated region
  $region2: #{deeplabv3_forward.12} parent=0 // pred_check
    _
  $region3: #{deeplabv3_forward.12} parent=0 // pred_check_branch
    %9 = sbr.rel (0) target = $region5
  $region4: #{deeplabv3_forward.12} parent=0 // pred_region
    _
  $region5: #{deeplabv3_forward.12} parent=0 // pred_fallthru
    _
  // Predicated region
  $region6: #{deeplabv3_forward.12} parent=0 // pred_check
    _
  $region7: #{deeplabv3_forward.12} parent=0 // pred_check_branch
    %11 = sbr.rel (0) target = $region9
  $region8: #{deeplabv3_forward.12} parent=0 // pred_region
    _
  $region9: #{deeplabv3_forward.12} parent=0 // pred_fallthru
    _
  // Predicated region
  $region10: #{deeplabv3_forward.12} parent=0 // pred_check
    _
  $region11: #{deeplabv3_forward.12} parent=0 // pred_check_branch
    %13 = sbr.rel (0) target = $region13
  $region12: #{deeplabv3_forward.12} parent=0 // pred_region
    _
  $region13: #{deeplabv3_forward.12} parent=0 // pred_fallthru
    _
  %v15 = vld [vmem:[%s0] sm:$0xff]
  %v16 = vld [vmem:[%s0 + $0x8] sm:$0xff]
  %v17 = vld [vmem:[%s0 + $0x10] sm:$0xff]
  %v18 = vld [vmem:[%s0 + $0x18] sm:$0xff]
  %v19 = vld [vmem:[%s1] sm:$0xf]
  %v20 = vld [vmem:[%s1 + $0x4] sm:$0xf]
  %v21 = vld [vmem:[%s1 + $0x8] sm:$0xf]
  %v22 = vld [vmem:[%s1 + $0xc] sm:$0xf]
  %v23 = vld [vmem:[%s1 + $0x10] sm:$0xf]
  %v24 = vld [vmem:[%s1 + $0x14] sm:$0xf]
  %v25 = vld [vmem:[%s1 + $0x18] sm:$0xf]
  %v26 = vld [vmem:[%s1 + $0x1c] sm:$0xf]
  %v27 = vld [vmem:[%s1 + $0x20] sm:$0xf]
  %v28 = vld [vmem:[%s1 + $0x24] sm:$0xf]
  %v29 = vld [vmem:[%s1 + $0x28] sm:$0xf]
  %v30 = vld [vmem:[%s1 + $0x2c] sm:$0xf]
  %v31 = vld [vmem:[%s1 + $0x30] sm:$0xf]
  %v32 = vld [vmem:[%s1 + $0x34] sm:$0xf]
  %v33 = vld [vmem:[%s1 + $0x38] sm:$0xf]
  %v34 = vld [vmem:[%s1 + $0x3c] sm:$0xf]
  %v35 = vld [vmem:[%s1 + $0x40] sm:$0xf]
  %v36 = vld [vmem:[%s1 + $0x44] sm:$0xf]
  %v37 = vld [vmem:[%s2] sm:$0x1]
  %v39 = vlaneseq
  %v40 = vshrl.u32 %v39, 7
  %v41 = vsub.s32 0, %v40
  %v42 = vrot.slane %v37, %v41
  %v48 = vunpack.c.l.b16 %v15
  %v49 = vunpack.c.h.b16 %v15
  %v50 = vunpack.c.l.b16 %v16
  %v51 = vunpack.c.h.b16 %v16
  %v52 = vunpack.c.l.b16 %v17
  %v53 = vunpack.c.h.b16 %v17
  %v54 = vunpack.c.l.b16 %v18
  %v55 = vunpack.c.h.b16 %v18
  %v56 = vpack.c.b16 %v50, %v48
  %v57 = vpack.c.b16 %v51, %v49
  %v58 = vpack.c.b16 %v54, %v52
  %v59 = vpack.c.b16 %v55, %v53
  %v80 = vunpack.c.l.b16 %v19
  %v81 = vunpack.c.l.b16 %v20
  %v82 = vunpack.c.l.b16 %v21
  %v83 = vunpack.c.l.b16 %v22
  %v84 = vunpack.c.l.b16 %v23
  %v85 = vunpack.c.l.b16 %v24
  %v86 = vunpack.c.l.b16 %v25
  %v87 = vunpack.c.l.b16 %v26
  %v88 = vunpack.c.l.b16 %v27
  %v89 = vunpack.c.l.b16 %v28
  %v90 = vunpack.c.l.b16 %v29
  %v91 = vunpack.c.l.b16 %v30
  %v92 = vunpack.c.l.b16 %v31
  %v93 = vunpack.c.l.b16 %v32
  %v94 = vunpack.c.l.b16 %v33
  %v95 = vunpack.c.l.b16 %v34
  %v96 = vunpack.c.l.b16 %v35
  %v97 = vunpack.c.l.b16 %v36
  %v98 = vpack.c.b16 %v81, %v80
  %v99 = vpack.c.b16 %v83, %v82
  %v100 = vpack.c.b16 %v85, %v84
  %v101 = vpack.c.b16 %v87, %v86
  %v102 = vpack.c.b16 %v89, %v88
  %v103 = vpack.c.b16 %v91, %v90
  %v104 = vpack.c.b16 %v93, %v92
  %v105 = vpack.c.b16 %v95, %v94
  %v106 = vpack.c.b16 %v97, %v96
  %vm116 = vcmask 130048
  %v118 = vsel %vm116, %v57, 0
  %v121 = vsel %vm116, %v59, 0
  %123 = vmatprep.subr.bf16.mxu0 0
  %124 = vmatpush1.bf16.msra.mxu0 %v105
  %125 = vmatprep.subr.bf16.mxu0 0
  %126 = vmatpush1.bf16.msra.mxu0 %v104
  %127 = vmatprep.subr.bf16.mxu0 0
  %128 = vmatpush1.bf16.msra.mxu0 %v103
  %129 = vmatprep.subr.bf16.mxu0 0
  %130 = vmatpush1.bf16.msra.mxu0 %v102
  %131 = vmatprep.subr.bf16.mxu0 0
  %132 = vmatpush1.bf16.msra.mxu0 %v101
  %133 = vmatprep.subr.bf16.mxu0 0
  %134 = vmatpush1.bf16.msra.mxu0 %v100
  %135 = vmatprep.subr.bf16.mxu0 0
  %136 = vmatpush1.bf16.msra.mxu0 %v99
  %137 = vmatprep.subr.bf16.mxu0 0
  %138 = vmatpush1.bf16.msra.mxu0 %v98
  %139 = vmatprep.subr.bf16.mxu0 0
  %140 = vmatpush2.bf16.msra.mxu0 0
  %141 = vmatprep.subr.bf16.mxu0 0
  %142 = vmatpush2.bf16.msra.mxu0 0
  %143 = vmatprep.subr.bf16.mxu0 0
  %144 = vmatpush2.bf16.msra.mxu0 0
  %145 = vmatprep.subr.bf16.mxu0 0
  %146 = vmatpush2.bf16.msra.mxu0 0
  %147 = vmatprep.subr.bf16.mxu0 0
  %148 = vmatpush2.bf16.msra.mxu0 0
  %149 = vmatprep.subr.bf16.mxu0 0
  %150 = vmatpush2.bf16.msra.mxu0 0
  %151 = vmatprep.subr.bf16.mxu0 0
  %152 = vmatpush2.bf16.msra.mxu0 0
  %153 = vmatprep.subr.bf16.mxu0 0
  %154 = vmatpush2.bf16.msra.mxu0 %v106
  %155 = vmatprep.mubr.bf16.mxu0 %v118
  %156 = vmatmul.mubr.bf16.gmra.mxu0 %v56
  %v157 = vpop.f32.mrf.mxu0
  %v158 = vadd.f32 %v42, %v157
  %v159 = vpop.f32.mrf.mxu0
  %v160 = vpop.f32.mrf.mxu0
  %v161 = vadd.f32 %v42, %v160
  %v162 = vpop.f32.mrf.mxu0
  %163 = vmatprep.mubr.bf16.mxu0 %v121
  %164 = vmatmul.mubr.bf16.gmra.mxu0 %v58
  %v165 = vpop.f32.mrf.mxu0
  %v166 = vadd.f32 %v42, %v165
  %v167 = vpop.f32.mrf.mxu0
  %v168 = vpop.f32.mrf.mxu0
  %v169 = vadd.f32 %v42, %v168
  %v170 = vpop.f32.mrf.mxu0
  %171 = vdwg.mxu0
  %v172 = vmax.f32 %v158, 0.0
  %v173 = vmax.f32 %v161, 0.0
  %v174 = vmax.f32 %v166, 0.0
  %v175 = vmax.f32 %v169, 0.0
  %v176 = vpack.c.bf16 %v173, %v172
  %v177 = vpack.c.bf16 %v175, %v174
  %v180 = vunpack.c.l.b16 %v176
  %v181 = vunpack.c.h.b16 %v176
  %v182 = vunpack.c.l.b16 %v177
  %v183 = vunpack.c.h.b16 %v177
  %v184 = vpack.c.b16 %v180, %v180
  %v185 = vpack.c.b16 %v181, %v181
  %v186 = vpack.c.b16 %v182, %v182
  %v187 = vpack.c.b16 %v183, %v183
  %vm192 = vcmask 257024
  %193 = vst.msk [vmem:[%s3] sm:$0xf] %vm192, %v184
  %194 = vst.msk [vmem:[%s3 + $0x4] sm:$0xf] %vm192, %v185
  %195 = vst.msk [vmem:[%s3 + $0x8] sm:$0xf] %vm192, %v186
  %196 = vst.msk [vmem:[%s3 + $0xc] sm:$0xf] %vm192, %v187
  // Predicated region
  $region14: #{deeplabv3_forward.12} parent=0 // pred_check
    _
  $region15: #{deeplabv3_forward.12} parent=0 // pred_check_branch
    %198 = sbr.rel (0) target = $region17
  $region16: #{deeplabv3_forward.12} parent=0 // pred_region
    _
  $region17: #{deeplabv3_forward.12} parent=0 // pred_fallthru
    _
  // Predicated region
  $region18: #{deeplabv3_forward.12} parent=0 // pred_check
    _
  $region19: #{deeplabv3_forward.12} parent=0 // pred_check_branch
    %200 = sbr.rel (0) target = $region21
  $region20: #{deeplabv3_forward.12} parent=0 // pred_region
    _
  $region21: #{deeplabv3_forward.12} parent=0 // pred_fallthru
    _

// kernel: deeplabv3_forward.13
$region0: #{deeplabv3_forward.13}
  #allocation0 [shape = 'u32[]', space=smem, size = 0x4, offset = 0x4, fixed_abs, tag = 'smem constant byte address 0x4 - core index']
  #allocation1 [shape = 'u32[144,128]{1,0:T(1,128)}', space=vmem, size = 0x12000, scoped, tag = 'internal scratch']
  %s0 = inlined_call_operand.vmem [shape: bf16[32,288], index: 0, kind: input, shape index: {}]
  %s1 = inlined_call_operand.vmem [shape: bf16[288,64], index: 1, kind: input, shape index: {}]
  %s2 = inlined_call_operand.vmem [shape: f32[1,64], index: 2, kind: input, shape index: {}]
  %s3 = inlined_call_operand.vmem [shape: bf16[32,64], index: 3, kind: output, shape index: {}]
  %s4 = sld [smem:[#allocation0]]
  $region22: #{deeplabv3_forward.13} parent=0
    _
  %s6 = ssub.s32 1, %s4
  %s7 = scalar_select 0, %s6, %s4
  // Predicated region
  $region2: #{deeplabv3_forward.13} parent=0 // pred_check
    _
  $region3: #{deeplabv3_forward.13} parent=0 // pred_check_branch
    %9 = sbr.rel (0) target = $region5
  $region4: #{deeplabv3_forward.13} parent=0 // pred_region
    _
  $region5: #{deeplabv3_forward.13} parent=0 // pred_fallthru
    _
  // Predicated region
  $region6: #{deeplabv3_forward.13} parent=0 // pred_check
    _
  $region7: #{deeplabv3_forward.13} parent=0 // pred_check_branch
    %11 = sbr.rel (0) target = $region9
  $region8: #{deeplabv3_forward.13} parent=0 // pred_region
    _
  $region9: #{deeplabv3_forward.13} parent=0 // pred_fallthru
    _
  // Predicated region
  $region10: #{deeplabv3_forward.13} parent=0 // pred_check
    _
  $region11: #{deeplabv3_forward.13} parent=0 // pred_check_branch
    %13 = sbr.rel (0) target = $region13
  $region12: #{deeplabv3_forward.13} parent=0 // pred_region
    _
  $region13: #{deeplabv3_forward.13} parent=0 // pred_fallthru
    _
  %v15 = vld [vmem:[%s0] sm:$0xff]
  %v16 = vld [vmem:[%s0 + $0x8] sm:$0xf]
  %v17 = vld [vmem:[%s0 + $0xc] sm:$0xff]
  %v18 = vld [vmem:[%s0 + $0x14] sm:$0xf]
  %v19 = vld [vmem:[%s0 + $0x18] sm:$0xff]
  %v20 = vld [vmem:[%s0 + $0x20] sm:$0xf]
  %v21 = vld [vmem:[%s0 + $0x24] sm:$0xff]
  %v22 = vld [vmem:[%s0 + $0x2c] sm:$0xf]
  %v23 = vld [vmem:[%s1] sm:$0xf]
  %v24 = vld [vmem:[%s1 + $0x4] sm:$0xf]
  %v25 = vld [vmem:[%s1 + $0x8] sm:$0xf]
  %v26 = vld [vmem:[%s1 + $0xc] sm:$0xf]
  %v27 = vld [vmem:[%s1 + $0x10] sm:$0xf]
  %v28 = vld [vmem:[%s1 + $0x14] sm:$0xf]
  %v29 = vld [vmem:[%s1 + $0x18] sm:$0xf]
  %v30 = vld [vmem:[%s1 + $0x1c] sm:$0xf]
  %v31 = vld [vmem:[%s1 + $0x20] sm:$0xf]
  %v32 = vld [vmem:[%s1 + $0x24] sm:$0xf]
  %v33 = vld [vmem:[%s1 + $0x28] sm:$0xf]
  %v34 = vld [vmem:[%s1 + $0x2c] sm:$0xf]
  %v35 = vld [vmem:[%s1 + $0x30] sm:$0xf]
  %v36 = vld [vmem:[%s1 + $0x34] sm:$0xf]
  %v37 = vld [vmem:[%s1 + $0x38] sm:$0xf]
  %v38 = vld [vmem:[%s1 + $0x3c] sm:$0xf]
  %v39 = vld [vmem:[%s1 + $0x40] sm:$0xf]
  %v40 = vld [vmem:[%s1 + $0x44] sm:$0xf]
  %v41 = vld [vmem:[%s1 + $0x48] sm:$0xf]
  %v42 = vld [vmem:[%s1 + $0x4c] sm:$0xf]
  %v43 = vld [vmem:[%s1 + $0x50] sm:$0xf]
  %v44 = vld [vmem:[%s1 + $0x54] sm:$0xf]
  %v45 = vld [vmem:[%s1 + $0x58] sm:$0xf]
  %v46 = vld [vmem:[%s1 + $0x5c] sm:$0xf]
  %v47 = vld [vmem:[%s1 + $0x60] sm:$0xf]
  %v48 = vld [vmem:[%s1 + $0x64] sm:$0xf]
  %v49 = vld [vmem:[%s1 + $0x68] sm:$0xf]
  %v50 = vld [vmem:[%s1 + $0x6c] sm:$0xf]
  %v51 = vld [vmem:[%s1 + $0x70] sm:$0xf]
  %v52 = vld [vmem:[%s1 + $0x74] sm:$0xf]
  %v53 = vld [vmem:[%s1 + $0x78] sm:$0xf]
  %v54 = vld [vmem:[%s1 + $0x7c] sm:$0xf]
  %v55 = vld [vmem:[%s1 + $0x80] sm:$0xf]
  %v56 = vld [vmem:[%s1 + $0x84] sm:$0xf]
  %v57 = vld [vmem:[%s1 + $0x88] sm:$0xf]
  %v58 = vld [vmem:[%s1 + $0x8c] sm:$0xf]
  %v59 = vld [vmem:[%s2] sm:$0x1]
  %v61 = vlaneseq
  %v62 = vshrl.u32 %v61, 7
  %v63 = vsub.s32 0, %v62
  %v64 = vrot.slane %v59, %v63
  %v74 = vunpack.c.l.b16 %v15
  %v75 = vunpack.c.h.b16 %v15
  %v76 = vunpack.c.l.b16 %v16
  %v77 = vunpack.c.l.b16 %v17
  %v78 = vunpack.c.h.b16 %v17
  %v79 = vunpack.c.l.b16 %v18
  %v80 = vunpack.c.l.b16 %v19
  %v81 = vunpack.c.h.b16 %v19
  %v82 = vunpack.c.l.b16 %v20
  %v83 = vunpack.c.l.b16 %v21
  %v84 = vunpack.c.h.b16 %v21
  %v85 = vunpack.c.l.b16 %v22
  %v86 = vpack.c.b16 %v77, %v74
  %v87 = vpack.c.b16 %v78, %v75
  %v88 = vpack.c.b16 %v79, %v76
  %v89 = vpack.c.b16 %v83, %v80
  %v90 = vpack.c.b16 %v84, %v81
  %v91 = vpack.c.b16 %v85, %v82
  %v132 = vunpack.c.l.b16 %v23
  %v133 = vunpack.c.l.b16 %v24
  %v134 = vunpack.c.l.b16 %v25
  %v135 = vunpack.c.l.b16 %v26
  %v136 = vunpack.c.l.b16 %v27
  %v137 = vunpack.c.l.b16 %v28
  %v138 = vunpack.c.l.b16 %v29
  %v139 = vunpack.c.l.b16 %v30
  %v140 = vunpack.c.l.b16 %v31
  %v141 = vunpack.c.l.b16 %v32
  %v142 = vunpack.c.l.b16 %v33
  %v143 = vunpack.c.l.b16 %v34
  %v144 = vunpack.c.l.b16 %v35
  %v145 = vunpack.c.l.b16 %v36
  %v146 = vunpack.c.l.b16 %v37
  %v147 = vunpack.c.l.b16 %v38
  %v148 = vunpack.c.l.b16 %v39
  %v149 = vunpack.c.l.b16 %v40
  %v150 = vunpack.c.l.b16 %v41
  %v151 = vunpack.c.l.b16 %v42
  %v152 = vunpack.c.l.b16 %v43
  %v153 = vunpack.c.l.b16 %v44
  %v154 = vunpack.c.l.b16 %v45
  %v155 = vunpack.c.l.b16 %v46
  %v156 = vunpack.c.l.b16 %v47
  %v157 = vunpack.c.l.b16 %v48
  %v158 = vunpack.c.l.b16 %v49
  %v159 = vunpack.c.l.b16 %v50
  %v160 = vunpack.c.l.b16 %v51
  %v161 = vunpack.c.l.b16 %v52
  %v162 = vunpack.c.l.b16 %v53
  %v163 = vunpack.c.l.b16 %v54
  %v164 = vunpack.c.l.b16 %v55
  %v165 = vunpack.c.l.b16 %v56
  %v166 = vunpack.c.l.b16 %v57
  %v167 = vunpack.c.l.b16 %v58
  %v168 = vpack.c.b16 %v133, %v132
  %v169 = vpack.c.b16 %v135, %v134
  %v170 = vpack.c.b16 %v137, %v136
  %v171 = vpack.c.b16 %v139, %v138
  %v172 = vpack.c.b16 %v141, %v140
  %v173 = vpack.c.b16 %v143, %v142
  %v174 = vpack.c.b16 %v145, %v144
  %v175 = vpack.c.b16 %v147, %v146
  %v176 = vpack.c.b16 %v149, %v148
  %v177 = vpack.c.b16 %v151, %v150
  %v178 = vpack.c.b16 %v153, %v152
  %v179 = vpack.c.b16 %v155, %v154
  %v180 = vpack.c.b16 %v157, %v156
  %v181 = vpack.c.b16 %v159, %v158
  %v182 = vpack.c.b16 %v161, %v160
  %v183 = vpack.c.b16 %v163, %v162
  %v184 = vpack.c.b16 %v165, %v164
  %v185 = vpack.c.b16 %v167, %v166
  %vm204 = vcmask 261120
  %v206 = vsel %vm204, %v88, 0
  %v209 = vsel %vm204, %v91, 0
  %211 = vmatprep.subr.bf16.mxu0 0
  %212 = vmatpush1.bf16.msra.mxu0 %v175
  %213 = vmatprep.subr.bf16.mxu0 0
  %214 = vmatpush1.bf16.msra.mxu0 %v174
  %215 = vmatprep.subr.bf16.mxu0 0
  %216 = vmatpush1.bf16.msra.mxu0 %v173
  %217 = vmatprep.subr.bf16.mxu0 0
  %218 = vmatpush1.bf16.msra.mxu0 %v172
  %219 = vmatprep.subr.bf16.mxu0 0
  %220 = vmatpush1.bf16.msra.mxu0 %v171
  %221 = vmatprep.subr.bf16.mxu0 0
  %222 = vmatpush1.bf16.msra.mxu0 %v170
  %223 = vmatprep.subr.bf16.mxu0 0
  %224 = vmatpush1.bf16.msra.mxu0 %v169
  %225 = vmatprep.subr.bf16.mxu0 0
  %226 = vmatpush1.bf16.msra.mxu0 %v168
  %227 = vmatprep.subr.bf16.mxu0 0
  %228 = vmatpush2.bf16.msra.mxu0 %v183
  %229 = vmatprep.subr.bf16.mxu0 0
  %230 = vmatpush2.bf16.msra.mxu0 %v182
  %231 = vmatprep.subr.bf16.mxu0 0
  %232 = vmatpush2.bf16.msra.mxu0 %v181
  %233 = vmatprep.subr.bf16.mxu0 0
  %234 = vmatpush2.bf16.msra.mxu0 %v180
  %235 = vmatprep.subr.bf16.mxu0 0
  %236 = vmatpush2.bf16.msra.mxu0 %v179
  %237 = vmatprep.subr.bf16.mxu0 0
  %238 = vmatpush2.bf16.msra.mxu0 %v178
  %239 = vmatprep.subr.bf16.mxu0 0
  %240 = vmatpush2.bf16.msra.mxu0 %v177
  %241 = vmatprep.subr.bf16.mxu0 0
  %242 = vmatpush2.bf16.msra.mxu0 %v176
  %243 = vmatprep.mubr.bf16.mxu0 %v87
  %244 = vmatmul.mubr.bf16.gmra.mxu0 %v86
  %v245 = vpop.f32.mrf.mxu0
  %v246 = vadd.f32 %v64, %v245
  %v247 = vpop.f32.mrf.mxu0
  %v248 = vpop.f32.mrf.mxu0
  %v249 = vadd.f32 %v64, %v248
  %v250 = vpop.f32.mrf.mxu0
  %251 = vmatprep.mubr.bf16.mxu0 %v90
  %252 = vmatmul.mubr.bf16.gmra.mxu0 %v89
  %v253 = vpop.f32.mrf.mxu0
  %v254 = vadd.f32 %v64, %v253
  %v255 = vpop.f32.mrf.mxu0
  %v256 = vpop.f32.mrf.mxu0
  %v257 = vadd.f32 %v64, %v256
  %v258 = vpop.f32.mrf.mxu0
  %259 = vdwg.mxu0
  %260 = vmatprep.subr.bf16.mxu0 0
  %261 = vmatpush1.bf16.msra.mxu0 0
  %262 = vmatprep.subr.bf16.mxu0 0
  %263 = vmatpush1.bf16.msra.mxu0 0
  %264 = vmatprep.subr.bf16.mxu0 0
  %265 = vmatpush1.bf16.msra.mxu0 0
  %266 = vmatprep.subr.bf16.mxu0 0
  %267 = vmatpush1.bf16.msra.mxu0 0
  %268 = vmatprep.subr.bf16.mxu0 0
  %269 = vmatpush1.bf16.msra.mxu0 0
  %270 = vmatprep.subr.bf16.mxu0 0
  %271 = vmatpush1.bf16.msra.mxu0 0
  %272 = vmatprep.subr.bf16.mxu0 0
  %273 = vmatpush1.bf16.msra.mxu0 %v185
  %274 = vmatprep.subr.bf16.mxu0 0
  %275 = vmatpush1.bf16.msra.mxu0 %v184
  %276 = vmatprep.subr.bf16.mxu0 0
  %277 = vmatpush2.bf16.msra.mxu0 0
  %278 = vmatprep.subr.bf16.mxu0 0
  %279 = vmatpush2.bf16.msra.mxu0 0
  %280 = vmatprep.subr.bf16.mxu0 0
  %281 = vmatpush2.bf16.msra.mxu0 0
  %282 = vmatprep.subr.bf16.mxu0 0
  %283 = vmatpush2.bf16.msra.mxu0 0
  %284 = vmatprep.subr.bf16.mxu0 0
  %285 = vmatpush2.bf16.msra.mxu0 0
  %286 = vmatprep.subr.bf16.mxu0 0
  %287 = vmatpush2.bf16.msra.mxu0 0
  %288 = vmatprep.subr.bf16.mxu0 0
  %289 = vmatpush2.bf16.msra.mxu0 0
  %290 = vmatprep.subr.bf16.mxu0 0
  %291 = vmatpush2.bf16.msra.mxu0 0
  %292 = vmatprep.mubr.bf16.mxu0 0
  %293 = vmatmul.mubr.bf16.gmra.mxu0 %v206
  %v294 = vpop.f32.mrf.mxu0
  %v295 = vadd.f32 %v246, %v294
  %v296 = vpop.f32.mrf.mxu0
  %v297 = vpop.f32.mrf.mxu0
  %v298 = vadd.f32 %v249, %v297
  %v299 = vpop.f32.mrf.mxu0
  %300 = vmatprep.mubr.bf16.mxu0 0
  %301 = vmatmul.mubr.bf16.gmra.mxu0 %v209
  %v302 = vpop.f32.mrf.mxu0
  %v303 = vadd.f32 %v254, %v302
  %v304 = vpop.f32.mrf.mxu0
  %v305 = vpop.f32.mrf.mxu0
  %v306 = vadd.f32 %v257, %v305
  %v307 = vpop.f32.mrf.mxu0
  %308 = vdwg.mxu0
  %v309 = vmax.f32 %v295, 0.0
  %v310 = vmax.f32 %v298, 0.0
  %v311 = vmax.f32 %v303, 0.0
  %v312 = vmax.f32 %v306, 0.0
  %v313 = vpack.c.bf16 %v310, %v309
  %v314 = vpack.c.bf16 %v312, %v311
  %v317 = vunpack.c.l.b16 %v313
  %v318 = vunpack.c.h.b16 %v313
  %v319 = vunpack.c.l.b16 %v314
  %v320 = vunpack.c.h.b16 %v314
  %v321 = vpack.c.b16 %v317, %v317
  %v322 = vpack.c.b16 %v318, %v318
  %v323 = vpack.c.b16 %v319, %v319
  %v324 = vpack.c.b16 %v320, %v320
  %vm329 = vcmask 519168
  %330 = vst.msk [vmem:[%s3] sm:$0xf] %vm329, %v321
  %331 = vst.msk [vmem:[%s3 + $0x4] sm:$0xf] %vm329, %v322
  %332 = vst.msk [vmem:[%s3 + $0x8] sm:$0xf] %vm329, %v323
  %333 = vst.msk [vmem:[%s3 + $0xc] sm:$0xf] %vm329, %v324
  // Predicated region
  $region14: #{deeplabv3_forward.13} parent=0 // pred_check
    _
  $region15: #{deeplabv3_forward.13} parent=0 // pred_check_branch
    %335 = sbr.rel (0) target = $region17
  $region16: #{deeplabv3_forward.13} parent=0 // pred_region
    _
  $region17: #{deeplabv3_forward.13} parent=0 // pred_fallthru
    _
  // Predicated region
  $region18: #{deeplabv3_forward.13} parent=0 // pred_check
    _
  $region19: #{deeplabv3_forward.13} parent=0 // pred_check_branch
    %337 = sbr.rel (0) target = $region21
  $region20: #{deeplabv3_forward.13} parent=0 // pred_region
    _
  $region21: #{deeplabv3_forward.13} parent=0 // pred_fallthru
    _

// kernel: deeplabv3_forward.20
$region0: #{deeplabv3_forward.20}
  #allocation0 [shape = 'u32[]', space=smem, size = 0x4, offset = 0x4, fixed_abs, tag = 'smem constant byte address 0x4 - core index']
  #allocation1 [shape = 'u32[144,128]{1,0:T(1,128)}', space=vmem, size = 0x12000, scoped, tag = 'internal scratch']
  %s0 = inlined_call_operand.vmem [shape: bf16[32,288], index: 0, kind: input, shape index: {}]
  %s1 = inlined_call_operand.vmem [shape: bf16[288,8], index: 1, kind: input, shape index: {}]
  %s2 = inlined_call_operand.vmem [shape: f32[1,8], index: 2, kind: input, shape index: {}]
  %s3 = inlined_call_operand.vmem [shape: bf16[8,5], index: 3, kind: input, shape index: {}]
  %s4 = inlined_call_operand.vmem [shape: f32[1,5], index: 4, kind: input, shape index: {}]
  %s5 = inlined_call_operand.vmem [shape: f32[32,5], index: 5, kind: output, shape index: {}]
  %s6 = sld [smem:[#allocation0]]
  $region30: #{deeplabv3_forward.20} parent=0
    _
  %s8 = ssub.s32 1, %s6
  %s9 = scalar_select 0, %s8, %s6
  // Predicated region
  $region2: #{deeplabv3_forward.20} parent=0 // pred_check
    _
  $region3: #{deeplabv3_forward.20} parent=0 // pred_check_branch
    %11 = sbr.rel (0) target = $region5
  $region4: #{deeplabv3_forward.20} parent=0 // pred_region
    _
  $region5: #{deeplabv3_forward.20} parent=0 // pred_fallthru
    _
  // Predicated region
  $region6: #{deeplabv3_forward.20} parent=0 // pred_check
    _
  $region7: #{deeplabv3_forward.20} parent=0 // pred_check_branch
    %13 = sbr.rel (0) target = $region9
  $region8: #{deeplabv3_forward.20} parent=0 // pred_region
    _
  $region9: #{deeplabv3_forward.20} parent=0 // pred_fallthru
    _
  // Predicated region
  $region10: #{deeplabv3_forward.20} parent=0 // pred_check
    _
  $region11: #{deeplabv3_forward.20} parent=0 // pred_check_branch
    %15 = sbr.rel (0) target = $region13
  $region12: #{deeplabv3_forward.20} parent=0 // pred_region
    _
  $region13: #{deeplabv3_forward.20} parent=0 // pred_fallthru
    _
  // Predicated region
  $region14: #{deeplabv3_forward.20} parent=0 // pred_check
    _
  $region15: #{deeplabv3_forward.20} parent=0 // pred_check_branch
    %17 = sbr.rel (0) target = $region17
  $region16: #{deeplabv3_forward.20} parent=0 // pred_region
    _
  $region17: #{deeplabv3_forward.20} parent=0 // pred_fallthru
    _
  // Predicated region
  $region18: #{deeplabv3_forward.20} parent=0 // pred_check
    _
  $region19: #{deeplabv3_forward.20} parent=0 // pred_check_branch
    %19 = sbr.rel (0) target = $region21
  $region20: #{deeplabv3_forward.20} parent=0 // pred_region
    _
  $region21: #{deeplabv3_forward.20} parent=0 // pred_fallthru
    _
  %v21 = vld [vmem:[%s0] sm:$0xff]
  %v22 = vld [vmem:[%s0 + $0x8] sm:$0xf]
  %v23 = vld [vmem:[%s0 + $0xc] sm:$0xff]
  %v24 = vld [vmem:[%s0 + $0x14] sm:$0xf]
  %v25 = vld [vmem:[%s0 + $0x18] sm:$0xff]
  %v26 = vld [vmem:[%s0 + $0x20] sm:$0xf]
  %v27 = vld [vmem:[%s0 + $0x24] sm:$0xff]
  %v28 = vld [vmem:[%s0 + $0x2c] sm:$0xf]
  %v29 = vld [vmem:[%s1] sm:$0xf]
  %v30 = vld [vmem:[%s1 + $0x4] sm:$0xf]
  %v31 = vld [vmem:[%s1 + $0x8] sm:$0xf]
  %v32 = vld [vmem:[%s1 + $0xc] sm:$0xf]
  %v33 = vld [vmem:[%s1 + $0x10] sm:$0xf]
  %v34 = vld [vmem:[%s1 + $0x14] sm:$0xf]
  %v35 = vld [vmem:[%s1 + $0x18] sm:$0xf]
  %v36 = vld [vmem:[%s1 + $0x1c] sm:$0xf]
  %v37 = vld [vmem:[%s1 + $0x20] sm:$0xf]
  %v38 = vld [vmem:[%s1 + $0x24] sm:$0xf]
  %v39 = vld [vmem:[%s1 + $0x28] sm:$0xf]
  %v40 = vld [vmem:[%s1 + $0x2c] sm:$0xf]
  %v41 = vld [vmem:[%s1 + $0x30] sm:$0xf]
  %v42 = vld [vmem:[%s1 + $0x34] sm:$0xf]
  %v43 = vld [vmem:[%s1 + $0x38] sm:$0xf]
  %v44 = vld [vmem:[%s1 + $0x3c] sm:$0xf]
  %v45 = vld [vmem:[%s1 + $0x40] sm:$0xf]
  %v46 = vld [vmem:[%s1 + $0x44] sm:$0xf]
  %v47 = vld [vmem:[%s1 + $0x48] sm:$0xf]
  %v48 = vld [vmem:[%s1 + $0x4c] sm:$0xf]
  %v49 = vld [vmem:[%s1 + $0x50] sm:$0xf]
  %v50 = vld [vmem:[%s1 + $0x54] sm:$0xf]
  %v51 = vld [vmem:[%s1 + $0x58] sm:$0xf]
  %v52 = vld [vmem:[%s1 + $0x5c] sm:$0xf]
  %v53 = vld [vmem:[%s1 + $0x60] sm:$0xf]
  %v54 = vld [vmem:[%s1 + $0x64] sm:$0xf]
  %v55 = vld [vmem:[%s1 + $0x68] sm:$0xf]
  %v56 = vld [vmem:[%s1 + $0x6c] sm:$0xf]
  %v57 = vld [vmem:[%s1 + $0x70] sm:$0xf]
  %v58 = vld [vmem:[%s1 + $0x74] sm:$0xf]
  %v59 = vld [vmem:[%s1 + $0x78] sm:$0xf]
  %v60 = vld [vmem:[%s1 + $0x7c] sm:$0xf]
  %v61 = vld [vmem:[%s1 + $0x80] sm:$0xf]
  %v62 = vld [vmem:[%s1 + $0x84] sm:$0xf]
  %v63 = vld [vmem:[%s1 + $0x88] sm:$0xf]
  %v64 = vld [vmem:[%s1 + $0x8c] sm:$0xf]
  %v65 = vld [vmem:[%s2] sm:$0x1]
  %v67 = vlaneseq
  %v68 = vshrl.u32 %v67, 7
  %v69 = vsub.s32 0, %v68
  %v70 = vrot.slane %v65, %v69
  %v80 = vunpack.c.l.b16 %v21
  %v81 = vunpack.c.h.b16 %v21
  %v82 = vunpack.c.l.b16 %v22
  %v83 = vunpack.c.l.b16 %v23
  %v84 = vunpack.c.h.b16 %v23
  %v85 = vunpack.c.l.b16 %v24
  %v86 = vunpack.c.l.b16 %v25
  %v87 = vunpack.c.h.b16 %v25
  %v88 = vunpack.c.l.b16 %v26
  %v89 = vunpack.c.l.b16 %v27
  %v90 = vunpack.c.h.b16 %v27
  %v91 = vunpack.c.l.b16 %v28
  %v92 = vpack.c.b16 %v83, %v80
  %v93 = vpack.c.b16 %v84, %v81
  %v94 = vpack.c.b16 %v85, %v82
  %v95 = vpack.c.b16 %v89, %v86
  %v96 = vpack.c.b16 %v90, %v87
  %v97 = vpack.c.b16 %v91, %v88
  %v138 = vunpack.c.l.b16 %v29
  %v139 = vunpack.c.l.b16 %v30
  %v140 = vunpack.c.l.b16 %v31
  %v141 = vunpack.c.l.b16 %v32
  %v142 = vunpack.c.l.b16 %v33
  %v143 = vunpack.c.l.b16 %v34
  %v144 = vunpack.c.l.b16 %v35
  %v145 = vunpack.c.l.b16 %v36
  %v146 = vunpack.c.l.b16 %v37
  %v147 = vunpack.c.l.b16 %v38
  %v148 = vunpack.c.l.b16 %v39
  %v149 = vunpack.c.l.b16 %v40
  %v150 = vunpack.c.l.b16 %v41
  %v151 = vunpack.c.l.b16 %v42
  %v152 = vunpack.c.l.b16 %v43
  %v153 = vunpack.c.l.b16 %v44
  %v154 = vunpack.c.l.b16 %v45
  %v155 = vunpack.c.l.b16 %v46
  %v156 = vunpack.c.l.b16 %v47
  %v157 = vunpack.c.l.b16 %v48
  %v158 = vunpack.c.l.b16 %v49
  %v159 = vunpack.c.l.b16 %v50
  %v160 = vunpack.c.l.b16 %v51
  %v161 = vunpack.c.l.b16 %v52
  %v162 = vunpack.c.l.b16 %v53
  %v163 = vunpack.c.l.b16 %v54
  %v164 = vunpack.c.l.b16 %v55
  %v165 = vunpack.c.l.b16 %v56
  %v166 = vunpack.c.l.b16 %v57
  %v167 = vunpack.c.l.b16 %v58
  %v168 = vunpack.c.l.b16 %v59
  %v169 = vunpack.c.l.b16 %v60
  %v170 = vunpack.c.l.b16 %v61
  %v171 = vunpack.c.l.b16 %v62
  %v172 = vunpack.c.l.b16 %v63
  %v173 = vunpack.c.l.b16 %v64
  %v174 = vpack.c.b16 %v139, %v138
  %v175 = vpack.c.b16 %v141, %v140
  %v176 = vpack.c.b16 %v143, %v142
  %v177 = vpack.c.b16 %v145, %v144
  %v178 = vpack.c.b16 %v147, %v146
  %v179 = vpack.c.b16 %v149, %v148
  %v180 = vpack.c.b16 %v151, %v150
  %v181 = vpack.c.b16 %v153, %v152
  %v182 = vpack.c.b16 %v155, %v154
  %v183 = vpack.c.b16 %v157, %v156
  %v184 = vpack.c.b16 %v159, %v158
  %v185 = vpack.c.b16 %v161, %v160
  %v186 = vpack.c.b16 %v163, %v162
  %v187 = vpack.c.b16 %v165, %v164
  %v188 = vpack.c.b16 %v167, %v166
  %v189 = vpack.c.b16 %v169, %v168
  %v190 = vpack.c.b16 %v171, %v170
  %v191 = vpack.c.b16 %v173, %v172
  %vm210 = vcmask 261120
  %v212 = vsel %vm210, %v94, 0
  %v215 = vsel %vm210, %v97, 0
  %217 = vmatprep.subr.bf16.mxu0 0
  %218 = vmatpush1.bf16.msra.mxu0 %v181
  %219 = vmatprep.subr.bf16.mxu0 0
  %220 = vmatpush1.bf16.msra.mxu0 %v180
  %221 = vmatprep.subr.bf16.mxu0 0
  %222 = vmatpush1.bf16.msra.mxu0 %v179
  %223 = vmatprep.subr.bf16.mxu0 0
  %224 = vmatpush1.bf16.msra.mxu0 %v178
  %225 = vmatprep.subr.bf16.mxu0 0
  %226 = vmatpush1.bf16.msra.mxu0 %v177
  %227 = vmatprep.subr.bf16.mxu0 0
  %228 = vmatpush1.bf16.msra.mxu0 %v176
  %229 = vmatprep.subr.bf16.mxu0 0
  %230 = vmatpush1.bf16.msra.mxu0 %v175
  %231 = vmatprep.subr.bf16.mxu0 0
  %232 = vmatpush1.bf16.msra.mxu0 %v174
  %233 = vmatprep.subr.bf16.mxu0 0
  %234 = vmatpush2.bf16.msra.mxu0 %v189
  %235 = vmatprep.subr.bf16.mxu0 0
  %236 = vmatpush2.bf16.msra.mxu0 %v188
  %237 = vmatprep.subr.bf16.mxu0 0
  %238 = vmatpush2.bf16.msra.mxu0 %v187
  %239 = vmatprep.subr.bf16.mxu0 0
  %240 = vmatpush2.bf16.msra.mxu0 %v186
  %241 = vmatprep.subr.bf16.mxu0 0
  %242 = vmatpush2.bf16.msra.mxu0 %v185
  %243 = vmatprep.subr.bf16.mxu0 0
  %244 = vmatpush2.bf16.msra.mxu0 %v184
  %245 = vmatprep.subr.bf16.mxu0 0
  %246 = vmatpush2.bf16.msra.mxu0 %v183
  %247 = vmatprep.subr.bf16.mxu0 0
  %248 = vmatpush2.bf16.msra.mxu0 %v182
  %249 = vmatprep.mubr.bf16.mxu0 %v93
  %250 = vmatmul.mubr.bf16.gmra.mxu0 %v92
  %v251 = vpop.f32.mrf.mxu0
  %v252 = vadd.f32 %v70, %v251
  %v253 = vpop.f32.mrf.mxu0
  %v254 = vpop.f32.mrf.mxu0
  %v255 = vadd.f32 %v70, %v254
  %v256 = vpop.f32.mrf.mxu0
  %257 = vmatprep.mubr.bf16.mxu0 %v96
  %258 = vmatmul.mubr.bf16.gmra.mxu0 %v95
  %v259 = vpop.f32.mrf.mxu0
  %v260 = vadd.f32 %v70, %v259
  %v261 = vpop.f32.mrf.mxu0
  %v262 = vpop.f32.mrf.mxu0
  %v263 = vadd.f32 %v70, %v262
  %v264 = vpop.f32.mrf.mxu0
  %265 = vdwg.mxu0
  %266 = vmatprep.subr.bf16.mxu0 0
  %267 = vmatpush1.bf16.msra.mxu0 0
  %268 = vmatprep.subr.bf16.mxu0 0
  %269 = vmatpush1.bf16.msra.mxu0 0
  %270 = vmatprep.subr.bf16.mxu0 0
  %271 = vmatpush1.bf16.msra.mxu0 0
  %272 = vmatprep.subr.bf16.mxu0 0
  %273 = vmatpush1.bf16.msra.mxu0 0
  %274 = vmatprep.subr.bf16.mxu0 0
  %275 = vmatpush1.bf16.msra.mxu0 0
  %276 = vmatprep.subr.bf16.mxu0 0
  %277 = vmatpush1.bf16.msra.mxu0 0
  %278 = vmatprep.subr.bf16.mxu0 0
  %279 = vmatpush1.bf16.msra.mxu0 %v191
  %280 = vmatprep.subr.bf16.mxu0 0
  %281 = vmatpush1.bf16.msra.mxu0 %v190
  %282 = vmatprep.subr.bf16.mxu0 0
  %283 = vmatpush2.bf16.msra.mxu0 0
  %284 = vmatprep.subr.bf16.mxu0 0
  %285 = vmatpush2.bf16.msra.mxu0 0
  %286 = vmatprep.subr.bf16.mxu0 0
  %287 = vmatpush2.bf16.msra.mxu0 0
  %288 = vmatprep.subr.bf16.mxu0 0
  %289 = vmatpush2.bf16.msra.mxu0 0
  %290 = vmatprep.subr.bf16.mxu0 0
  %291 = vmatpush2.bf16.msra.mxu0 0
  %292 = vmatprep.subr.bf16.mxu0 0
  %293 = vmatpush2.bf16.msra.mxu0 0
  %294 = vmatprep.subr.bf16.mxu0 0
  %295 = vmatpush2.bf16.msra.mxu0 0
  %296 = vmatprep.subr.bf16.mxu0 0
  %297 = vmatpush2.bf16.msra.mxu0 0
  %298 = vmatprep.mubr.bf16.mxu0 0
  %299 = vmatmul.mubr.bf16.gmra.mxu0 %v212
  %v300 = vpop.f32.mrf.mxu0
  %v301 = vadd.f32 %v252, %v300
  %v302 = vpop.f32.mrf.mxu0
  %v303 = vpop.f32.mrf.mxu0
  %v304 = vadd.f32 %v255, %v303
  %v305 = vpop.f32.mrf.mxu0
  %306 = vmatprep.mubr.bf16.mxu0 0
  %307 = vmatmul.mubr.bf16.gmra.mxu0 %v215
  %v308 = vpop.f32.mrf.mxu0
  %v309 = vadd.f32 %v260, %v308
  %v310 = vpop.f32.mrf.mxu0
  %v311 = vpop.f32.mrf.mxu0
  %v312 = vadd.f32 %v263, %v311
  %v313 = vpop.f32.mrf.mxu0
  %314 = vdwg.mxu0
  %v315 = vmax.f32 %v301, 0.0
  %v316 = vmax.f32 %v304, 0.0
  %v317 = vmax.f32 %v309, 0.0
  %v318 = vmax.f32 %v312, 0.0
  %v319 = vpack.c.bf16 %v316, %v315
  %v320 = vpack.c.bf16 %v318, %v317
  %v321 = vld [vmem:[%s3] sm:$0xf]
  %v322 = vld [vmem:[%s4] sm:$0x1]
  %v324 = vlaneseq
  %v325 = vshrl.u32 %v324, 7
  %v326 = vsub.s32 0, %v325
  %v327 = vrot.slane %v322, %v326
  %vm329 = vcmask 64512
  %v331 = vsel %vm329, %v319, 0
  %v334 = vsel %vm329, %v320, 0
  %vm336 = vcmask 1043456
  %v338 = vsel %vm336, %v321, 0
  %340 = vmatprep.subr.bf16.mxu0 0
  %341 = vmatpush1.bf16.msra.mxu0 0
  %342 = vmatprep.subr.bf16.mxu0 0
  %343 = vmatpush1.bf16.msra.mxu0 0
  %344 = vmatprep.subr.bf16.mxu0 0
  %345 = vmatpush1.bf16.msra.mxu0 0
  %346 = vmatprep.subr.bf16.mxu0 0
  %347 = vmatpush1.bf16.msra.mxu0 0
  %348 = vmatprep.subr.bf16.mxu0 0
  %349 = vmatpush1.bf16.msra.mxu0 0
  %350 = vmatprep.subr.bf16.mxu0 0
  %351 = vmatpush1.bf16.msra.mxu0 0
  %352 = vmatprep.subr.bf16.mxu0 0
  %353 = vmatpush1.bf16.msra.mxu0 0
  %354 = vmatprep.subr.bf16.mxu0 0
  %355 = vmatpush1.bf16.msra.mxu0 %v338
  %356 = vmatprep.subr.bf16.mxu0 0
  %357 = vmatpush2.bf16.msra.mxu0 0
  %358 = vmatprep.subr.bf16.mxu0 0
  %359 = vmatpush2.bf16.msra.mxu0 0
  %360 = vmatprep.subr.bf16.mxu0 0
  %361 = vmatpush2.bf16.msra.mxu0 0
  %362 = vmatprep.subr.bf16.mxu0 0
  %363 = vmatpush2.bf16.msra.mxu0 0
  %364 = vmatprep.subr.bf16.mxu0 0
  %365 = vmatpush2.bf16.msra.mxu0 0
  %366 = vmatprep.subr.bf16.mxu0 0
  %367 = vmatpush2.bf16.msra.mxu0 0
  %368 = vmatprep.subr.bf16.mxu0 0
  %369 = vmatpush2.bf16.msra.mxu0 0
  %370 = vmatprep.subr.bf16.mxu0 0
  %371 = vmatpush2.bf16.msra.mxu0 0
  %372 = vmatprep.mubr.bf16.mxu0 0
  %373 = vmatmul.mubr.bf16.gmra.mxu0 %v331
  %v374 = vpop.f32.mrf.mxu0
  %v375 = vadd.f32 %v327, %v374
  %v376 = vpop.f32.mrf.mxu0
  %v377 = vpop.f32.mrf.mxu0
  %v378 = vadd.f32 %v327, %v377
  %v379 = vpop.f32.mrf.mxu0
  %380 = vmatprep.mubr.bf16.mxu0 0
  %381 = vmatmul.mubr.bf16.gmra.mxu0 %v334
  %v382 = vpop.f32.mrf.mxu0
  %v383 = vadd.f32 %v327, %v382
  %v384 = vpop.f32.mrf.mxu0
  %v385 = vpop.f32.mrf.mxu0
  %v386 = vadd.f32 %v327, %v385
  %v387 = vpop.f32.mrf.mxu0
  %388 = vdwg.mxu0
  %vm389 = vcmask 39936
  %390 = vst.msk [vmem:[%s5] sm:$0xff] %vm389, %v375
  %391 = vst.msk [vmem:[%s5 + $0x8] sm:$0xff] %vm389, %v378
  %392 = vst.msk [vmem:[%s5 + $0x10] sm:$0xff] %vm389, %v383
  %393 = vst.msk [vmem:[%s5 + $0x18] sm:$0xff] %vm389, %v386
  // Predicated region
  $region22: #{deeplabv3_forward.20} parent=0 // pred_check
    _
  $region23: #{deeplabv3_forward.20} parent=0 // pred_check_branch
    %395 = sbr.rel (0) target = $region25
  $region24: #{deeplabv3_forward.20} parent=0 // pred_region
    _
  $region25: #{deeplabv3_forward.20} parent=0 // pred_fallthru
    _
  // Predicated region
  $region26: #{deeplabv3_forward.20} parent=0 // pred_check
    _
  $region27: #{deeplabv3_forward.20} parent=0 // pred_check_branch
    %397 = sbr.rel (0) target = $region29
  $region28: #{deeplabv3_forward.20} parent=0 // pred_region
    _
  $region29: #{deeplabv3_forward.20} parent=0 // pred_fallthru
    _

// kernel: deeplabv3_forward.17
$region0: #{deeplabv3_forward.17}
  #allocation0 [shape = 'u32[]', space=smem, size = 0x4, offset = 0x4, fixed_abs, tag = 'smem constant byte address 0x4 - core index']
  #allocation1 [shape = 'u32[144,128]{1,0:T(1,128)}', space=vmem, size = 0x12000, scoped, tag = 'internal scratch']
  %s0 = inlined_call_operand.vmem [shape: bf16[2,16,64], index: 0, kind: input, shape index: {}]
  %s1 = inlined_call_operand.vmem [shape: bf16[64,32], index: 1, kind: input, shape index: {}]
  %s2 = inlined_call_operand.vmem [shape: f32[1,32], index: 2, kind: input, shape index: {}]
  %s3 = inlined_call_operand.vmem [shape: bf16[2,32], index: 3, kind: output, shape index: {}]
  %s4 = sld [smem:[#allocation0]]
  $region22: #{deeplabv3_forward.17} parent=0
    _
  %s6 = ssub.s32 1, %s4
  %s7 = scalar_select 0, %s6, %s4
  // Predicated region
  $region2: #{deeplabv3_forward.17} parent=0 // pred_check
    _
  $region3: #{deeplabv3_forward.17} parent=0 // pred_check_branch
    %9 = sbr.rel (0) target = $region5
  $region4: #{deeplabv3_forward.17} parent=0 // pred_region
    _
  $region5: #{deeplabv3_forward.17} parent=0 // pred_fallthru
    _
  // Predicated region
  $region6: #{deeplabv3_forward.17} parent=0 // pred_check
    _
  $region7: #{deeplabv3_forward.17} parent=0 // pred_check_branch
    %11 = sbr.rel (0) target = $region9
  $region8: #{deeplabv3_forward.17} parent=0 // pred_region
    _
  $region9: #{deeplabv3_forward.17} parent=0 // pred_fallthru
    _
  // Predicated region
  $region10: #{deeplabv3_forward.17} parent=0 // pred_check
    _
  $region11: #{deeplabv3_forward.17} parent=0 // pred_check_branch
    %13 = sbr.rel (0) target = $region13
  $region12: #{deeplabv3_forward.17} parent=0 // pred_region
    _
  $region13: #{deeplabv3_forward.17} parent=0 // pred_fallthru
    _
  %v15 = vld [vmem:[%s0] sm:$0xf]
  %v16 = vld [vmem:[%s0 + $0x4] sm:$0xf]
  %v17 = vld [vmem:[%s0 + $0x8] sm:$0xf]
  %v18 = vld [vmem:[%s0 + $0xc] sm:$0xf]
  %v19 = vunpack.c.l.bf16 %v15
  %v20 = vunpack.c.l.bf16 %v16
  %v21 = vunpack.c.l.bf16 %v17
  %v22 = vunpack.c.l.bf16 %v18
  %vm23 = vcmask 523264
  %v24 = vsel %vm23, %v19, 0.0
  %v25 = vsel %vm23, %v20, 0.0
  %v26 = vadd.f32 %v24, %v25
  %v27 = vrot.slane %v26, 4
  %v28 = vadd.f32 %v26, %v27
  %v29 = vrot.slane %v28, 2
  %v30 = vadd.f32 %v28, %v29
  %v31 = vrot.slane %v30, 1
  %v32 = vadd.f32 %v30, %v31
  %v33 = vsel %vm23, %v21, 0.0
  %v34 = vsel %vm23, %v22, 0.0
  %v35 = vadd.f32 %v33, %v34
  %v36 = vrot.slane %v35, 4
  %v37 = vadd.f32 %v35, %v36
  %v38 = vrot.slane %v37, 2
  %v39 = vadd.f32 %v37, %v38
  %v40 = vrot.slane %v39, 1
  %v41 = vadd.f32 %v39, %v40
  %v42 = vmul.f32 %v32, 0.0625
  %v43 = vmul.f32 %v41, 0.0625
  %v44 = vpack.c.bf16 %v42, %v42
  %v45 = vpack.c.bf16 %v43, %v43
  %v46 = vld [vmem:[%s1] sm:$0xf]
  %v47 = vld [vmem:[%s1 + $0x4] sm:$0xf]
  %v48 = vld [vmem:[%s1 + $0x8] sm:$0xf]
  %v49 = vld [vmem:[%s1 + $0xc] sm:$0xf]
  %v50 = vld [vmem:[%s1 + $0x10] sm:$0xf]
  %v51 = vld [vmem:[%s1 + $0x14] sm:$0xf]
  %v52 = vld [vmem:[%s1 + $0x18] sm:$0xf]
  %v53 = vld [vmem:[%s1 + $0x1c] sm:$0xf]
  %v54 = vld [vmem:[%s2] sm:$0x1]
  %v56 = vlaneseq
  %v57 = vshrl.u32 %v56, 7
  %v58 = vsub.s32 0, %v57
  %v59 = vrot.slane %v54, %v58
  %v63 = vunpack.c.l.b16 %v44
  %v64 = vunpack.c.l.b16 %v45
  %vm65 = vcmask 1041409
  %v66 = vsel %vm65, %v64, %v63
  %v67 = vpack.c.b16 %v66, %v66
  %v76 = vunpack.c.l.b16 %v46
  %v77 = vunpack.c.l.b16 %v47
  %v78 = vunpack.c.l.b16 %v48
  %v79 = vunpack.c.l.b16 %v49
  %v80 = vunpack.c.l.b16 %v50
  %v81 = vunpack.c.l.b16 %v51
  %v82 = vunpack.c.l.b16 %v52
  %v83 = vunpack.c.l.b16 %v53
  %v84 = vpack.c.b16 %v77, %v76
  %v85 = vpack.c.b16 %v79, %v78
  %v86 = vpack.c.b16 %v81, %v80
  %v87 = vpack.c.b16 %v83, %v82
  %v93 = vsel %vm23, %v67, 0
  %95 = vmatprep.subr.bf16.mxu0 0
  %96 = vmatpush1.bf16.msra.mxu0 0
  %97 = vmatprep.subr.bf16.mxu0 0
  %98 = vmatpush1.bf16.msra.mxu0 0
  %99 = vmatprep.subr.bf16.mxu0 0
  %100 = vmatpush1.bf16.msra.mxu0 0
  %101 = vmatprep.subr.bf16.mxu0 0
  %102 = vmatpush1.bf16.msra.mxu0 0
  %103 = vmatprep.subr.bf16.mxu0 0
  %104 = vmatpush1.bf16.msra.mxu0 %v87
  %105 = vmatprep.subr.bf16.mxu0 0
  %106 = vmatpush1.bf16.msra.mxu0 %v86
  %107 = vmatprep.subr.bf16.mxu0 0
  %108 = vmatpush1.bf16.msra.mxu0 %v85
  %109 = vmatprep.subr.bf16.mxu0 0
  %110 = vmatpush1.bf16.msra.mxu0 %v84
  %111 = vmatprep.subr.bf16.mxu0 0
  %112 = vmatpush2.bf16.msra.mxu0 0
  %113 = vmatprep.subr.bf16.mxu0 0
  %114 = vmatpush2.bf16.msra.mxu0 0
  %115 = vmatprep.subr.bf16.mxu0 0
  %116 = vmatpush2.bf16.msra.mxu0 0
  %117 = vmatprep.subr.bf16.mxu0 0
  %118 = vmatpush2.bf16.msra.mxu0 0
  %119 = vmatprep.subr.bf16.mxu0 0
  %120 = vmatpush2.bf16.msra.mxu0 0
  %121 = vmatprep.subr.bf16.mxu0 0
  %122 = vmatpush2.bf16.msra.mxu0 0
  %123 = vmatprep.subr.bf16.mxu0 0
  %124 = vmatpush2.bf16.msra.mxu0 0
  %125 = vmatprep.subr.bf16.mxu0 0
  %126 = vmatpush2.bf16.msra.mxu0 0
  %127 = vmatprep.mubr.bf16.mxu0 0
  %128 = vmatmul.mubr.bf16.gmra.mxu0 %v93
  %v129 = vpop.f32.mrf.mxu0
  %v130 = vadd.f32 %v59, %v129
  %v131 = vpop.f32.mrf.mxu0
  %v132 = vpop.f32.mrf.mxu0
  %v133 = vpop.f32.mrf.mxu0
  %134 = vdwg.mxu0
  %v135 = vmax.f32 %v130, 0.0
  %v136 = vpack.c.bf16 %v135, %v135
  %vm137 = vcmask 253952
  %138 = vst.msk [vmem:[%s3] sm:$0x1] %vm137, %v136
  // Predicated region
  $region14: #{deeplabv3_forward.17} parent=0 // pred_check
    _
  $region15: #{deeplabv3_forward.17} parent=0 // pred_check_branch
    %140 = sbr.rel (0) target = $region17
  $region16: #{deeplabv3_forward.17} parent=0 // pred_region
    _
  $region17: #{deeplabv3_forward.17} parent=0 // pred_fallthru
    _
  // Predicated region
  $region18: #{deeplabv3_forward.17} parent=0 // pred_check
    _
  $region19: #{deeplabv3_forward.17} parent=0 // pred_check_branch
    %142 = sbr.rel (0) target = $region21
  $region20: #{deeplabv3_forward.17} parent=0 // pred_region
    _
  $region21: #{deeplabv3_forward.17} parent=0 // pred_fallthru
    _

// kernel: deeplabv3_forward.14
$region0: #{deeplabv3_forward.14}
  #allocation0 [shape = 'u32[]', space=smem, size = 0x4, offset = 0x4, fixed_abs, tag = 'smem constant byte address 0x4 - core index']
  #allocation1 [shape = 'u32[144,128]{1,0:T(1,128)}', space=vmem, size = 0x12000, scoped, tag = 'internal scratch']
  %s0 = inlined_call_operand.vmem [shape: bf16[32,64], index: 0, kind: input, shape index: {}]
  %s1 = inlined_call_operand.vmem [shape: bf16[64,32], index: 1, kind: input, shape index: {}]
  %s2 = inlined_call_operand.vmem [shape: f32[1,32], index: 2, kind: input, shape index: {}]
  %s3 = inlined_call_operand.vmem [shape: bf16[32,32], index: 3, kind: output, shape index: {}]
  %s4 = sld [smem:[#allocation0]]
  $region22: #{deeplabv3_forward.14} parent=0
    _
  %s6 = ssub.s32 1, %s4
  %s7 = scalar_select 0, %s6, %s4
  // Predicated region
  $region2: #{deeplabv3_forward.14} parent=0 // pred_check
    _
  $region3: #{deeplabv3_forward.14} parent=0 // pred_check_branch
    %9 = sbr.rel (0) target = $region5
  $region4: #{deeplabv3_forward.14} parent=0 // pred_region
    _
  $region5: #{deeplabv3_forward.14} parent=0 // pred_fallthru
    _
  // Predicated region
  $region6: #{deeplabv3_forward.14} parent=0 // pred_check
    _
  $region7: #{deeplabv3_forward.14} parent=0 // pred_check_branch
    %11 = sbr.rel (0) target = $region9
  $region8: #{deeplabv3_forward.14} parent=0 // pred_region
    _
  $region9: #{deeplabv3_forward.14} parent=0 // pred_fallthru
    _
  // Predicated region
  $region10: #{deeplabv3_forward.14} parent=0 // pred_check
    _
  $region11: #{deeplabv3_forward.14} parent=0 // pred_check_branch
    %13 = sbr.rel (0) target = $region13
  $region12: #{deeplabv3_forward.14} parent=0 // pred_region
    _
  $region13: #{deeplabv3_forward.14} parent=0 // pred_fallthru
    _
  %v15 = vld [vmem:[%s0] sm:$0xf]
  %v16 = vld [vmem:[%s0 + $0x4] sm:$0xf]
  %v17 = vld [vmem:[%s0 + $0x8] sm:$0xf]
  %v18 = vld [vmem:[%s0 + $0xc] sm:$0xf]
  %v19 = vld [vmem:[%s1] sm:$0xf]
  %v20 = vld [vmem:[%s1 + $0x4] sm:$0xf]
  %v21 = vld [vmem:[%s1 + $0x8] sm:$0xf]
  %v22 = vld [vmem:[%s1 + $0xc] sm:$0xf]
  %v23 = vld [vmem:[%s1 + $0x10] sm:$0xf]
  %v24 = vld [vmem:[%s1 + $0x14] sm:$0xf]
  %v25 = vld [vmem:[%s1 + $0x18] sm:$0xf]
  %v26 = vld [vmem:[%s1 + $0x1c] sm:$0xf]
  %v27 = vld [vmem:[%s2] sm:$0x1]
  %v29 = vlaneseq
  %v30 = vshrl.u32 %v29, 7
  %v31 = vsub.s32 0, %v30
  %v32 = vrot.slane %v27, %v31
  %v38 = vunpack.c.l.b16 %v15
  %v39 = vunpack.c.l.b16 %v16
  %v40 = vunpack.c.l.b16 %v17
  %v41 = vunpack.c.l.b16 %v18
  %v42 = vpack.c.b16 %v39, %v38
  %v43 = vpack.c.b16 %v41, %v40
  %v52 = vunpack.c.l.b16 %v19
  %v53 = vunpack.c.l.b16 %v20
  %v54 = vunpack.c.l.b16 %v21
  %v55 = vunpack.c.l.b16 %v22
  %v56 = vunpack.c.l.b16 %v23
  %v57 = vunpack.c.l.b16 %v24
  %v58 = vunpack.c.l.b16 %v25
  %v59 = vunpack.c.l.b16 %v26
  %v60 = vpack.c.b16 %v53, %v52
  %v61 = vpack.c.b16 %v55, %v54
  %v62 = vpack.c.b16 %v57, %v56
  %v63 = vpack.c.b16 %v59, %v58
  %vm68 = vcmask 523264
  %v70 = vsel %vm68, %v42, 0
  %v73 = vsel %vm68, %v43, 0
  %75 = vmatprep.subr.bf16.mxu0 0
  %76 = vmatpush1.bf16.msra.mxu0 0
  %77 = vmatprep.subr.bf16.mxu0 0
  %78 = vmatpush1.bf16.msra.mxu0 0
  %79 = vmatprep.subr.bf16.mxu0 0
  %80 = vmatpush1.bf16.msra.mxu0 0
  %81 = vmatprep.subr.bf16.mxu0 0
  %82 = vmatpush1.bf16.msra.mxu0 0
  %83 = vmatprep.subr.bf16.mxu0 0
  %84 = vmatpush1.bf16.msra.mxu0 %v63
  %85 = vmatprep.subr.bf16.mxu0 0
  %86 = vmatpush1.bf16.msra.mxu0 %v62
  %87 = vmatprep.subr.bf16.mxu0 0
  %88 = vmatpush1.bf16.msra.mxu0 %v61
  %89 = vmatprep.subr.bf16.mxu0 0
  %90 = vmatpush1.bf16.msra.mxu0 %v60
  %91 = vmatprep.subr.bf16.mxu0 0
  %92 = vmatpush2.bf16.msra.mxu0 0
  %93 = vmatprep.subr.bf16.mxu0 0
  %94 = vmatpush2.bf16.msra.mxu0 0
  %95 = vmatprep.subr.bf16.mxu0 0
  %96 = vmatpush2.bf16.msra.mxu0 0
  %97 = vmatprep.subr.bf16.mxu0 0
  %98 = vmatpush2.bf16.msra.mxu0 0
  %99 = vmatprep.subr.bf16.mxu0 0
  %100 = vmatpush2.bf16.msra.mxu0 0
  %101 = vmatprep.subr.bf16.mxu0 0
  %102 = vmatpush2.bf16.msra.mxu0 0
  %103 = vmatprep.subr.bf16.mxu0 0
  %104 = vmatpush2.bf16.msra.mxu0 0
  %105 = vmatprep.subr.bf16.mxu0 0
  %106 = vmatpush2.bf16.msra.mxu0 0
  %107 = vmatprep.mubr.bf16.mxu0 0
  %108 = vmatmul.mubr.bf16.gmra.mxu0 %v70
  %v109 = vpop.f32.mrf.mxu0
  %v110 = vadd.f32 %v32, %v109
  %v111 = vpop.f32.mrf.mxu0
  %v112 = vpop.f32.mrf.mxu0
  %v113 = vadd.f32 %v32, %v112
  %v114 = vpop.f32.mrf.mxu0
  %115 = vmatprep.mubr.bf16.mxu0 0
  %116 = vmatmul.mubr.bf16.gmra.mxu0 %v73
  %v117 = vpop.f32.mrf.mxu0
  %v118 = vadd.f32 %v32, %v117
  %v119 = vpop.f32.mrf.mxu0
  %v120 = vpop.f32.mrf.mxu0
  %v121 = vadd.f32 %v32, %v120
  %v122 = vpop.f32.mrf.mxu0
  %123 = vdwg.mxu0
  %v124 = vmax.f32 %v110, 0.0
  %v125 = vmax.f32 %v113, 0.0
  %v126 = vmax.f32 %v118, 0.0
  %v127 = vmax.f32 %v121, 0.0
  %v128 = vpack.c.bf16 %v125, %v124
  %v129 = vpack.c.bf16 %v127, %v126
  %v132 = vunpack.c.l.b16 %v128
  %v133 = vunpack.c.h.b16 %v128
  %v134 = vunpack.c.l.b16 %v129
  %v135 = vunpack.c.h.b16 %v129
  %v136 = vpack.c.b16 %v132, %v132
  %v137 = vpack.c.b16 %v133, %v133
  %v138 = vpack.c.b16 %v134, %v134
  %v139 = vpack.c.b16 %v135, %v135
  %vm144 = vcmask 257024
  %145 = vst.msk [vmem:[%s3] sm:$0xf] %vm144, %v136
  %146 = vst.msk [vmem:[%s3 + $0x4] sm:$0xf] %vm144, %v137
  %147 = vst.msk [vmem:[%s3 + $0x8] sm:$0xf] %vm144, %v138
  %148 = vst.msk [vmem:[%s3 + $0xc] sm:$0xf] %vm144, %v139
  // Predicated region
  $region14: #{deeplabv3_forward.14} parent=0 // pred_check
    _
  $region15: #{deeplabv3_forward.14} parent=0 // pred_check_branch
    %150 = sbr.rel (0) target = $region17
  $region16: #{deeplabv3_forward.14} parent=0 // pred_region
    _
  $region17: #{deeplabv3_forward.14} parent=0 // pred_fallthru
    _
  // Predicated region
  $region18: #{deeplabv3_forward.14} parent=0 // pred_check
    _
  $region19: #{deeplabv3_forward.14} parent=0 // pred_check_branch
    %152 = sbr.rel (0) target = $region21
  $region20: #{deeplabv3_forward.14} parent=0 // pred_region
    _
  $region21: #{deeplabv3_forward.14} parent=0 // pred_fallthru
    _

// kernel: deeplabv3_forward.18
$region0: #{deeplabv3_forward.18}
  #allocation0 [shape = 'u32[]', space=smem, size = 0x4, offset = 0x4, fixed_abs, tag = 'smem constant byte address 0x4 - core index']
  #allocation1 [shape = 'u32[144,128]{1,0:T(1,128)}', space=vmem, size = 0x12000, scoped, tag = 'internal scratch']
  %s0 = inlined_call_operand.vmem [shape: bf16[32,128], index: 0, kind: input, shape index: {}]
  %s1 = inlined_call_operand.vmem [shape: bf16[128,32], index: 1, kind: input, shape index: {}]
  %s2 = inlined_call_operand.vmem [shape: f32[1,32], index: 2, kind: input, shape index: {}]
  %s3 = inlined_call_operand.vmem [shape: bf16[32,32], index: 3, kind: output, shape index: {}]
  %s4 = sld [smem:[#allocation0]]
  $region22: #{deeplabv3_forward.18} parent=0
    _
  %s6 = ssub.s32 1, %s4
  %s7 = scalar_select 0, %s6, %s4
  // Predicated region
  $region2: #{deeplabv3_forward.18} parent=0 // pred_check
    _
  $region3: #{deeplabv3_forward.18} parent=0 // pred_check_branch
    %9 = sbr.rel (0) target = $region5
  $region4: #{deeplabv3_forward.18} parent=0 // pred_region
    _
  $region5: #{deeplabv3_forward.18} parent=0 // pred_fallthru
    _
  // Predicated region
  $region6: #{deeplabv3_forward.18} parent=0 // pred_check
    _
  $region7: #{deeplabv3_forward.18} parent=0 // pred_check_branch
    %11 = sbr.rel (0) target = $region9
  $region8: #{deeplabv3_forward.18} parent=0 // pred_region
    _
  $region9: #{deeplabv3_forward.18} parent=0 // pred_fallthru
    _
  // Predicated region
  $region10: #{deeplabv3_forward.18} parent=0 // pred_check
    _
  $region11: #{deeplabv3_forward.18} parent=0 // pred_check_branch
    %13 = sbr.rel (0) target = $region13
  $region12: #{deeplabv3_forward.18} parent=0 // pred_region
    _
  $region13: #{deeplabv3_forward.18} parent=0 // pred_fallthru
    _
  %v15 = vld [vmem:[%s0] sm:$0xf]
  %v16 = vld [vmem:[%s0 + $0x4] sm:$0xf]
  %v17 = vld [vmem:[%s0 + $0x8] sm:$0xf]
  %v18 = vld [vmem:[%s0 + $0xc] sm:$0xf]
  %v19 = vld [vmem:[%s1] sm:$0xf]
  %v20 = vld [vmem:[%s1 + $0x4] sm:$0xf]
  %v21 = vld [vmem:[%s1 + $0x8] sm:$0xf]
  %v22 = vld [vmem:[%s1 + $0xc] sm:$0xf]
  %v23 = vld [vmem:[%s1 + $0x10] sm:$0xf]
  %v24 = vld [vmem:[%s1 + $0x14] sm:$0xf]
  %v25 = vld [vmem:[%s1 + $0x18] sm:$0xf]
  %v26 = vld [vmem:[%s1 + $0x1c] sm:$0xf]
  %v27 = vld [vmem:[%s1 + $0x20] sm:$0xf]
  %v28 = vld [vmem:[%s1 + $0x24] sm:$0xf]
  %v29 = vld [vmem:[%s1 + $0x28] sm:$0xf]
  %v30 = vld [vmem:[%s1 + $0x2c] sm:$0xf]
  %v31 = vld [vmem:[%s1 + $0x30] sm:$0xf]
  %v32 = vld [vmem:[%s1 + $0x34] sm:$0xf]
  %v33 = vld [vmem:[%s1 + $0x38] sm:$0xf]
  %v34 = vld [vmem:[%s1 + $0x3c] sm:$0xf]
  %v35 = vld [vmem:[%s2] sm:$0x1]
  %v37 = vlaneseq
  %v38 = vshrl.u32 %v37, 7
  %v39 = vsub.s32 0, %v38
  %v40 = vrot.slane %v35, %v39
  %v46 = vunpack.c.l.b16 %v15
  %v47 = vunpack.c.l.b16 %v16
  %v48 = vunpack.c.l.b16 %v17
  %v49 = vunpack.c.l.b16 %v18
  %v50 = vpack.c.b16 %v47, %v46
  %v51 = vpack.c.b16 %v49, %v48
  %v70 = vunpack.c.l.b16 %v19
  %v71 = vunpack.c.l.b16 %v20
  %v72 = vunpack.c.l.b16 %v21
  %v73 = vunpack.c.l.b16 %v22
  %v74 = vunpack.c.l.b16 %v23
  %v75 = vunpack.c.l.b16 %v24
  %v76 = vunpack.c.l.b16 %v25
  %v77 = vunpack.c.l.b16 %v26
  %v78 = vunpack.c.l.b16 %v27
  %v79 = vunpack.c.l.b16 %v28
  %v80 = vunpack.c.l.b16 %v29
  %v81 = vunpack.c.l.b16 %v30
  %v82 = vunpack.c.l.b16 %v31
  %v83 = vunpack.c.l.b16 %v32
  %v84 = vunpack.c.l.b16 %v33
  %v85 = vunpack.c.l.b16 %v34
  %v86 = vpack.c.b16 %v71, %v70
  %v87 = vpack.c.b16 %v73, %v72
  %v88 = vpack.c.b16 %v75, %v74
  %v89 = vpack.c.b16 %v77, %v76
  %v90 = vpack.c.b16 %v79, %v78
  %v91 = vpack.c.b16 %v81, %v80
  %v92 = vpack.c.b16 %v83, %v82
  %v93 = vpack.c.b16 %v85, %v84
  %102 = vmatprep.subr.bf16.mxu0 0
  %103 = vmatpush1.bf16.msra.mxu0 %v93
  %104 = vmatprep.subr.bf16.mxu0 0
  %105 = vmatpush1.bf16.msra.mxu0 %v92
  %106 = vmatprep.subr.bf16.mxu0 0
  %107 = vmatpush1.bf16.msra.mxu0 %v91
  %108 = vmatprep.subr.bf16.mxu0 0
  %109 = vmatpush1.bf16.msra.mxu0 %v90
  %110 = vmatprep.subr.bf16.mxu0 0
  %111 = vmatpush1.bf16.msra.mxu0 %v89
  %112 = vmatprep.subr.bf16.mxu0 0
  %113 = vmatpush1.bf16.msra.mxu0 %v88
  %114 = vmatprep.subr.bf16.mxu0 0
  %115 = vmatpush1.bf16.msra.mxu0 %v87
  %116 = vmatprep.subr.bf16.mxu0 0
  %117 = vmatpush1.bf16.msra.mxu0 %v86
  %118 = vmatprep.subr.bf16.mxu0 0
  %119 = vmatpush2.bf16.msra.mxu0 0
  %120 = vmatprep.subr.bf16.mxu0 0
  %121 = vmatpush2.bf16.msra.mxu0 0
  %122 = vmatprep.subr.bf16.mxu0 0
  %123 = vmatpush2.bf16.msra.mxu0 0
  %124 = vmatprep.subr.bf16.mxu0 0
  %125 = vmatpush2.bf16.msra.mxu0 0
  %126 = vmatprep.subr.bf16.mxu0 0
  %127 = vmatpush2.bf16.msra.mxu0 0
  %128 = vmatprep.subr.bf16.mxu0 0
  %129 = vmatpush2.bf16.msra.mxu0 0
  %130 = vmatprep.subr.bf16.mxu0 0
  %131 = vmatpush2.bf16.msra.mxu0 0
  %132 = vmatprep.subr.bf16.mxu0 0
  %133 = vmatpush2.bf16.msra.mxu0 0
  %134 = vmatprep.mubr.bf16.mxu0 0
  %135 = vmatmul.mubr.bf16.gmra.mxu0 %v50
  %v136 = vpop.f32.mrf.mxu0
  %v137 = vadd.f32 %v40, %v136
  %v138 = vpop.f32.mrf.mxu0
  %v139 = vpop.f32.mrf.mxu0
  %v140 = vadd.f32 %v40, %v139
  %v141 = vpop.f32.mrf.mxu0
  %142 = vmatprep.mubr.bf16.mxu0 0
  %143 = vmatmul.mubr.bf16.gmra.mxu0 %v51
  %v144 = vpop.f32.mrf.mxu0
  %v145 = vadd.f32 %v40, %v144
  %v146 = vpop.f32.mrf.mxu0
  %v147 = vpop.f32.mrf.mxu0
  %v148 = vadd.f32 %v40, %v147
  %v149 = vpop.f32.mrf.mxu0
  %150 = vdwg.mxu0
  %v151 = vmax.f32 %v137, 0.0
  %v152 = vmax.f32 %v140, 0.0
  %v153 = vmax.f32 %v145, 0.0
  %v154 = vmax.f32 %v148, 0.0
  %v155 = vpack.c.bf16 %v152, %v151
  %v156 = vpack.c.bf16 %v154, %v153
  %v159 = vunpack.c.l.b16 %v155
  %v160 = vunpack.c.h.b16 %v155
  %v161 = vunpack.c.l.b16 %v156
  %v162 = vunpack.c.h.b16 %v156
  %v163 = vpack.c.b16 %v159, %v159
  %v164 = vpack.c.b16 %v160, %v160
  %v165 = vpack.c.b16 %v161, %v161
  %v166 = vpack.c.b16 %v162, %v162
  %vm171 = vcmask 257024
  %172 = vst.msk [vmem:[%s3] sm:$0xf] %vm171, %v163
  %173 = vst.msk [vmem:[%s3 + $0x4] sm:$0xf] %vm171, %v164
  %174 = vst.msk [vmem:[%s3 + $0x8] sm:$0xf] %vm171, %v165
  %175 = vst.msk [vmem:[%s3 + $0xc] sm:$0xf] %vm171, %v166
  // Predicated region
  $region14: #{deeplabv3_forward.18} parent=0 // pred_check
    _
  $region15: #{deeplabv3_forward.18} parent=0 // pred_check_branch
    %177 = sbr.rel (0) target = $region17
  $region16: #{deeplabv3_forward.18} parent=0 // pred_region
    _
  $region17: #{deeplabv3_forward.18} parent=0 // pred_fallthru
    _
  // Predicated region
  $region18: #{deeplabv3_forward.18} parent=0 // pred_check
    _
  $region19: #{deeplabv3_forward.18} parent=0 // pred_check_branch
    %179 = sbr.rel (0) target = $region21
  $region20: #{deeplabv3_forward.18} parent=0 // pred_region
    _
  $region21: #{deeplabv3_forward.18} parent=0 // pred_fallthru
    _

// kernel: deeplabv3_forward.16
$region0: #{deeplabv3_forward.16}
  #allocation0 [shape = 'u32[]', space=smem, size = 0x4, offset = 0x4, fixed_abs, tag = 'smem constant byte address 0x4 - core index']
  #allocation1 [shape = 'u32[144,128]{1,0:T(1,128)}', space=vmem, size = 0x12000, scoped, tag = 'internal scratch']
  %s0 = inlined_call_operand.vmem [shape: bf16[32,576], index: 0, kind: input, shape index: {}]
  %s1 = inlined_call_operand.vmem [shape: bf16[576,32], index: 1, kind: input, shape index: {}]
  %s2 = inlined_call_operand.vmem [shape: f32[1,32], index: 2, kind: input, shape index: {}]
  %s3 = inlined_call_operand.vmem [shape: bf16[32,32], index: 3, kind: output, shape index: {}]
  %s4 = sld [smem:[#allocation0]]
  $region22: #{deeplabv3_forward.16} parent=0
    _
  %s6 = ssub.s32 1, %s4
  %s7 = scalar_select 0, %s6, %s4
  // Predicated region
  $region2: #{deeplabv3_forward.16} parent=0 // pred_check
    _
  $region3: #{deeplabv3_forward.16} parent=0 // pred_check_branch
    %9 = sbr.rel (0) target = $region5
  $region4: #{deeplabv3_forward.16} parent=0 // pred_region
    _
  $region5: #{deeplabv3_forward.16} parent=0 // pred_fallthru
    _
  // Predicated region
  $region6: #{deeplabv3_forward.16} parent=0 // pred_check
    _
  $region7: #{deeplabv3_forward.16} parent=0 // pred_check_branch
    %11 = sbr.rel (0) target = $region9
  $region8: #{deeplabv3_forward.16} parent=0 // pred_region
    _
  $region9: #{deeplabv3_forward.16} parent=0 // pred_fallthru
    _
  // Predicated region
  $region10: #{deeplabv3_forward.16} parent=0 // pred_check
    _
  $region11: #{deeplabv3_forward.16} parent=0 // pred_check_branch
    %13 = sbr.rel (0) target = $region13
  $region12: #{deeplabv3_forward.16} parent=0 // pred_region
    _
  $region13: #{deeplabv3_forward.16} parent=0 // pred_fallthru
    _
  %v15 = vld [vmem:[%s0] sm:$0xff]
  %v16 = vld [vmem:[%s0 + $0x8] sm:$0xff]
  %v17 = vld [vmem:[%s0 + $0x10] sm:$0xf]
  %v18 = vld [vmem:[%s0 + $0x14] sm:$0xff]
  %v19 = vld [vmem:[%s0 + $0x1c] sm:$0xff]
  %v20 = vld [vmem:[%s0 + $0x24] sm:$0xf]
  %v21 = vld [vmem:[%s0 + $0x28] sm:$0xff]
  %v22 = vld [vmem:[%s0 + $0x30] sm:$0xff]
  %v23 = vld [vmem:[%s0 + $0x38] sm:$0xf]
  %v24 = vld [vmem:[%s0 + $0x3c] sm:$0xff]
  %v25 = vld [vmem:[%s0 + $0x44] sm:$0xff]
  %v26 = vld [vmem:[%s0 + $0x4c] sm:$0xf]
  %v27 = vld [vmem:[%s1] sm:$0xf]
  %v28 = vld [vmem:[%s1 + $0x4] sm:$0xf]
  %v29 = vld [vmem:[%s1 + $0x8] sm:$0xf]
  %v30 = vld [vmem:[%s1 + $0xc] sm:$0xf]
  %v31 = vld [vmem:[%s1 + $0x10] sm:$0xf]
  %v32 = vld [vmem:[%s1 + $0x14] sm:$0xf]
  %v33 = vld [vmem:[%s1 + $0x18] sm:$0xf]
  %v34 = vld [vmem:[%s1 + $0x1c] sm:$0xf]
  %v35 = vld [vmem:[%s1 + $0x20] sm:$0xf]
  %v36 = vld [vmem:[%s1 + $0x24] sm:$0xf]
  %v37 = vld [vmem:[%s1 + $0x28] sm:$0xf]
  %v38 = vld [vmem:[%s1 + $0x2c] sm:$0xf]
  %v39 = vld [vmem:[%s1 + $0x30] sm:$0xf]
  %v40 = vld [vmem:[%s1 + $0x34] sm:$0xf]
  %v41 = vld [vmem:[%s1 + $0x38] sm:$0xf]
  %v42 = vld [vmem:[%s1 + $0x3c] sm:$0xf]
  %v43 = vld [vmem:[%s1 + $0x40] sm:$0xf]
  %v44 = vld [vmem:[%s1 + $0x44] sm:$0xf]
  %v45 = vld [vmem:[%s1 + $0x48] sm:$0xf]
  %v46 = vld [vmem:[%s1 + $0x4c] sm:$0xf]
  %v47 = vld [vmem:[%s1 + $0x50] sm:$0xf]
  %v48 = vld [vmem:[%s1 + $0x54] sm:$0xf]
  %v49 = vld [vmem:[%s1 + $0x58] sm:$0xf]
  %v50 = vld [vmem:[%s1 + $0x5c] sm:$0xf]
  %v51 = vld [vmem:[%s1 + $0x60] sm:$0xf]
  %v52 = vld [vmem:[%s1 + $0x64] sm:$0xf]
  %v53 = vld [vmem:[%s1 + $0x68] sm:$0xf]
  %v54 = vld [vmem:[%s1 + $0x6c] sm:$0xf]
  %v55 = vld [vmem:[%s1 + $0x70] sm:$0xf]
  %v56 = vld [vmem:[%s1 + $0x74] sm:$0xf]
  %v57 = vld [vmem:[%s1 + $0x78] sm:$0xf]
  %v58 = vld [vmem:[%s1 + $0x7c] sm:$0xf]
  %v59 = vld [vmem:[%s1 + $0x80] sm:$0xf]
  %v60 = vld [vmem:[%s1 + $0x84] sm:$0xf]
  %v61 = vld [vmem:[%s1 + $0x88] sm:$0xf]
  %v62 = vld [vmem:[%s1 + $0x8c] sm:$0xf]
  %v63 = vld [vmem:[%s1 + $0x90] sm:$0xf]
  %v64 = vld [vmem:[%s1 + $0x94] sm:$0xf]
  %v65 = vld [vmem:[%s1 + $0x98] sm:$0xf]
  %v66 = vld [vmem:[%s1 + $0x9c] sm:$0xf]
  %v67 = vld [vmem:[%s1 + $0xa0] sm:$0xf]
  %v68 = vld [vmem:[%s1 + $0xa4] sm:$0xf]
  %v69 = vld [vmem:[%s1 + $0xa8] sm:$0xf]
  %v70 = vld [vmem:[%s1 + $0xac] sm:$0xf]
  %v71 = vld [vmem:[%s1 + $0xb0] sm:$0xf]
  %v72 = vld [vmem:[%s1 + $0xb4] sm:$0xf]
  %v73 = vld [vmem:[%s1 + $0xb8] sm:$0xf]
  %v74 = vld [vmem:[%s1 + $0xbc] sm:$0xf]
  %v75 = vld [vmem:[%s1 + $0xc0] sm:$0xf]
  %v76 = vld [vmem:[%s1 + $0xc4] sm:$0xf]
  %v77 = vld [vmem:[%s1 + $0xc8] sm:$0xf]
  %v78 = vld [vmem:[%s1 + $0xcc] sm:$0xf]
  %v79 = vld [vmem:[%s1 + $0xd0] sm:$0xf]
  %v80 = vld [vmem:[%s1 + $0xd4] sm:$0xf]
  %v81 = vld [vmem:[%s1 + $0xd8] sm:$0xf]
  %v82 = vld [vmem:[%s1 + $0xdc] sm:$0xf]
  %v83 = vld [vmem:[%s1 + $0xe0] sm:$0xf]
  %v84 = vld [vmem:[%s1 + $0xe4] sm:$0xf]
  %v85 = vld [vmem:[%s1 + $0xe8] sm:$0xf]
  %v86 = vld [vmem:[%s1 + $0xec] sm:$0xf]
  %v87 = vld [vmem:[%s1 + $0xf0] sm:$0xf]
  %v88 = vld [vmem:[%s1 + $0xf4] sm:$0xf]
  %v89 = vld [vmem:[%s1 + $0xf8] sm:$0xf]
  %v90 = vld [vmem:[%s1 + $0xfc] sm:$0xf]
  %v91 = vld [vmem:[%s1 + $0x100] sm:$0xf]
  %v92 = vld [vmem:[%s1 + $0x104] sm:$0xf]
  %v93 = vld [vmem:[%s1 + $0x108] sm:$0xf]
  %v94 = vld [vmem:[%s1 + $0x10c] sm:$0xf]
  %v95 = vld [vmem:[%s1 + $0x110] sm:$0xf]
  %v96 = vld [vmem:[%s1 + $0x114] sm:$0xf]
  %v97 = vld [vmem:[%s1 + $0x118] sm:$0xf]
  %v98 = vld [vmem:[%s1 + $0x11c] sm:$0xf]
  %v99 = vld [vmem:[%s2] sm:$0x1]
  %v101 = vlaneseq
  %v102 = vshrl.u32 %v101, 7
  %v103 = vsub.s32 0, %v102
  %v104 = vrot.slane %v99, %v103
  %v118 = vunpack.c.l.b16 %v15
  %v119 = vunpack.c.h.b16 %v15
  %v120 = vunpack.c.l.b16 %v16
  %v121 = vunpack.c.h.b16 %v16
  %v122 = vunpack.c.l.b16 %v17
  %v123 = vunpack.c.l.b16 %v18
  %v124 = vunpack.c.h.b16 %v18
  %v125 = vunpack.c.l.b16 %v19
  %v126 = vunpack.c.h.b16 %v19
  %v127 = vunpack.c.l.b16 %v20
  %v128 = vunpack.c.l.b16 %v21
  %v129 = vunpack.c.h.b16 %v21
  %v130 = vunpack.c.l.b16 %v22
  %v131 = vunpack.c.h.b16 %v22
  %v132 = vunpack.c.l.b16 %v23
  %v133 = vunpack.c.l.b16 %v24
  %v134 = vunpack.c.h.b16 %v24
  %v135 = vunpack.c.l.b16 %v25
  %v136 = vunpack.c.h.b16 %v25
  %v137 = vunpack.c.l.b16 %v26
  %v138 = vpack.c.b16 %v123, %v118
  %v139 = vpack.c.b16 %v124, %v119
  %v140 = vpack.c.b16 %v125, %v120
  %v141 = vpack.c.b16 %v126, %v121
  %v142 = vpack.c.b16 %v127, %v122
  %v143 = vpack.c.b16 %v133, %v128
  %v144 = vpack.c.b16 %v134, %v129
  %v145 = vpack.c.b16 %v135, %v130
  %v146 = vpack.c.b16 %v136, %v131
  %v147 = vpack.c.b16 %v137, %v132
  %v228 = vunpack.c.l.b16 %v27
  %v229 = vunpack.c.l.b16 %v28
  %v230 = vunpack.c.l.b16 %v29
  %v231 = vunpack.c.l.b16 %v30
  %v232 = vunpack.c.l.b16 %v31
  %v233 = vunpack.c.l.b16 %v32
  %v234 = vunpack.c.l.b16 %v33
  %v235 = vunpack.c.l.b16 %v34
  %v236 = vunpack.c.l.b16 %v35
  %v237 = vunpack.c.l.b16 %v36
  %v238 = vunpack.c.l.b16 %v37
  %v239 = vunpack.c.l.b16 %v38
  %v240 = vunpack.c.l.b16 %v39
  %v241 = vunpack.c.l.b16 %v40
  %v242 = vunpack.c.l.b16 %v41
  %v243 = vunpack.c.l.b16 %v42
  %v244 = vunpack.c.l.b16 %v43
  %v245 = vunpack.c.l.b16 %v44
  %v246 = vunpack.c.l.b16 %v45
  %v247 = vunpack.c.l.b16 %v46
  %v248 = vunpack.c.l.b16 %v47
  %v249 = vunpack.c.l.b16 %v48
  %v250 = vunpack.c.l.b16 %v49
  %v251 = vunpack.c.l.b16 %v50
  %v252 = vunpack.c.l.b16 %v51
  %v253 = vunpack.c.l.b16 %v52
  %v254 = vunpack.c.l.b16 %v53
  %v255 = vunpack.c.l.b16 %v54
  %v256 = vunpack.c.l.b16 %v55
  %v257 = vunpack.c.l.b16 %v56
  %v258 = vunpack.c.l.b16 %v57
  %v259 = vunpack.c.l.b16 %v58
  %v260 = vunpack.c.l.b16 %v59
  %v261 = vunpack.c.l.b16 %v60
  %v262 = vunpack.c.l.b16 %v61
  %v263 = vunpack.c.l.b16 %v62
  %v264 = vunpack.c.l.b16 %v63
  %v265 = vunpack.c.l.b16 %v64
  %v266 = vunpack.c.l.b16 %v65
  %v267 = vunpack.c.l.b16 %v66
  %v268 = vunpack.c.l.b16 %v67
  %v269 = vunpack.c.l.b16 %v68
  %v270 = vunpack.c.l.b16 %v69
  %v271 = vunpack.c.l.b16 %v70
  %v272 = vunpack.c.l.b16 %v71
  %v273 = vunpack.c.l.b16 %v72
  %v274 = vunpack.c.l.b16 %v73
  %v275 = vunpack.c.l.b16 %v74
  %v276 = vunpack.c.l.b16 %v75
  %v277 = vunpack.c.l.b16 %v76
  %v278 = vunpack.c.l.b16 %v77
  %v279 = vunpack.c.l.b16 %v78
  %v280 = vunpack.c.l.b16 %v79
  %v281 = vunpack.c.l.b16 %v80
  %v282 = vunpack.c.l.b16 %v81
  %v283 = vunpack.c.l.b16 %v82
  %v284 = vunpack.c.l.b16 %v83
  %v285 = vunpack.c.l.b16 %v84
  %v286 = vunpack.c.l.b16 %v85
  %v287 = vunpack.c.l.b16 %v86
  %v288 = vunpack.c.l.b16 %v87
  %v289 = vunpack.c.l.b16 %v88
  %v290 = vunpack.c.l.b16 %v89
  %v291 = vunpack.c.l.b16 %v90
  %v292 = vunpack.c.l.b16 %v91
  %v293 = vunpack.c.l.b16 %v92
  %v294 = vunpack.c.l.b16 %v93
  %v295 = vunpack.c.l.b16 %v94
  %v296 = vunpack.c.l.b16 %v95
  %v297 = vunpack.c.l.b16 %v96
  %v298 = vunpack.c.l.b16 %v97
  %v299 = vunpack.c.l.b16 %v98
  %v300 = vpack.c.b16 %v229, %v228
  %v301 = vpack.c.b16 %v231, %v230
  %v302 = vpack.c.b16 %v233, %v232
  %v303 = vpack.c.b16 %v235, %v234
  %v304 = vpack.c.b16 %v237, %v236
  %v305 = vpack.c.b16 %v239, %v238
  %v306 = vpack.c.b16 %v241, %v240
  %v307 = vpack.c.b16 %v243, %v242
  %v308 = vpack.c.b16 %v245, %v244
  %v309 = vpack.c.b16 %v247, %v246
  %v310 = vpack.c.b16 %v249, %v248
  %v311 = vpack.c.b16 %v251, %v250
  %v312 = vpack.c.b16 %v253, %v252
  %v313 = vpack.c.b16 %v255, %v254
  %v314 = vpack.c.b16 %v257, %v256
  %v315 = vpack.c.b16 %v259, %v258
  %v316 = vpack.c.b16 %v261, %v260
  %v317 = vpack.c.b16 %v263, %v262
  %v318 = vpack.c.b16 %v265, %v264
  %v319 = vpack.c.b16 %v267, %v266
  %v320 = vpack.c.b16 %v269, %v268
  %v321 = vpack.c.b16 %v271, %v270
  %v322 = vpack.c.b16 %v273, %v272
  %v323 = vpack.c.b16 %v275, %v274
  %v324 = vpack.c.b16 %v277, %v276
  %v325 = vpack.c.b16 %v279, %v278
  %v326 = vpack.c.b16 %v281, %v280
  %v327 = vpack.c.b16 %v283, %v282
  %v328 = vpack.c.b16 %v285, %v284
  %v329 = vpack.c.b16 %v287, %v286
  %v330 = vpack.c.b16 %v289, %v288
  %v331 = vpack.c.b16 %v291, %v290
  %v332 = vpack.c.b16 %v293, %v292
  %v333 = vpack.c.b16 %v295, %v294
  %v334 = vpack.c.b16 %v297, %v296
  %v335 = vpack.c.b16 %v299, %v298
  %vm372 = vcmask 523264
  %v374 = vsel %vm372, %v142, 0
  %v377 = vsel %vm372, %v147, 0
  %379 = vmatprep.subr.bf16.mxu0 0
  %380 = vmatpush1.bf16.msra.mxu0 %v307
  %381 = vmatprep.subr.bf16.mxu0 0
  %382 = vmatpush1.bf16.msra.mxu0 %v306
  %383 = vmatprep.subr.bf16.mxu0 0
  %384 = vmatpush1.bf16.msra.mxu0 %v305
  %385 = vmatprep.subr.bf16.mxu0 0
  %386 = vmatpush1.bf16.msra.mxu0 %v304
  %387 = vmatprep.subr.bf16.mxu0 0
  %388 = vmatpush1.bf16.msra.mxu0 %v303
  %389 = vmatprep.subr.bf16.mxu0 0
  %390 = vmatpush1.bf16.msra.mxu0 %v302
  %391 = vmatprep.subr.bf16.mxu0 0
  %392 = vmatpush1.bf16.msra.mxu0 %v301
  %393 = vmatprep.subr.bf16.mxu0 0
  %394 = vmatpush1.bf16.msra.mxu0 %v300
  %395 = vmatprep.subr.bf16.mxu0 0
  %396 = vmatpush2.bf16.msra.mxu0 %v315
  %397 = vmatprep.subr.bf16.mxu0 0
  %398 = vmatpush2.bf16.msra.mxu0 %v314
  %399 = vmatprep.subr.bf16.mxu0 0
  %400 = vmatpush2.bf16.msra.mxu0 %v313
  %401 = vmatprep.subr.bf16.mxu0 0
  %402 = vmatpush2.bf16.msra.mxu0 %v312
  %403 = vmatprep.subr.bf16.mxu0 0
  %404 = vmatpush2.bf16.msra.mxu0 %v311
  %405 = vmatprep.subr.bf16.mxu0 0
  %406 = vmatpush2.bf16.msra.mxu0 %v310
  %407 = vmatprep.subr.bf16.mxu0 0
  %408 = vmatpush2.bf16.msra.mxu0 %v309
  %409 = vmatprep.subr.bf16.mxu0 0
  %410 = vmatpush2.bf16.msra.mxu0 %v308
  %411 = vmatprep.mubr.bf16.mxu0 %v139
  %412 = vmatmul.mubr.bf16.gmra.mxu0 %v138
  %v413 = vpop.f32.mrf.mxu0
  %v414 = vadd.f32 %v104, %v413
  %v415 = vpop.f32.mrf.mxu0
  %v416 = vpop.f32.mrf.mxu0
  %v417 = vadd.f32 %v104, %v416
  %v418 = vpop.f32.mrf.mxu0
  %419 = vmatprep.mubr.bf16.mxu0 %v144
  %420 = vmatmul.mubr.bf16.gmra.mxu0 %v143
  %v421 = vpop.f32.mrf.mxu0
  %v422 = vadd.f32 %v104, %v421
  %v423 = vpop.f32.mrf.mxu0
  %v424 = vpop.f32.mrf.mxu0
  %v425 = vadd.f32 %v104, %v424
  %v426 = vpop.f32.mrf.mxu0
  %427 = vdwg.mxu0
  %428 = vmatprep.subr.bf16.mxu0 0
  %429 = vmatpush1.bf16.msra.mxu0 %v323
  %430 = vmatprep.subr.bf16.mxu0 0
  %431 = vmatpush1.bf16.msra.mxu0 %v322
  %432 = vmatprep.subr.bf16.mxu0 0
  %433 = vmatpush1.bf16.msra.mxu0 %v321
  %434 = vmatprep.subr.bf16.mxu0 0
  %435 = vmatpush1.bf16.msra.mxu0 %v320
  %436 = vmatprep.subr.bf16.mxu0 0
  %437 = vmatpush1.bf16.msra.mxu0 %v319
  %438 = vmatprep.subr.bf16.mxu0 0
  %439 = vmatpush1.bf16.msra.mxu0 %v318
  %440 = vmatprep.subr.bf16.mxu0 0
  %441 = vmatpush1.bf16.msra.mxu0 %v317
  %442 = vmatprep.subr.bf16.mxu0 0
  %443 = vmatpush1.bf16.msra.mxu0 %v316
  %444 = vmatprep.subr.bf16.mxu0 0
  %445 = vmatpush2.bf16.msra.mxu0 %v331
  %446 = vmatprep.subr.bf16.mxu0 0
  %447 = vmatpush2.bf16.msra.mxu0 %v330
  %448 = vmatprep.subr.bf16.mxu0 0
  %449 = vmatpush2.bf16.msra.mxu0 %v329
  %450 = vmatprep.subr.bf16.mxu0 0
  %451 = vmatpush2.bf16.msra.mxu0 %v328
  %452 = vmatprep.subr.bf16.mxu0 0
  %453 = vmatpush2.bf16.msra.mxu0 %v327
  %454 = vmatprep.subr.bf16.mxu0 0
  %455 = vmatpush2.bf16.msra.mxu0 %v326
  %456 = vmatprep.subr.bf16.mxu0 0
  %457 = vmatpush2.bf16.msra.mxu0 %v325
  %458 = vmatprep.subr.bf16.mxu0 0
  %459 = vmatpush2.bf16.msra.mxu0 %v324
  %460 = vmatprep.mubr.bf16.mxu0 %v141
  %461 = vmatmul.mubr.bf16.gmra.mxu0 %v140
  %v462 = vpop.f32.mrf.mxu0
  %v463 = vadd.f32 %v414, %v462
  %v464 = vpop.f32.mrf.mxu0
  %v465 = vpop.f32.mrf.mxu0
  %v466 = vadd.f32 %v417, %v465
  %v467 = vpop.f32.mrf.mxu0
  %468 = vmatprep.mubr.bf16.mxu0 %v146
  %469 = vmatmul.mubr.bf16.gmra.mxu0 %v145
  %v470 = vpop.f32.mrf.mxu0
  %v471 = vadd.f32 %v422, %v470
  %v472 = vpop.f32.mrf.mxu0
  %v473 = vpop.f32.mrf.mxu0
  %v474 = vadd.f32 %v425, %v473
  %v475 = vpop.f32.mrf.mxu0
  %476 = vdwg.mxu0
  %477 = vmatprep.subr.bf16.mxu0 0
  %478 = vmatpush1.bf16.msra.mxu0 0
  %479 = vmatprep.subr.bf16.mxu0 0
  %480 = vmatpush1.bf16.msra.mxu0 0
  %481 = vmatprep.subr.bf16.mxu0 0
  %482 = vmatpush1.bf16.msra.mxu0 0
  %483 = vmatprep.subr.bf16.mxu0 0
  %484 = vmatpush1.bf16.msra.mxu0 0
  %485 = vmatprep.subr.bf16.mxu0 0
  %486 = vmatpush1.bf16.msra.mxu0 %v335
  %487 = vmatprep.subr.bf16.mxu0 0
  %488 = vmatpush1.bf16.msra.mxu0 %v334
  %489 = vmatprep.subr.bf16.mxu0 0
  %490 = vmatpush1.bf16.msra.mxu0 %v333
  %491 = vmatprep.subr.bf16.mxu0 0
  %492 = vmatpush1.bf16.msra.mxu0 %v332
  %493 = vmatprep.subr.bf16.mxu0 0
  %494 = vmatpush2.bf16.msra.mxu0 0
  %495 = vmatprep.subr.bf16.mxu0 0
  %496 = vmatpush2.bf16.msra.mxu0 0
  %497 = vmatprep.subr.bf16.mxu0 0
  %498 = vmatpush2.bf16.msra.mxu0 0
  %499 = vmatprep.subr.bf16.mxu0 0
  %500 = vmatpush2.bf16.msra.mxu0 0
  %501 = vmatprep.subr.bf16.mxu0 0
  %502 = vmatpush2.bf16.msra.mxu0 0
  %503 = vmatprep.subr.bf16.mxu0 0
  %504 = vmatpush2.bf16.msra.mxu0 0
  %505 = vmatprep.subr.bf16.mxu0 0
  %506 = vmatpush2.bf16.msra.mxu0 0
  %507 = vmatprep.subr.bf16.mxu0 0
  %508 = vmatpush2.bf16.msra.mxu0 0
  %509 = vmatprep.mubr.bf16.mxu0 0
  %510 = vmatmul.mubr.bf16.gmra.mxu0 %v374
  %v511 = vpop.f32.mrf.mxu0
  %v512 = vadd.f32 %v463, %v511
  %v513 = vpop.f32.mrf.mxu0
  %v514 = vpop.f32.mrf.mxu0
  %v515 = vadd.f32 %v466, %v514
  %v516 = vpop.f32.mrf.mxu0
  %517 = vmatprep.mubr.bf16.mxu0 0
  %518 = vmatmul.mubr.bf16.gmra.mxu0 %v377
  %v519 = vpop.f32.mrf.mxu0
  %v520 = vadd.f32 %v471, %v519
  %v521 = vpop.f32.mrf.mxu0
  %v522 = vpop.f32.mrf.mxu0
  %v523 = vadd.f32 %v474, %v522
  %v524 = vpop.f32.mrf.mxu0
  %525 = vdwg.mxu0
  %v526 = vmax.f32 %v512, 0.0
  %v527 = vmax.f32 %v515, 0.0
  %v528 = vmax.f32 %v520, 0.0
  %v529 = vmax.f32 %v523, 0.0
  %v530 = vpack.c.bf16 %v527, %v526
  %v531 = vpack.c.bf16 %v529, %v528
  %v534 = vunpack.c.l.b16 %v530
  %v535 = vunpack.c.h.b16 %v530
  %v536 = vunpack.c.l.b16 %v531
  %v537 = vunpack.c.h.b16 %v531
  %v538 = vpack.c.b16 %v534, %v534
  %v539 = vpack.c.b16 %v535, %v535
  %v540 = vpack.c.b16 %v536, %v536
  %v541 = vpack.c.b16 %v537, %v537
  %vm546 = vcmask 257024
  %547 = vst.msk [vmem:[%s3] sm:$0xf] %vm546, %v538
  %548 = vst.msk [vmem:[%s3 + $0x4] sm:$0xf] %vm546, %v539
  %549 = vst.msk [vmem:[%s3 + $0x8] sm:$0xf] %vm546, %v540
  %550 = vst.msk [vmem:[%s3 + $0xc] sm:$0xf] %vm546, %v541
  // Predicated region
  $region14: #{deeplabv3_forward.16} parent=0 // pred_check
    _
  $region15: #{deeplabv3_forward.16} parent=0 // pred_check_branch
    %552 = sbr.rel (0) target = $region17
  $region16: #{deeplabv3_forward.16} parent=0 // pred_region
    _
  $region17: #{deeplabv3_forward.16} parent=0 // pred_fallthru
    _
  // Predicated region
  $region18: #{deeplabv3_forward.16} parent=0 // pred_check
    _
  $region19: #{deeplabv3_forward.16} parent=0 // pred_check_branch
    %554 = sbr.rel (0) target = $region21
  $region20: #{deeplabv3_forward.16} parent=0 // pred_region
    _
  $region21: #{deeplabv3_forward.16} parent=0 // pred_fallthru
    _

// kernel: deeplabv3_forward.19
$region0: #{deeplabv3_forward.19}
  #allocation0 [shape = 'u32[]', space=smem, size = 0x4, offset = 0x4, fixed_abs, tag = 'smem constant byte address 0x4 - core index']
  #allocation1 [shape = 'u32[144,128]{1,0:T(1,128)}', space=vmem, size = 0x12000, scoped, tag = 'internal scratch']
  %s0 = inlined_call_operand.vmem [shape: bf16[32,288], index: 0, kind: input, shape index: {}]
  %s1 = inlined_call_operand.vmem [shape: bf16[288,32], index: 1, kind: input, shape index: {}]
  %s2 = inlined_call_operand.vmem [shape: f32[1,32], index: 2, kind: input, shape index: {}]
  %s3 = inlined_call_operand.vmem [shape: bf16[32,5], index: 3, kind: input, shape index: {}]
  %s4 = inlined_call_operand.vmem [shape: f32[1,5], index: 4, kind: input, shape index: {}]
  %s5 = inlined_call_operand.vmem [shape: f32[32,5], index: 5, kind: output, shape index: {}]
  %s6 = sld [smem:[#allocation0]]
  $region30: #{deeplabv3_forward.19} parent=0
    _
  %s8 = ssub.s32 1, %s6
  %s9 = scalar_select 0, %s8, %s6
  // Predicated region
  $region2: #{deeplabv3_forward.19} parent=0 // pred_check
    _
  $region3: #{deeplabv3_forward.19} parent=0 // pred_check_branch
    %11 = sbr.rel (0) target = $region5
  $region4: #{deeplabv3_forward.19} parent=0 // pred_region
    _
  $region5: #{deeplabv3_forward.19} parent=0 // pred_fallthru
    _
  // Predicated region
  $region6: #{deeplabv3_forward.19} parent=0 // pred_check
    _
  $region7: #{deeplabv3_forward.19} parent=0 // pred_check_branch
    %13 = sbr.rel (0) target = $region9
  $region8: #{deeplabv3_forward.19} parent=0 // pred_region
    _
  $region9: #{deeplabv3_forward.19} parent=0 // pred_fallthru
    _
  // Predicated region
  $region10: #{deeplabv3_forward.19} parent=0 // pred_check
    _
  $region11: #{deeplabv3_forward.19} parent=0 // pred_check_branch
    %15 = sbr.rel (0) target = $region13
  $region12: #{deeplabv3_forward.19} parent=0 // pred_region
    _
  $region13: #{deeplabv3_forward.19} parent=0 // pred_fallthru
    _
  // Predicated region
  $region14: #{deeplabv3_forward.19} parent=0 // pred_check
    _
  $region15: #{deeplabv3_forward.19} parent=0 // pred_check_branch
    %17 = sbr.rel (0) target = $region17
  $region16: #{deeplabv3_forward.19} parent=0 // pred_region
    _
  $region17: #{deeplabv3_forward.19} parent=0 // pred_fallthru
    _
  // Predicated region
  $region18: #{deeplabv3_forward.19} parent=0 // pred_check
    _
  $region19: #{deeplabv3_forward.19} parent=0 // pred_check_branch
    %19 = sbr.rel (0) target = $region21
  $region20: #{deeplabv3_forward.19} parent=0 // pred_region
    _
  $region21: #{deeplabv3_forward.19} parent=0 // pred_fallthru
    _
  %v21 = vld [vmem:[%s0] sm:$0xff]
  %v22 = vld [vmem:[%s0 + $0x8] sm:$0xf]
  %v23 = vld [vmem:[%s0 + $0xc] sm:$0xff]
  %v24 = vld [vmem:[%s0 + $0x14] sm:$0xf]
  %v25 = vld [vmem:[%s0 + $0x18] sm:$0xff]
  %v26 = vld [vmem:[%s0 + $0x20] sm:$0xf]
  %v27 = vld [vmem:[%s0 + $0x24] sm:$0xff]
  %v28 = vld [vmem:[%s0 + $0x2c] sm:$0xf]
  %v29 = vld [vmem:[%s1] sm:$0xf]
  %v30 = vld [vmem:[%s1 + $0x4] sm:$0xf]
  %v31 = vld [vmem:[%s1 + $0x8] sm:$0xf]
  %v32 = vld [vmem:[%s1 + $0xc] sm:$0xf]
  %v33 = vld [vmem:[%s1 + $0x10] sm:$0xf]
  %v34 = vld [vmem:[%s1 + $0x14] sm:$0xf]
  %v35 = vld [vmem:[%s1 + $0x18] sm:$0xf]
  %v36 = vld [vmem:[%s1 + $0x1c] sm:$0xf]
  %v37 = vld [vmem:[%s1 + $0x20] sm:$0xf]
  %v38 = vld [vmem:[%s1 + $0x24] sm:$0xf]
  %v39 = vld [vmem:[%s1 + $0x28] sm:$0xf]
  %v40 = vld [vmem:[%s1 + $0x2c] sm:$0xf]
  %v41 = vld [vmem:[%s1 + $0x30] sm:$0xf]
  %v42 = vld [vmem:[%s1 + $0x34] sm:$0xf]
  %v43 = vld [vmem:[%s1 + $0x38] sm:$0xf]
  %v44 = vld [vmem:[%s1 + $0x3c] sm:$0xf]
  %v45 = vld [vmem:[%s1 + $0x40] sm:$0xf]
  %v46 = vld [vmem:[%s1 + $0x44] sm:$0xf]
  %v47 = vld [vmem:[%s1 + $0x48] sm:$0xf]
  %v48 = vld [vmem:[%s1 + $0x4c] sm:$0xf]
  %v49 = vld [vmem:[%s1 + $0x50] sm:$0xf]
  %v50 = vld [vmem:[%s1 + $0x54] sm:$0xf]
  %v51 = vld [vmem:[%s1 + $0x58] sm:$0xf]
  %v52 = vld [vmem:[%s1 + $0x5c] sm:$0xf]
  %v53 = vld [vmem:[%s1 + $0x60] sm:$0xf]
  %v54 = vld [vmem:[%s1 + $0x64] sm:$0xf]
  %v55 = vld [vmem:[%s1 + $0x68] sm:$0xf]
  %v56 = vld [vmem:[%s1 + $0x6c] sm:$0xf]
  %v57 = vld [vmem:[%s1 + $0x70] sm:$0xf]
  %v58 = vld [vmem:[%s1 + $0x74] sm:$0xf]
  %v59 = vld [vmem:[%s1 + $0x78] sm:$0xf]
  %v60 = vld [vmem:[%s1 + $0x7c] sm:$0xf]
  %v61 = vld [vmem:[%s1 + $0x80] sm:$0xf]
  %v62 = vld [vmem:[%s1 + $0x84] sm:$0xf]
  %v63 = vld [vmem:[%s1 + $0x88] sm:$0xf]
  %v64 = vld [vmem:[%s1 + $0x8c] sm:$0xf]
  %v65 = vld [vmem:[%s2] sm:$0x1]
  %v67 = vlaneseq
  %v68 = vshrl.u32 %v67, 7
  %v69 = vsub.s32 0, %v68
  %v70 = vrot.slane %v65, %v69
  %v80 = vunpack.c.l.b16 %v21
  %v81 = vunpack.c.h.b16 %v21
  %v82 = vunpack.c.l.b16 %v22
  %v83 = vunpack.c.l.b16 %v23
  %v84 = vunpack.c.h.b16 %v23
  %v85 = vunpack.c.l.b16 %v24
  %v86 = vunpack.c.l.b16 %v25
  %v87 = vunpack.c.h.b16 %v25
  %v88 = vunpack.c.l.b16 %v26
  %v89 = vunpack.c.l.b16 %v27
  %v90 = vunpack.c.h.b16 %v27
  %v91 = vunpack.c.l.b16 %v28
  %v92 = vpack.c.b16 %v83, %v80
  %v93 = vpack.c.b16 %v84, %v81
  %v94 = vpack.c.b16 %v85, %v82
  %v95 = vpack.c.b16 %v89, %v86
  %v96 = vpack.c.b16 %v90, %v87
  %v97 = vpack.c.b16 %v91, %v88
  %v138 = vunpack.c.l.b16 %v29
  %v139 = vunpack.c.l.b16 %v30
  %v140 = vunpack.c.l.b16 %v31
  %v141 = vunpack.c.l.b16 %v32
  %v142 = vunpack.c.l.b16 %v33
  %v143 = vunpack.c.l.b16 %v34
  %v144 = vunpack.c.l.b16 %v35
  %v145 = vunpack.c.l.b16 %v36
  %v146 = vunpack.c.l.b16 %v37
  %v147 = vunpack.c.l.b16 %v38
  %v148 = vunpack.c.l.b16 %v39
  %v149 = vunpack.c.l.b16 %v40
  %v150 = vunpack.c.l.b16 %v41
  %v151 = vunpack.c.l.b16 %v42
  %v152 = vunpack.c.l.b16 %v43
  %v153 = vunpack.c.l.b16 %v44
  %v154 = vunpack.c.l.b16 %v45
  %v155 = vunpack.c.l.b16 %v46
  %v156 = vunpack.c.l.b16 %v47
  %v157 = vunpack.c.l.b16 %v48
  %v158 = vunpack.c.l.b16 %v49
  %v159 = vunpack.c.l.b16 %v50
  %v160 = vunpack.c.l.b16 %v51
  %v161 = vunpack.c.l.b16 %v52
  %v162 = vunpack.c.l.b16 %v53
  %v163 = vunpack.c.l.b16 %v54
  %v164 = vunpack.c.l.b16 %v55
  %v165 = vunpack.c.l.b16 %v56
  %v166 = vunpack.c.l.b16 %v57
  %v167 = vunpack.c.l.b16 %v58
  %v168 = vunpack.c.l.b16 %v59
  %v169 = vunpack.c.l.b16 %v60
  %v170 = vunpack.c.l.b16 %v61
  %v171 = vunpack.c.l.b16 %v62
  %v172 = vunpack.c.l.b16 %v63
  %v173 = vunpack.c.l.b16 %v64
  %v174 = vpack.c.b16 %v139, %v138
  %v175 = vpack.c.b16 %v141, %v140
  %v176 = vpack.c.b16 %v143, %v142
  %v177 = vpack.c.b16 %v145, %v144
  %v178 = vpack.c.b16 %v147, %v146
  %v179 = vpack.c.b16 %v149, %v148
  %v180 = vpack.c.b16 %v151, %v150
  %v181 = vpack.c.b16 %v153, %v152
  %v182 = vpack.c.b16 %v155, %v154
  %v183 = vpack.c.b16 %v157, %v156
  %v184 = vpack.c.b16 %v159, %v158
  %v185 = vpack.c.b16 %v161, %v160
  %v186 = vpack.c.b16 %v163, %v162
  %v187 = vpack.c.b16 %v165, %v164
  %v188 = vpack.c.b16 %v167, %v166
  %v189 = vpack.c.b16 %v169, %v168
  %v190 = vpack.c.b16 %v171, %v170
  %v191 = vpack.c.b16 %v173, %v172
  %vm210 = vcmask 261120
  %v212 = vsel %vm210, %v94, 0
  %v215 = vsel %vm210, %v97, 0
  %217 = vmatprep.subr.bf16.mxu0 0
  %218 = vmatpush1.bf16.msra.mxu0 %v181
  %219 = vmatprep.subr.bf16.mxu0 0
  %220 = vmatpush1.bf16.msra.mxu0 %v180
  %221 = vmatprep.subr.bf16.mxu0 0
  %222 = vmatpush1.bf16.msra.mxu0 %v179
  %223 = vmatprep.subr.bf16.mxu0 0
  %224 = vmatpush1.bf16.msra.mxu0 %v178
  %225 = vmatprep.subr.bf16.mxu0 0
  %226 = vmatpush1.bf16.msra.mxu0 %v177
  %227 = vmatprep.subr.bf16.mxu0 0
  %228 = vmatpush1.bf16.msra.mxu0 %v176
  %229 = vmatprep.subr.bf16.mxu0 0
  %230 = vmatpush1.bf16.msra.mxu0 %v175
  %231 = vmatprep.subr.bf16.mxu0 0
  %232 = vmatpush1.bf16.msra.mxu0 %v174
  %233 = vmatprep.subr.bf16.mxu0 0
  %234 = vmatpush2.bf16.msra.mxu0 %v189
  %235 = vmatprep.subr.bf16.mxu0 0
  %236 = vmatpush2.bf16.msra.mxu0 %v188
  %237 = vmatprep.subr.bf16.mxu0 0
  %238 = vmatpush2.bf16.msra.mxu0 %v187
  %239 = vmatprep.subr.bf16.mxu0 0
  %240 = vmatpush2.bf16.msra.mxu0 %v186
  %241 = vmatprep.subr.bf16.mxu0 0
  %242 = vmatpush2.bf16.msra.mxu0 %v185
  %243 = vmatprep.subr.bf16.mxu0 0
  %244 = vmatpush2.bf16.msra.mxu0 %v184
  %245 = vmatprep.subr.bf16.mxu0 0
  %246 = vmatpush2.bf16.msra.mxu0 %v183
  %247 = vmatprep.subr.bf16.mxu0 0
  %248 = vmatpush2.bf16.msra.mxu0 %v182
  %249 = vmatprep.mubr.bf16.mxu0 %v93
  %250 = vmatmul.mubr.bf16.gmra.mxu0 %v92
  %v251 = vpop.f32.mrf.mxu0
  %v252 = vadd.f32 %v70, %v251
  %v253 = vpop.f32.mrf.mxu0
  %v254 = vpop.f32.mrf.mxu0
  %v255 = vadd.f32 %v70, %v254
  %v256 = vpop.f32.mrf.mxu0
  %257 = vmatprep.mubr.bf16.mxu0 %v96
  %258 = vmatmul.mubr.bf16.gmra.mxu0 %v95
  %v259 = vpop.f32.mrf.mxu0
  %v260 = vadd.f32 %v70, %v259
  %v261 = vpop.f32.mrf.mxu0
  %v262 = vpop.f32.mrf.mxu0
  %v263 = vadd.f32 %v70, %v262
  %v264 = vpop.f32.mrf.mxu0
  %265 = vdwg.mxu0
  %266 = vmatprep.subr.bf16.mxu0 0
  %267 = vmatpush1.bf16.msra.mxu0 0
  %268 = vmatprep.subr.bf16.mxu0 0
  %269 = vmatpush1.bf16.msra.mxu0 0
  %270 = vmatprep.subr.bf16.mxu0 0
  %271 = vmatpush1.bf16.msra.mxu0 0
  %272 = vmatprep.subr.bf16.mxu0 0
  %273 = vmatpush1.bf16.msra.mxu0 0
  %274 = vmatprep.subr.bf16.mxu0 0
  %275 = vmatpush1.bf16.msra.mxu0 0
  %276 = vmatprep.subr.bf16.mxu0 0
  %277 = vmatpush1.bf16.msra.mxu0 0
  %278 = vmatprep.subr.bf16.mxu0 0
  %279 = vmatpush1.bf16.msra.mxu0 %v191
  %280 = vmatprep.subr.bf16.mxu0 0
  %281 = vmatpush1.bf16.msra.mxu0 %v190
  %282 = vmatprep.subr.bf16.mxu0 0
  %283 = vmatpush2.bf16.msra.mxu0 0
  %284 = vmatprep.subr.bf16.mxu0 0
  %285 = vmatpush2.bf16.msra.mxu0 0
  %286 = vmatprep.subr.bf16.mxu0 0
  %287 = vmatpush2.bf16.msra.mxu0 0
  %288 = vmatprep.subr.bf16.mxu0 0
  %289 = vmatpush2.bf16.msra.mxu0 0
  %290 = vmatprep.subr.bf16.mxu0 0
  %291 = vmatpush2.bf16.msra.mxu0 0
  %292 = vmatprep.subr.bf16.mxu0 0
  %293 = vmatpush2.bf16.msra.mxu0 0
  %294 = vmatprep.subr.bf16.mxu0 0
  %295 = vmatpush2.bf16.msra.mxu0 0
  %296 = vmatprep.subr.bf16.mxu0 0
  %297 = vmatpush2.bf16.msra.mxu0 0
  %298 = vmatprep.mubr.bf16.mxu0 0
  %299 = vmatmul.mubr.bf16.gmra.mxu0 %v212
  %v300 = vpop.f32.mrf.mxu0
  %v301 = vadd.f32 %v252, %v300
  %v302 = vpop.f32.mrf.mxu0
  %v303 = vpop.f32.mrf.mxu0
  %v304 = vadd.f32 %v255, %v303
  %v305 = vpop.f32.mrf.mxu0
  %306 = vmatprep.mubr.bf16.mxu0 0
  %307 = vmatmul.mubr.bf16.gmra.mxu0 %v215
  %v308 = vpop.f32.mrf.mxu0
  %v309 = vadd.f32 %v260, %v308
  %v310 = vpop.f32.mrf.mxu0
  %v311 = vpop.f32.mrf.mxu0
  %v312 = vadd.f32 %v263, %v311
  %v313 = vpop.f32.mrf.mxu0
  %314 = vdwg.mxu0
  %v315 = vmax.f32 %v301, 0.0
  %v316 = vmax.f32 %v304, 0.0
  %v317 = vmax.f32 %v309, 0.0
  %v318 = vmax.f32 %v312, 0.0
  %v319 = vpack.c.bf16 %v316, %v315
  %v320 = vpack.c.bf16 %v318, %v317
  %v321 = vld [vmem:[%s3] sm:$0xf]
  %v322 = vld [vmem:[%s3 + $0x4] sm:$0xf]
  %v323 = vld [vmem:[%s3 + $0x8] sm:$0xf]
  %v324 = vld [vmem:[%s3 + $0xc] sm:$0xf]
  %v325 = vld [vmem:[%s4] sm:$0x1]
  %v327 = vlaneseq
  %v328 = vshrl.u32 %v327, 7
  %v329 = vsub.s32 0, %v328
  %v330 = vrot.slane %v325, %v329
  %v336 = vunpack.c.l.b16 %v321
  %v337 = vunpack.c.l.b16 %v322
  %v338 = vunpack.c.l.b16 %v323
  %v339 = vunpack.c.l.b16 %v324
  %v340 = vpack.c.b16 %v337, %v336
  %v341 = vpack.c.b16 %v339, %v338
  %v345 = vsel %vm210, %v319, 0
  %v348 = vsel %vm210, %v320, 0
  %350 = vmatprep.subr.bf16.mxu0 0
  %351 = vmatpush1.bf16.msra.mxu0 0
  %352 = vmatprep.subr.bf16.mxu0 0
  %353 = vmatpush1.bf16.msra.mxu0 0
  %354 = vmatprep.subr.bf16.mxu0 0
  %355 = vmatpush1.bf16.msra.mxu0 0
  %356 = vmatprep.subr.bf16.mxu0 0
  %357 = vmatpush1.bf16.msra.mxu0 0
  %358 = vmatprep.subr.bf16.mxu0 0
  %359 = vmatpush1.bf16.msra.mxu0 0
  %360 = vmatprep.subr.bf16.mxu0 0
  %361 = vmatpush1.bf16.msra.mxu0 0
  %362 = vmatprep.subr.bf16.mxu0 0
  %363 = vmatpush1.bf16.msra.mxu0 %v341
  %364 = vmatprep.subr.bf16.mxu0 0
  %365 = vmatpush1.bf16.msra.mxu0 %v340
  %366 = vmatprep.subr.bf16.mxu0 0
  %367 = vmatpush2.bf16.msra.mxu0 0
  %368 = vmatprep.subr.bf16.mxu0 0
  %369 = vmatpush2.bf16.msra.mxu0 0
  %370 = vmatprep.subr.bf16.mxu0 0
  %371 = vmatpush2.bf16.msra.mxu0 0
  %372 = vmatprep.subr.bf16.mxu0 0
  %373 = vmatpush2.bf16.msra.mxu0 0
  %374 = vmatprep.subr.bf16.mxu0 0
  %375 = vmatpush2.bf16.msra.mxu0 0
  %376 = vmatprep.subr.bf16.mxu0 0
  %377 = vmatpush2.bf16.msra.mxu0 0
  %378 = vmatprep.subr.bf16.mxu0 0
  %379 = vmatpush2.bf16.msra.mxu0 0
  %380 = vmatprep.subr.bf16.mxu0 0
  %381 = vmatpush2.bf16.msra.mxu0 0
  %382 = vmatprep.mubr.bf16.mxu0 0
  %383 = vmatmul.mubr.bf16.gmra.mxu0 %v345
  %v384 = vpop.f32.mrf.mxu0
  %v385 = vadd.f32 %v330, %v384
  %v386 = vpop.f32.mrf.mxu0
  %v387 = vpop.f32.mrf.mxu0
  %v388 = vadd.f32 %v330, %v387
  %v389 = vpop.f32.mrf.mxu0
  %390 = vmatprep.mubr.bf16.mxu0 0
  %391 = vmatmul.mubr.bf16.gmra.mxu0 %v348
  %v392 = vpop.f32.mrf.mxu0
  %v393 = vadd.f32 %v330, %v392
  %v394 = vpop.f32.mrf.mxu0
  %v395 = vpop.f32.mrf.mxu0
  %v396 = vadd.f32 %v330, %v395
  %v397 = vpop.f32.mrf.mxu0
  %398 = vdwg.mxu0
  %vm399 = vcmask 39936
  %400 = vst.msk [vmem:[%s5] sm:$0xff] %vm399, %v385
  %401 = vst.msk [vmem:[%s5 + $0x8] sm:$0xff] %vm399, %v388
  %402 = vst.msk [vmem:[%s5 + $0x10] sm:$0xff] %vm399, %v393
  %403 = vst.msk [vmem:[%s5 + $0x18] sm:$0xff] %vm399, %v396
  // Predicated region
  $region22: #{deeplabv3_forward.19} parent=0 // pred_check
    _
  $region23: #{deeplabv3_forward.19} parent=0 // pred_check_branch
    %405 = sbr.rel (0) target = $region25
  $region24: #{deeplabv3_forward.19} parent=0 // pred_region
    _
  $region25: #{deeplabv3_forward.19} parent=0 // pred_fallthru
    _
  // Predicated region
  $region26: #{deeplabv3_forward.19} parent=0 // pred_check
    _
  $region27: #{deeplabv3_forward.19} parent=0 // pred_check_branch
    %407 = sbr.rel (0) target = $region29
  $region28: #{deeplabv3_forward.19} parent=0 // pred_region
    _
  $region29: #{deeplabv3_forward.19} parent=0 // pred_fallthru
    _

// kernel: deeplabv3_forward.21
$region0: #{deeplabv3_forward.21}
  #allocation0 [shape = 'u32[]', space=smem, size = 0x4, offset = 0x4, fixed_abs, tag = 'smem constant byte address 0x4 - core index']
  #allocation1 [shape = 'u32[144,128]{1,0:T(1,128)}', space=vmem, size = 0x12000, scoped, tag = 'internal scratch']
  %s0 = inlined_call_operand.vmem [shape: f32[24,8,8], index: 0, kind: input, shape index: {}]
  %s1 = inlined_call_operand.vmem [shape: f32[16,8], index: 1, kind: input, shape index: {}]
  %s2 = inlined_call_operand.vmem [shape: f32[8,16], index: 2, kind: input, shape index: {}]
  %s3 = inlined_call_operand.vmem [shape: f32[24,16,16], index: 3, kind: output, shape index: {}]
  %s4 = sld [smem:[#allocation0]]
  $region45: #{deeplabv3_forward.21} parent=0
    _
  %s6 = ssub.s32 1, %s4
  %s7 = scalar_select 0, %s6, %s4
  loop: start=0, step=1, limit=5
  $region2: #{deeplabv3_forward.21} parent=0 // loop_pre_header
    _
  $region3: #{deeplabv3_forward.21} parent=0 // loop_header
    %s9 = sphi 0, %s13
    %p10 = scmp.ge.s32.totalorder %s9, 5
    %s19 = sphi 0, %s21
    %s22 = sphi 0, %s19
    %s23 = sphi 0, %s22
    %s39 = sphi 0, %s23
    %s43 = sphi 0, %s43
    %s45 = sphi 0, %s43
    %s46 = sphi 0, %s45
    %s60 = sphi 0, %s46
    %s64 = sphi 0, %s64
    %s66 = sphi 0, %s64
    %s67 = sphi 0, %s66
    %s81 = sphi 0, %s67
    %s87 = sphi 0, %s89
    %s90 = sphi 0, %s87
    %s91 = sphi 0, %s90
    %s107 = sphi 0, %s91
  $region4: #{deeplabv3_forward.21} parent=0 // loop_header_branch
    %12 = sbr.rel (%p10) target = $region8
  $region5: #{deeplabv3_forward.21} parent=0 // loop_body
    %s14 = ssub.s32 %s9, 1
    %s15 = ssub.s32 %s9, 2
    %s16 = sadd.s32 %s9, 1
    %s17 = ssub.s32 %s9, %s16
    %p18 = scmp.eq.s32.totalorder %s17, 0
    %s20 = sadd.s32 %s19, 1
    %s21 = scalar_select %p18, %s19, %s20
    %p24 = pneg %p18
    %p25 = scmp.eq.s32.totalorder %s9, 2
    %p26 = por %p24, %p25
    %p27 = scmp.ne.s32.totalorder %s19, %s22
    %p28 = scmp.eq.s32.totalorder %s9, 0
    %p29 = por %p27, %p28
    %p30 = scmp.ne.s32.totalorder %s19, %s22
    %p31 = scmp.eq.s32.totalorder %s14, 2
    %p32 = por %p30, %p31
    %p33 = scmp.ne.s32.totalorder %s22, %s23
    %p34 = scmp.eq.s32.totalorder %s14, 0
    %p35 = por %p33, %p34
    %p36 = scmp.ne.s32.totalorder %s22, %s23
    %p37 = scmp.eq.s32.totalorder %s15, 2
    %p38 = por %p36, %p37
    %p40 = scmp.ne.s32.totalorder %s23, %s39
    %p41 = scmp.eq.s32.totalorder %s15, 0
    %p42 = por %p40, %p41
    %s44 = sadd.s32 %s43, 1
    %p47 = scmp.eq.s32.totalorder %s9, 2
    %p48 = scmp.ne.s32.totalorder %s43, %s45
    %p49 = scmp.eq.s32.totalorder %s9, 0
    %p50 = por %p48, %p49
    %p51 = scmp.ne.s32.totalorder %s43, %s45
    %p52 = scmp.eq.s32.totalorder %s14, 2
    %p53 = por %p51, %p52
    %p54 = scmp.ne.s32.totalorder %s45, %s46
    %p55 = scmp.eq.s32.totalorder %s14, 0
    %p56 = por %p54, %p55
    %p57 = scmp.ne.s32.totalorder %s45, %s46
    %p58 = scmp.eq.s32.totalorder %s15, 2
    %p59 = por %p57, %p58
    %p61 = scmp.ne.s32.totalorder %s46, %s60
    %p62 = scmp.eq.s32.totalorder %s15, 0
    %p63 = por %p61, %p62
    %s65 = sadd.s32 %s64, 1
    %p68 = scmp.eq.s32.totalorder %s9, 2
    %p69 = scmp.ne.s32.totalorder %s64, %s66
    %p70 = scmp.eq.s32.totalorder %s9, 0
    %p71 = por %p69, %p70
    %p72 = scmp.ne.s32.totalorder %s64, %s66
    %p73 = scmp.eq.s32.totalorder %s14, 2
    %p74 = por %p72, %p73
    %p75 = scmp.ne.s32.totalorder %s66, %s67
    %p76 = scmp.eq.s32.totalorder %s14, 0
    %p77 = por %p75, %p76
    %p78 = scmp.ne.s32.totalorder %s66, %s67
    %p79 = scmp.eq.s32.totalorder %s15, 2
    %p80 = por %p78, %p79
    %p82 = scmp.ne.s32.totalorder %s67, %s81
    %p83 = scmp.eq.s32.totalorder %s15, 0
    %p84 = por %p82, %p83
    %s85 = ssub.s32 %s9, %s16
    %p86 = scmp.eq.s32.totalorder %s85, 0
    %s88 = sadd.s32 %s87, 1
    %s89 = scalar_select %p86, %s87, %s88
    %p92 = pneg %p86
    %p93 = scmp.eq.s32.totalorder %s9, 2
    %p94 = por %p92, %p93
    %p95 = scmp.ne.s32.totalorder %s87, %s90
    %p96 = scmp.eq.s32.totalorder %s9, 0
    %p97 = por %p95, %p96
    %p98 = scmp.ne.s32.totalorder %s87, %s90
    %p99 = scmp.eq.s32.totalorder %s14, 2
    %p100 = por %p98, %p99
    %p101 = scmp.ne.s32.totalorder %s90, %s91
    %p102 = scmp.eq.s32.totalorder %s14, 0
    %p103 = por %p101, %p102
    %p104 = scmp.ne.s32.totalorder %s90, %s91
    %p105 = scmp.eq.s32.totalorder %s15, 2
    %p106 = por %p104, %p105
    %p108 = scmp.ne.s32.totalorder %s91, %s107
    %p109 = scmp.eq.s32.totalorder %s15, 0
    %p110 = por %p108, %p109
    %p111 = scmp.le.s32.totalorder 1, %s9
    %p112 = scmp.lt.s32.totalorder %s9, 4
    %p113 = pnand %p111, %p112
    %p114 = pneg %p113
    // Predicated region
    $region9: #{deeplabv3_forward.21} parent=5 // pred_check
      _
    $region10: #{deeplabv3_forward.21} parent=5 // pred_check_branch
      %116 = sbr.rel (%p113) target = $region12
    $region11: #{deeplabv3_forward.21} parent=5 // pred_region
      %s117 = ssub.s32 %s9, 1
      // Predicated region
      $region13: #{deeplabv3_forward.21} parent=11 // pred_check
        %p118 = pneg %p56
      $region14: #{deeplabv3_forward.21} parent=11 // pred_check_branch
        %120 = sbr.rel (%p118) target = $region16
      $region15: #{deeplabv3_forward.21} parent=11 // pred_region
        _
      $region16: #{deeplabv3_forward.21} parent=11 // pred_fallthru
        _
      // Predicated region
      $region17: #{deeplabv3_forward.21} parent=11 // pred_check
        %p121 = pneg %p77
      $region18: #{deeplabv3_forward.21} parent=11 // pred_check_branch
        %123 = sbr.rel (%p121) target = $region20
      $region19: #{deeplabv3_forward.21} parent=11 // pred_region
        _
      $region20: #{deeplabv3_forward.21} parent=11 // pred_fallthru
        _
    $region12: #{deeplabv3_forward.21} parent=5 // pred_fallthru
      _
    %p124 = scmp.lt.s32.totalorder %s9, 3
    // Predicated region
    $region21: #{deeplabv3_forward.21} parent=5 // pred_check
      %p125 = pneg %p124
    $region22: #{deeplabv3_forward.21} parent=5 // pred_check_branch
      %127 = sbr.rel (%p125) target = $region24
    $region23: #{deeplabv3_forward.21} parent=5 // pred_region
      // Predicated region
      $region25: #{deeplabv3_forward.21} parent=23 // pred_check
        %p128 = pneg %p29
      $region26: #{deeplabv3_forward.21} parent=23 // pred_check_branch
        %130 = sbr.rel (%p128) target = $region28
      $region27: #{deeplabv3_forward.21} parent=23 // pred_region
        %s131 = smul.u32 8, %s9
        %p132 = scmp.lt.s32.totalorder %s131, 23
        %s133 = scalar_select %p132, %s131, 23
        %s134 = smul.addr %s133, 8
        %s135 = scalar_lea.vmem %s0, %s134
        %s136 = smul.u32 8, %s9
      $region28: #{deeplabv3_forward.21} parent=23 // pred_fallthru
        _
    $region24: #{deeplabv3_forward.21} parent=5 // pred_fallthru
      _
    %p137 = scmp.le.s32.totalorder 1, %s9
    %p138 = scmp.lt.s32.totalorder %s9, 4
    %p139 = pnand %p137, %p138
    %p140 = pneg %p139
    // Predicated region
    $region29: #{deeplabv3_forward.21} parent=5 // pred_check
      _
    $region30: #{deeplabv3_forward.21} parent=5 // pred_check_branch
      %142 = sbr.rel (%p139) target = $region32
    $region31: #{deeplabv3_forward.21} parent=5 // pred_region
      %s143 = ssub.s32 %s9, 1
      %s144 = smul.u32 8, %s14
      %p145 = scmp.lt.s32.totalorder %s144, 23
      %s146 = scalar_select %p145, %s144, 23
      %s147 = smul.addr %s146, 8
      %s148 = scalar_lea.vmem %s0, %s147
      %p149 = pneg %p35
      %p150 = pneg %p32
      %p151 = pneg %p56
      %p152 = pneg %p53
      %p153 = pneg %p77
      %p154 = pneg %p74
      %p155 = pneg %p103
      %p156 = pneg %p100
      %s157 = smul.u32 8, %s14
      %p158 = scmp.lt.s32.totalorder %s157, 23
      %s159 = scalar_select %p158, %s157, 23
      %s160 = smul.addr %s159, 2
      %s161 = smul.addr %s160, 8
      %s162 = scalar_lea.vmem %s3, %s161
      %s163 = smul.u32 8, %s14
      %p164 = scmp.lt.s32.totalorder %s163, 23
      %s165 = scalar_select %p164, %s163, 23
      %s166 = smul.addr %s165, 8
      %s167 = scalar_lea.vmem %s0, %s166
      %s168 = smul.u32 8, %s14
      %s169 = smul.u32 8, %s14
      %p170 = scmp.lt.s32.totalorder %s169, 23
      %s171 = scalar_select %p170, %s169, 23
      %s172 = smul.addr %s171, 2
      %s173 = smul.addr %s172, 8
      %s174 = scalar_lea.vmem %s3, %s173
      %s175 = smul.u32 8, %s14
      %v176 = vld [vmem:[%s1] sm:$0xff]
      %v177 = vld [vmem:[%s1 + $0x8] sm:$0xff]
      %v178 = vld [vmem:[%s167] sm:$0xff]
      %vm179 = vcmask 64512
      %v181 = vsel %vm179, %v176, 0
      %v184 = vsel %vm179, %v177, 0
      %186 = vmatprep.subr.mxu0 0.0
      %187 = vmatpush1.msra.mxu0 0.0
      %188 = vmatprep.subr.mxu0 0.0
      %189 = vmatpush1.msra.mxu0 0.0
      %190 = vmatprep.subr.mxu0 0.0
      %191 = vmatpush1.msra.mxu0 0.0
      %192 = vmatprep.subr.mxu0 0.0
      %193 = vmatpush1.msra.mxu0 0.0
      %194 = vmatprep.subr.mxu0 0.0
      %195 = vmatpush1.msra.mxu0 0.0
      %196 = vmatprep.subr.mxu0 0.0
      %197 = vmatpush1.msra.mxu0 0.0
      %198 = vmatprep.subr.mxu0 0.0
      %199 = vmatpush1.msra.mxu0 0.0
      %200 = vmatprep.subr.mxu0 0.0
      %201 = vmatpush1.msra.mxu0 0.0
      %202 = vmatprep.subr.mxu0 0.0
      %203 = vmatpush1.msra.mxu0 0.0
      %204 = vmatprep.subr.mxu0 0.0
      %205 = vmatpush1.msra.mxu0 0.0
      %206 = vmatprep.subr.mxu0 0.0
      %207 = vmatpush1.msra.mxu0 0.0
      %208 = vmatprep.subr.mxu0 0.0
      %209 = vmatpush1.msra.mxu0 0.0
      %210 = vmatprep.subr.mxu0 0.0
      %211 = vmatpush1.msra.mxu0 0.0
      %212 = vmatprep.subr.mxu0 0.0
      %213 = vmatpush1.msra.mxu0 0.0
      %214 = vmatprep.subr.mxu0 0.0
      %215 = vmatpush1.msra.mxu0 0.0
      %216 = vmatprep.subr.mxu0 0.0
      %217 = vmatpush1.msra.mxu0 %v178
      %218 = vmatprep.subr.mxu0 0.0
      %219 = vmatpush2.msra.mxu0 0.0
      %220 = vmatprep.subr.mxu0 0.0
      %221 = vmatpush2.msra.mxu0 0.0
      %222 = vmatprep.subr.mxu0 0.0
      %223 = vmatpush2.msra.mxu0 0.0
      %224 = vmatprep.subr.mxu0 0.0
      %225 = vmatpush2.msra.mxu0 0.0
      %226 = vmatprep.subr.mxu0 0.0
      %227 = vmatpush2.msra.mxu0 0.0
      %228 = vmatprep.subr.mxu0 0.0
      %229 = vmatpush2.msra.mxu0 0.0
      %230 = vmatprep.subr.mxu0 0.0
      %231 = vmatpush2.msra.mxu0 0.0
      %232 = vmatprep.subr.mxu0 0.0
      %233 = vmatpush2.msra.mxu0 0.0
      %234 = vmatprep.subr.mxu0 0.0
      %235 = vmatpush2.msra.mxu0 0.0
      %236 = vmatprep.subr.mxu0 0.0
      %237 = vmatpush2.msra.mxu0 0.0
      %238 = vmatprep.subr.mxu0 0.0
      %239 = vmatpush2.msra.mxu0 0.0
      %240 = vmatprep.subr.mxu0 0.0
      %241 = vmatpush2.msra.mxu0 0.0
      %242 = vmatprep.subr.mxu0 0.0
      %243 = vmatpush2.msra.mxu0 0.0
      %244 = vmatprep.subr.mxu0 0.0
      %245 = vmatpush2.msra.mxu0 0.0
      %246 = vmatprep.subr.mxu0 0.0
      %247 = vmatpush2.msra.mxu0 0.0
      %248 = vmatprep.subr.mxu0 0.0
      %249 = vmatpush2.msra.mxu0 0.0
      %250 = vmatprep.mubr.f32.mxu0 0.0
      %251 = vmatmul.mubr.f32.gmra.mxu0 %v181
      %v252 = vpop.f32.mrf.mxu0
      %v253 = vadd.f32 0.0, %v252
      %v254 = vpop.f32.mrf.mxu0
      %255 = vmatprep.mubr.f32.mxu0 0.0
      %256 = vmatmul.mubr.f32.gmra.mxu0 %v184
      %v257 = vpop.f32.mrf.mxu0
      %v258 = vadd.f32 0.0, %v257
      %v259 = vpop.f32.mrf.mxu0
      %260 = vdwg.mxu0
      %v261 = vld [vmem:[%s2] sm:$0xff]
      %v263 = vsel %vm179, %v253, 0
      %v266 = vsel %vm179, %v258, 0
      %268 = vmatprep.subr.mxu0 0.0
      %269 = vmatpush1.msra.mxu0 0.0
      %270 = vmatprep.subr.mxu0 0.0
      %271 = vmatpush1.msra.mxu0 0.0
      %272 = vmatprep.subr.mxu0 0.0
      %273 = vmatpush1.msra.mxu0 0.0
      %274 = vmatprep.subr.mxu0 0.0
      %275 = vmatpush1.msra.mxu0 0.0
      %276 = vmatprep.subr.mxu0 0.0
      %277 = vmatpush1.msra.mxu0 0.0
      %278 = vmatprep.subr.mxu0 0.0
      %279 = vmatpush1.msra.mxu0 0.0
      %280 = vmatprep.subr.mxu0 0.0
      %281 = vmatpush1.msra.mxu0 0.0
      %282 = vmatprep.subr.mxu0 0.0
      %283 = vmatpush1.msra.mxu0 0.0
      %284 = vmatprep.subr.mxu0 0.0
      %285 = vmatpush1.msra.mxu0 0.0
      %286 = vmatprep.subr.mxu0 0.0
      %287 = vmatpush1.msra.mxu0 0.0
      %288 = vmatprep.subr.mxu0 0.0
      %289 = vmatpush1.msra.mxu0 0.0
      %290 = vmatprep.subr.mxu0 0.0
      %291 = vmatpush1.msra.mxu0 0.0
      %292 = vmatprep.subr.mxu0 0.0
      %293 = vmatpush1.msra.mxu0 0.0
      %294 = vmatprep.subr.mxu0 0.0
      %295 = vmatpush1.msra.mxu0 0.0
      %296 = vmatprep.subr.mxu0 0.0
      %297 = vmatpush1.msra.mxu0 0.0
      %298 = vmatprep.subr.mxu0 0.0
      %299 = vmatpush1.msra.mxu0 %v261
      %300 = vmatprep.subr.mxu0 0.0
      %301 = vmatpush2.msra.mxu0 0.0
      %302 = vmatprep.subr.mxu0 0.0
      %303 = vmatpush2.msra.mxu0 0.0
      %304 = vmatprep.subr.mxu0 0.0
      %305 = vmatpush2.msra.mxu0 0.0
      %306 = vmatprep.subr.mxu0 0.0
      %307 = vmatpush2.msra.mxu0 0.0
      %308 = vmatprep.subr.mxu0 0.0
      %309 = vmatpush2.msra.mxu0 0.0
      %310 = vmatprep.subr.mxu0 0.0
      %311 = vmatpush2.msra.mxu0 0.0
      %312 = vmatprep.subr.mxu0 0.0
      %313 = vmatpush2.msra.mxu0 0.0
      %314 = vmatprep.subr.mxu0 0.0
      %315 = vmatpush2.msra.mxu0 0.0
      %316 = vmatprep.subr.mxu0 0.0
      %317 = vmatpush2.msra.mxu0 0.0
      %318 = vmatprep.subr.mxu0 0.0
      %319 = vmatpush2.msra.mxu0 0.0
      %320 = vmatprep.subr.mxu0 0.0
      %321 = vmatpush2.msra.mxu0 0.0
      %322 = vmatprep.subr.mxu0 0.0
      %323 = vmatpush2.msra.mxu0 0.0
      %324 = vmatprep.subr.mxu0 0.0
      %325 = vmatpush2.msra.mxu0 0.0
      %326 = vmatprep.subr.mxu0 0.0
      %327 = vmatpush2.msra.mxu0 0.0
      %328 = vmatprep.subr.mxu0 0.0
      %329 = vmatpush2.msra.mxu0 0.0
      %330 = vmatprep.subr.mxu0 0.0
      %331 = vmatpush2.msra.mxu0 0.0
      %332 = vmatprep.mubr.f32.mxu0 0.0
      %333 = vmatmul.mubr.f32.gmra.mxu0 %v263
      %v334 = vpop.f32.mrf.mxu0
      %v335 = vadd.f32 0.0, %v334
      %v336 = vpop.f32.mrf.mxu0
      %337 = vmatprep.mubr.f32.mxu0 0.0
      %338 = vmatmul.mubr.f32.gmra.mxu0 %v266
      %v339 = vpop.f32.mrf.mxu0
      %v340 = vadd.f32 0.0, %v339
      %v341 = vpop.f32.mrf.mxu0
      %342 = vdwg.mxu0
      %vm343 = vcmask 130048
      %344 = vst.msk [vmem:[%s174] sm:$0xff] %vm343, %v335
      %345 = vst.msk [vmem:[%s174 + $0x8] sm:$0xff] %vm343, %v340
      %v346 = vld [vmem:[%s1] sm:$0xff]
      %v347 = vld [vmem:[%s1 + $0x8] sm:$0xff]
      %s348 = scalar_lea.vmem %s167, 8
      %v349 = vld [vmem:[%s348] sm:$0xff]
      %v351 = vsel %vm179, %v346, 0
      %v354 = vsel %vm179, %v347, 0
      %356 = vmatprep.subr.mxu0 0.0
      %357 = vmatpush1.msra.mxu0 0.0
      %358 = vmatprep.subr.mxu0 0.0
      %359 = vmatpush1.msra.mxu0 0.0
      %360 = vmatprep.subr.mxu0 0.0
      %361 = vmatpush1.msra.mxu0 0.0
      %362 = vmatprep.subr.mxu0 0.0
      %363 = vmatpush1.msra.mxu0 0.0
      %364 = vmatprep.subr.mxu0 0.0
      %365 = vmatpush1.msra.mxu0 0.0
      %366 = vmatprep.subr.mxu0 0.0
      %367 = vmatpush1.msra.mxu0 0.0
      %368 = vmatprep.subr.mxu0 0.0
      %369 = vmatpush1.msra.mxu0 0.0
      %370 = vmatprep.subr.mxu0 0.0
      %371 = vmatpush1.msra.mxu0 0.0
      %372 = vmatprep.subr.mxu0 0.0
      %373 = vmatpush1.msra.mxu0 0.0
      %374 = vmatprep.subr.mxu0 0.0
      %375 = vmatpush1.msra.mxu0 0.0
      %376 = vmatprep.subr.mxu0 0.0
      %377 = vmatpush1.msra.mxu0 0.0
      %378 = vmatprep.subr.mxu0 0.0
      %379 = vmatpush1.msra.mxu0 0.0
      %380 = vmatprep.subr.mxu0 0.0
      %381 = vmatpush1.msra.mxu0 0.0
      %382 = vmatprep.subr.mxu0 0.0
      %383 = vmatpush1.msra.mxu0 0.0
      %384 = vmatprep.subr.mxu0 0.0
      %385 = vmatpush1.msra.mxu0 0.0
      %386 = vmatprep.subr.mxu0 0.0
      %387 = vmatpush1.msra.mxu0 %v349
      %388 = vmatprep.subr.mxu0 0.0
      %389 = vmatpush2.msra.mxu0 0.0
      %390 = vmatprep.subr.mxu0 0.0
      %391 = vmatpush2.msra.mxu0 0.0
      %392 = vmatprep.subr.mxu0 0.0
      %393 = vmatpush2.msra.mxu0 0.0
      %394 = vmatprep.subr.mxu0 0.0
      %395 = vmatpush2.msra.mxu0 0.0
      %396 = vmatprep.subr.mxu0 0.0
      %397 = vmatpush2.msra.mxu0 0.0
      %398 = vmatprep.subr.mxu0 0.0
      %399 = vmatpush2.msra.mxu0 0.0
      %400 = vmatprep.subr.mxu0 0.0
      %401 = vmatpush2.msra.mxu0 0.0
      %402 = vmatprep.subr.mxu0 0.0
      %403 = vmatpush2.msra.mxu0 0.0
      %404 = vmatprep.subr.mxu0 0.0
      %405 = vmatpush2.msra.mxu0 0.0
      %406 = vmatprep.subr.mxu0 0.0
      %407 = vmatpush2.msra.mxu0 0.0
      %408 = vmatprep.subr.mxu0 0.0
      %409 = vmatpush2.msra.mxu0 0.0
      %410 = vmatprep.subr.mxu0 0.0
      %411 = vmatpush2.msra.mxu0 0.0
      %412 = vmatprep.subr.mxu0 0.0
      %413 = vmatpush2.msra.mxu0 0.0
      %414 = vmatprep.subr.mxu0 0.0
      %415 = vmatpush2.msra.mxu0 0.0
      %416 = vmatprep.subr.mxu0 0.0
      %417 = vmatpush2.msra.mxu0 0.0
      %418 = vmatprep.subr.mxu0 0.0
      %419 = vmatpush2.msra.mxu0 0.0
      %420 = vmatprep.mubr.f32.mxu0 0.0
      %421 = vmatmul.mubr.f32.gmra.mxu0 %v351
      %v422 = vpop.f32.mrf.mxu0
      %v423 = vadd.f32 0.0, %v422
      %v424 = vpop.f32.mrf.mxu0
      %425 = vmatprep.mubr.f32.mxu0 0.0
      %426 = vmatmul.mubr.f32.gmra.mxu0 %v354
      %v427 = vpop.f32.mrf.mxu0
      %v428 = vadd.f32 0.0, %v427
      %v429 = vpop.f32.mrf.mxu0
      %430 = vdwg.mxu0
      %v431 = vld [vmem:[%s2] sm:$0xff]
      %v433 = vsel %vm179, %v423, 0
      %v436 = vsel %vm179, %v428, 0
      %438 = vmatprep.subr.mxu0 0.0
      %439 = vmatpush1.msra.mxu0 0.0
      %440 = vmatprep.subr.mxu0 0.0
      %441 = vmatpush1.msra.mxu0 0.0
      %442 = vmatprep.subr.mxu0 0.0
      %443 = vmatpush1.msra.mxu0 0.0
      %444 = vmatprep.subr.mxu0 0.0
      %445 = vmatpush1.msra.mxu0 0.0
      %446 = vmatprep.subr.mxu0 0.0
      %447 = vmatpush1.msra.mxu0 0.0
      %448 = vmatprep.subr.mxu0 0.0
      %449 = vmatpush1.msra.mxu0 0.0
      %450 = vmatprep.subr.mxu0 0.0
      %451 = vmatpush1.msra.mxu0 0.0
      %452 = vmatprep.subr.mxu0 0.0
      %453 = vmatpush1.msra.mxu0 0.0
      %454 = vmatprep.subr.mxu0 0.0
      %455 = vmatpush1.msra.mxu0 0.0
      %456 = vmatprep.subr.mxu0 0.0
      %457 = vmatpush1.msra.mxu0 0.0
      %458 = vmatprep.subr.mxu0 0.0
      %459 = vmatpush1.msra.mxu0 0.0
      %460 = vmatprep.subr.mxu0 0.0
      %461 = vmatpush1.msra.mxu0 0.0
      %462 = vmatprep.subr.mxu0 0.0
      %463 = vmatpush1.msra.mxu0 0.0
      %464 = vmatprep.subr.mxu0 0.0
      %465 = vmatpush1.msra.mxu0 0.0
      %466 = vmatprep.subr.mxu0 0.0
      %467 = vmatpush1.msra.mxu0 0.0
      %468 = vmatprep.subr.mxu0 0.0
      %469 = vmatpush1.msra.mxu0 %v431
      %470 = vmatprep.subr.mxu0 0.0
      %471 = vmatpush2.msra.mxu0 0.0
      %472 = vmatprep.subr.mxu0 0.0
      %473 = vmatpush2.msra.mxu0 0.0
      %474 = vmatprep.subr.mxu0 0.0
      %475 = vmatpush2.msra.mxu0 0.0
      %476 = vmatprep.subr.mxu0 0.0
      %477 = vmatpush2.msra.mxu0 0.0
      %478 = vmatprep.subr.mxu0 0.0
      %479 = vmatpush2.msra.mxu0 0.0
      %480 = vmatprep.subr.mxu0 0.0
      %481 = vmatpush2.msra.mxu0 0.0
      %482 = vmatprep.subr.mxu0 0.0
      %483 = vmatpush2.msra.mxu0 0.0
      %484 = vmatprep.subr.mxu0 0.0
      %485 = vmatpush2.msra.mxu0 0.0
      %486 = vmatprep.subr.mxu0 0.0
      %487 = vmatpush2.msra.mxu0 0.0
      %488 = vmatprep.subr.mxu0 0.0
      %489 = vmatpush2.msra.mxu0 0.0
      %490 = vmatprep.subr.mxu0 0.0
      %491 = vmatpush2.msra.mxu0 0.0
      %492 = vmatprep.subr.mxu0 0.0
      %493 = vmatpush2.msra.mxu0 0.0
      %494 = vmatprep.subr.mxu0 0.0
      %495 = vmatpush2.msra.mxu0 0.0
      %496 = vmatprep.subr.mxu0 0.0
      %497 = vmatpush2.msra.mxu0 0.0
      %498 = vmatprep.subr.mxu0 0.0
      %499 = vmatpush2.msra.mxu0 0.0
      %500 = vmatprep.subr.mxu0 0.0
      %501 = vmatpush2.msra.mxu0 0.0
      %502 = vmatprep.mubr.f32.mxu0 0.0
      %503 = vmatmul.mubr.f32.gmra.mxu0 %v433
      %v504 = vpop.f32.mrf.mxu0
      %v505 = vadd.f32 0.0, %v504
      %v506 = vpop.f32.mrf.mxu0
      %507 = vmatprep.mubr.f32.mxu0 0.0
      %508 = vmatmul.mubr.f32.gmra.mxu0 %v436
      %v509 = vpop.f32.mrf.mxu0
      %v510 = vadd.f32 0.0, %v509
      %v511 = vpop.f32.mrf.mxu0
      %512 = vdwg.mxu0
      %s513 = scalar_lea.vmem %s174, 16
      %514 = vst.msk [vmem:[%s513] sm:$0xff] %vm343, %v505
      %515 = vst.msk [vmem:[%s513 + $0x8] sm:$0xff] %vm343, %v510
      %v516 = vld [vmem:[%s1] sm:$0xff]
      %v517 = vld [vmem:[%s1 + $0x8] sm:$0xff]
      %s518 = scalar_lea.vmem %s167, 16
      %v519 = vld [vmem:[%s518] sm:$0xff]
      %v521 = vsel %vm179, %v516, 0
      %v524 = vsel %vm179, %v517, 0
      %526 = vmatprep.subr.mxu0 0.0
      %527 = vmatpush1.msra.mxu0 0.0
      %528 = vmatprep.subr.mxu0 0.0
      %529 = vmatpush1.msra.mxu0 0.0
      %530 = vmatprep.subr.mxu0 0.0
      %531 = vmatpush1.msra.mxu0 0.0
      %532 = vmatprep.subr.mxu0 0.0
      %533 = vmatpush1.msra.mxu0 0.0
      %534 = vmatprep.subr.mxu0 0.0
      %535 = vmatpush1.msra.mxu0 0.0
      %536 = vmatprep.subr.mxu0 0.0
      %537 = vmatpush1.msra.mxu0 0.0
      %538 = vmatprep.subr.mxu0 0.0
      %539 = vmatpush1.msra.mxu0 0.0
      %540 = vmatprep.subr.mxu0 0.0
      %541 = vmatpush1.msra.mxu0 0.0
      %542 = vmatprep.subr.mxu0 0.0
      %543 = vmatpush1.msra.mxu0 0.0
      %544 = vmatprep.subr.mxu0 0.0
      %545 = vmatpush1.msra.mxu0 0.0
      %546 = vmatprep.subr.mxu0 0.0
      %547 = vmatpush1.msra.mxu0 0.0
      %548 = vmatprep.subr.mxu0 0.0
      %549 = vmatpush1.msra.mxu0 0.0
      %550 = vmatprep.subr.mxu0 0.0
      %551 = vmatpush1.msra.mxu0 0.0
      %552 = vmatprep.subr.mxu0 0.0
      %553 = vmatpush1.msra.mxu0 0.0
      %554 = vmatprep.subr.mxu0 0.0
      %555 = vmatpush1.msra.mxu0 0.0
      %556 = vmatprep.subr.mxu0 0.0
      %557 = vmatpush1.msra.mxu0 %v519
      %558 = vmatprep.subr.mxu0 0.0
      %559 = vmatpush2.msra.mxu0 0.0
      %560 = vmatprep.subr.mxu0 0.0
      %561 = vmatpush2.msra.mxu0 0.0
      %562 = vmatprep.subr.mxu0 0.0
      %563 = vmatpush2.msra.mxu0 0.0
      %564 = vmatprep.subr.mxu0 0.0
      %565 = vmatpush2.msra.mxu0 0.0
      %566 = vmatprep.subr.mxu0 0.0
      %567 = vmatpush2.msra.mxu0 0.0
      %568 = vmatprep.subr.mxu0 0.0
      %569 = vmatpush2.msra.mxu0 0.0
      %570 = vmatprep.subr.mxu0 0.0
      %571 = vmatpush2.msra.mxu0 0.0
      %572 = vmatprep.subr.mxu0 0.0
      %573 = vmatpush2.msra.mxu0 0.0
      %574 = vmatprep.subr.mxu0 0.0
      %575 = vmatpush2.msra.mxu0 0.0
      %576 = vmatprep.subr.mxu0 0.0
      %577 = vmatpush2.msra.mxu0 0.0
      %578 = vmatprep.subr.mxu0 0.0
      %579 = vmatpush2.msra.mxu0 0.0
      %580 = vmatprep.subr.mxu0 0.0
      %581 = vmatpush2.msra.mxu0 0.0
      %582 = vmatprep.subr.mxu0 0.0
      %583 = vmatpush2.msra.mxu0 0.0
      %584 = vmatprep.subr.mxu0 0.0
      %585 = vmatpush2.msra.mxu0 0.0
      %586 = vmatprep.subr.mxu0 0.0
      %587 = vmatpush2.msra.mxu0 0.0
      %588 = vmatprep.subr.mxu0 0.0
      %589 = vmatpush2.msra.mxu0 0.0
      %590 = vmatprep.mubr.f32.mxu0 0.0
      %591 = vmatmul.mubr.f32.gmra.mxu0 %v521
      %v592 = vpop.f32.mrf.mxu0
      %v593 = vadd.f32 0.0, %v592
      %v594 = vpop.f32.mrf.mxu0
      %595 = vmatprep.mubr.f32.mxu0 0.0
      %596 = vmatmul.mubr.f32.gmra.mxu0 %v524
      %v597 = vpop.f32.mrf.mxu0
      %v598 = vadd.f32 0.0, %v597
      %v599 = vpop.f32.mrf.mxu0
      %600 = vdwg.mxu0
      %v601 = vld [vmem:[%s2] sm:$0xff]
      %v603 = vsel %vm179, %v593, 0
      %v606 = vsel %vm179, %v598, 0
      %608 = vmatprep.subr.mxu0 0.0
      %609 = vmatpush1.msra.mxu0 0.0
      %610 = vmatprep.subr.mxu0 0.0
      %611 = vmatpush1.msra.mxu0 0.0
      %612 = vmatprep.subr.mxu0 0.0
      %613 = vmatpush1.msra.mxu0 0.0
      %614 = vmatprep.subr.mxu0 0.0
      %615 = vmatpush1.msra.mxu0 0.0
      %616 = vmatprep.subr.mxu0 0.0
      %617 = vmatpush1.msra.mxu0 0.0
      %618 = vmatprep.subr.mxu0 0.0
      %619 = vmatpush1.msra.mxu0 0.0
      %620 = vmatprep.subr.mxu0 0.0
      %621 = vmatpush1.msra.mxu0 0.0
      %622 = vmatprep.subr.mxu0 0.0
      %623 = vmatpush1.msra.mxu0 0.0
      %624 = vmatprep.subr.mxu0 0.0
      %625 = vmatpush1.msra.mxu0 0.0
      %626 = vmatprep.subr.mxu0 0.0
      %627 = vmatpush1.msra.mxu0 0.0
      %628 = vmatprep.subr.mxu0 0.0
      %629 = vmatpush1.msra.mxu0 0.0
      %630 = vmatprep.subr.mxu0 0.0
      %631 = vmatpush1.msra.mxu0 0.0
      %632 = vmatprep.subr.mxu0 0.0
      %633 = vmatpush1.msra.mxu0 0.0
      %634 = vmatprep.subr.mxu0 0.0
      %635 = vmatpush1.msra.mxu0 0.0
      %636 = vmatprep.subr.mxu0 0.0
      %637 = vmatpush1.msra.mxu0 0.0
      %638 = vmatprep.subr.mxu0 0.0
      %639 = vmatpush1.msra.mxu0 %v601
      %640 = vmatprep.subr.mxu0 0.0
      %641 = vmatpush2.msra.mxu0 0.0
      %642 = vmatprep.subr.mxu0 0.0
      %643 = vmatpush2.msra.mxu0 0.0
      %644 = vmatprep.subr.mxu0 0.0
      %645 = vmatpush2.msra.mxu0 0.0
      %646 = vmatprep.subr.mxu0 0.0
      %647 = vmatpush2.msra.mxu0 0.0
      %648 = vmatprep.subr.mxu0 0.0
      %649 = vmatpush2.msra.mxu0 0.0
      %650 = vmatprep.subr.mxu0 0.0
      %651 = vmatpush2.msra.mxu0 0.0
      %652 = vmatprep.subr.mxu0 0.0
      %653 = vmatpush2.msra.mxu0 0.0
      %654 = vmatprep.subr.mxu0 0.0
      %655 = vmatpush2.msra.mxu0 0.0
      %656 = vmatprep.subr.mxu0 0.0
      %657 = vmatpush2.msra.mxu0 0.0
      %658 = vmatprep.subr.mxu0 0.0
      %659 = vmatpush2.msra.mxu0 0.0
      %660 = vmatprep.subr.mxu0 0.0
      %661 = vmatpush2.msra.mxu0 0.0
      %662 = vmatprep.subr.mxu0 0.0
      %663 = vmatpush2.msra.mxu0 0.0
      %664 = vmatprep.subr.mxu0 0.0
      %665 = vmatpush2.msra.mxu0 0.0
      %666 = vmatprep.subr.mxu0 0.0
      %667 = vmatpush2.msra.mxu0 0.0
      %668 = vmatprep.subr.mxu0 0.0
      %669 = vmatpush2.msra.mxu0 0.0
      %670 = vmatprep.subr.mxu0 0.0
      %671 = vmatpush2.msra.mxu0 0.0
      %672 = vmatprep.mubr.f32.mxu0 0.0
      %673 = vmatmul.mubr.f32.gmra.mxu0 %v603
      %v674 = vpop.f32.mrf.mxu0
      %v675 = vadd.f32 0.0, %v674
      %v676 = vpop.f32.mrf.mxu0
      %677 = vmatprep.mubr.f32.mxu0 0.0
      %678 = vmatmul.mubr.f32.gmra.mxu0 %v606
      %v679 = vpop.f32.mrf.mxu0
      %v680 = vadd.f32 0.0, %v679
      %v681 = vpop.f32.mrf.mxu0
      %682 = vdwg.mxu0
      %s683 = scalar_lea.vmem %s174, 32
      %684 = vst.msk [vmem:[%s683] sm:$0xff] %vm343, %v675
      %685 = vst.msk [vmem:[%s683 + $0x8] sm:$0xff] %vm343, %v680
      %v686 = vld [vmem:[%s1] sm:$0xff]
      %v687 = vld [vmem:[%s1 + $0x8] sm:$0xff]
      %s688 = scalar_lea.vmem %s167, 24
      %v689 = vld [vmem:[%s688] sm:$0xff]
      %v691 = vsel %vm179, %v686, 0
      %v694 = vsel %vm179, %v687, 0
      %696 = vmatprep.subr.mxu0 0.0
      %697 = vmatpush1.msra.mxu0 0.0
      %698 = vmatprep.subr.mxu0 0.0
      %699 = vmatpush1.msra.mxu0 0.0
      %700 = vmatprep.subr.mxu0 0.0
      %701 = vmatpush1.msra.mxu0 0.0
      %702 = vmatprep.subr.mxu0 0.0
      %703 = vmatpush1.msra.mxu0 0.0
      %704 = vmatprep.subr.mxu0 0.0
      %705 = vmatpush1.msra.mxu0 0.0
      %706 = vmatprep.subr.mxu0 0.0
      %707 = vmatpush1.msra.mxu0 0.0
      %708 = vmatprep.subr.mxu0 0.0
      %709 = vmatpush1.msra.mxu0 0.0
      %710 = vmatprep.subr.mxu0 0.0
      %711 = vmatpush1.msra.mxu0 0.0
      %712 = vmatprep.subr.mxu0 0.0
      %713 = vmatpush1.msra.mxu0 0.0
      %714 = vmatprep.subr.mxu0 0.0
      %715 = vmatpush1.msra.mxu0 0.0
      %716 = vmatprep.subr.mxu0 0.0
      %717 = vmatpush1.msra.mxu0 0.0
      %718 = vmatprep.subr.mxu0 0.0
      %719 = vmatpush1.msra.mxu0 0.0
      %720 = vmatprep.subr.mxu0 0.0
      %721 = vmatpush1.msra.mxu0 0.0
      %722 = vmatprep.subr.mxu0 0.0
      %723 = vmatpush1.msra.mxu0 0.0
      %724 = vmatprep.subr.mxu0 0.0
      %725 = vmatpush1.msra.mxu0 0.0
      %726 = vmatprep.subr.mxu0 0.0
      %727 = vmatpush1.msra.mxu0 %v689
      %728 = vmatprep.subr.mxu0 0.0
      %729 = vmatpush2.msra.mxu0 0.0
      %730 = vmatprep.subr.mxu0 0.0
      %731 = vmatpush2.msra.mxu0 0.0
      %732 = vmatprep.subr.mxu0 0.0
      %733 = vmatpush2.msra.mxu0 0.0
      %734 = vmatprep.subr.mxu0 0.0
      %735 = vmatpush2.msra.mxu0 0.0
      %736 = vmatprep.subr.mxu0 0.0
      %737 = vmatpush2.msra.mxu0 0.0
      %738 = vmatprep.subr.mxu0 0.0
      %739 = vmatpush2.msra.mxu0 0.0
      %740 = vmatprep.subr.mxu0 0.0
      %741 = vmatpush2.msra.mxu0 0.0
      %742 = vmatprep.subr.mxu0 0.0
      %743 = vmatpush2.msra.mxu0 0.0
      %744 = vmatprep.subr.mxu0 0.0
      %745 = vmatpush2.msra.mxu0 0.0
      %746 = vmatprep.subr.mxu0 0.0
      %747 = vmatpush2.msra.mxu0 0.0
      %748 = vmatprep.subr.mxu0 0.0
      %749 = vmatpush2.msra.mxu0 0.0
      %750 = vmatprep.subr.mxu0 0.0
      %751 = vmatpush2.msra.mxu0 0.0
      %752 = vmatprep.subr.mxu0 0.0
      %753 = vmatpush2.msra.mxu0 0.0
      %754 = vmatprep.subr.mxu0 0.0
      %755 = vmatpush2.msra.mxu0 0.0
      %756 = vmatprep.subr.mxu0 0.0
      %757 = vmatpush2.msra.mxu0 0.0
      %758 = vmatprep.subr.mxu0 0.0
      %759 = vmatpush2.msra.mxu0 0.0
      %760 = vmatprep.mubr.f32.mxu0 0.0
      %761 = vmatmul.mubr.f32.gmra.mxu0 %v691
      %v762 = vpop.f32.mrf.mxu0
      %v763 = vadd.f32 0.0, %v762
      %v764 = vpop.f32.mrf.mxu0
      %765 = vmatprep.mubr.f32.mxu0 0.0
      %766 = vmatmul.mubr.f32.gmra.mxu0 %v694
      %v767 = vpop.f32.mrf.mxu0
      %v768 = vadd.f32 0.0, %v767
      %v769 = vpop.f32.mrf.mxu0
      %770 = vdwg.mxu0
      %v771 = vld [vmem:[%s2] sm:$0xff]
      %v773 = vsel %vm179, %v763, 0
      %v776 = vsel %vm179, %v768, 0
      %778 = vmatprep.subr.mxu0 0.0
      %779 = vmatpush1.msra.mxu0 0.0
      %780 = vmatprep.subr.mxu0 0.0
      %781 = vmatpush1.msra.mxu0 0.0
      %782 = vmatprep.subr.mxu0 0.0
      %783 = vmatpush1.msra.mxu0 0.0
      %784 = vmatprep.subr.mxu0 0.0
      %785 = vmatpush1.msra.mxu0 0.0
      %786 = vmatprep.subr.mxu0 0.0
      %787 = vmatpush1.msra.mxu0 0.0
      %788 = vmatprep.subr.mxu0 0.0
      %789 = vmatpush1.msra.mxu0 0.0
      %790 = vmatprep.subr.mxu0 0.0
      %791 = vmatpush1.msra.mxu0 0.0
      %792 = vmatprep.subr.mxu0 0.0
      %793 = vmatpush1.msra.mxu0 0.0
      %794 = vmatprep.subr.mxu0 0.0
      %795 = vmatpush1.msra.mxu0 0.0
      %796 = vmatprep.subr.mxu0 0.0
      %797 = vmatpush1.msra.mxu0 0.0
      %798 = vmatprep.subr.mxu0 0.0
      %799 = vmatpush1.msra.mxu0 0.0
      %800 = vmatprep.subr.mxu0 0.0
      %801 = vmatpush1.msra.mxu0 0.0
      %802 = vmatprep.subr.mxu0 0.0
      %803 = vmatpush1.msra.mxu0 0.0
      %804 = vmatprep.subr.mxu0 0.0
      %805 = vmatpush1.msra.mxu0 0.0
      %806 = vmatprep.subr.mxu0 0.0
      %807 = vmatpush1.msra.mxu0 0.0
      %808 = vmatprep.subr.mxu0 0.0
      %809 = vmatpush1.msra.mxu0 %v771
      %810 = vmatprep.subr.mxu0 0.0
      %811 = vmatpush2.msra.mxu0 0.0
      %812 = vmatprep.subr.mxu0 0.0
      %813 = vmatpush2.msra.mxu0 0.0
      %814 = vmatprep.subr.mxu0 0.0
      %815 = vmatpush2.msra.mxu0 0.0
      %816 = vmatprep.subr.mxu0 0.0
      %817 = vmatpush2.msra.mxu0 0.0
      %818 = vmatprep.subr.mxu0 0.0
      %819 = vmatpush2.msra.mxu0 0.0
      %820 = vmatprep.subr.mxu0 0.0
      %821 = vmatpush2.msra.mxu0 0.0
      %822 = vmatprep.subr.mxu0 0.0
      %823 = vmatpush2.msra.mxu0 0.0
      %824 = vmatprep.subr.mxu0 0.0
      %825 = vmatpush2.msra.mxu0 0.0
      %826 = vmatprep.subr.mxu0 0.0
      %827 = vmatpush2.msra.mxu0 0.0
      %828 = vmatprep.subr.mxu0 0.0
      %829 = vmatpush2.msra.mxu0 0.0
      %830 = vmatprep.subr.mxu0 0.0
      %831 = vmatpush2.msra.mxu0 0.0
      %832 = vmatprep.subr.mxu0 0.0
      %833 = vmatpush2.msra.mxu0 0.0
      %834 = vmatprep.subr.mxu0 0.0
      %835 = vmatpush2.msra.mxu0 0.0
      %836 = vmatprep.subr.mxu0 0.0
      %837 = vmatpush2.msra.mxu0 0.0
      %838 = vmatprep.subr.mxu0 0.0
      %839 = vmatpush2.msra.mxu0 0.0
      %840 = vmatprep.subr.mxu0 0.0
      %841 = vmatpush2.msra.mxu0 0.0
      %842 = vmatprep.mubr.f32.mxu0 0.0
      %843 = vmatmul.mubr.f32.gmra.mxu0 %v773
      %v844 = vpop.f32.mrf.mxu0
      %v845 = vadd.f32 0.0, %v844
      %v846 = vpop.f32.mrf.mxu0
      %847 = vmatprep.mubr.f32.mxu0 0.0
      %848 = vmatmul.mubr.f32.gmra.mxu0 %v776
      %v849 = vpop.f32.mrf.mxu0
      %v850 = vadd.f32 0.0, %v849
      %v851 = vpop.f32.mrf.mxu0
      %852 = vdwg.mxu0
      %s853 = scalar_lea.vmem %s174, 48
      %854 = vst.msk [vmem:[%s853] sm:$0xff] %vm343, %v845
      %855 = vst.msk [vmem:[%s853 + $0x8] sm:$0xff] %vm343, %v850
      %v856 = vld [vmem:[%s1] sm:$0xff]
      %v857 = vld [vmem:[%s1 + $0x8] sm:$0xff]
      %s858 = scalar_lea.vmem %s167, 32
      %v859 = vld [vmem:[%s858] sm:$0xff]
      %v861 = vsel %vm179, %v856, 0
      %v864 = vsel %vm179, %v857, 0
      %866 = vmatprep.subr.mxu0 0.0
      %867 = vmatpush1.msra.mxu0 0.0
      %868 = vmatprep.subr.mxu0 0.0
      %869 = vmatpush1.msra.mxu0 0.0
      %870 = vmatprep.subr.mxu0 0.0
      %871 = vmatpush1.msra.mxu0 0.0
      %872 = vmatprep.subr.mxu0 0.0
      %873 = vmatpush1.msra.mxu0 0.0
      %874 = vmatprep.subr.mxu0 0.0
      %875 = vmatpush1.msra.mxu0 0.0
      %876 = vmatprep.subr.mxu0 0.0
      %877 = vmatpush1.msra.mxu0 0.0
      %878 = vmatprep.subr.mxu0 0.0
      %879 = vmatpush1.msra.mxu0 0.0
      %880 = vmatprep.subr.mxu0 0.0
      %881 = vmatpush1.msra.mxu0 0.0
      %882 = vmatprep.subr.mxu0 0.0
      %883 = vmatpush1.msra.mxu0 0.0
      %884 = vmatprep.subr.mxu0 0.0
      %885 = vmatpush1.msra.mxu0 0.0
      %886 = vmatprep.subr.mxu0 0.0
      %887 = vmatpush1.msra.mxu0 0.0
      %888 = vmatprep.subr.mxu0 0.0
      %889 = vmatpush1.msra.mxu0 0.0
      %890 = vmatprep.subr.mxu0 0.0
      %891 = vmatpush1.msra.mxu0 0.0
      %892 = vmatprep.subr.mxu0 0.0
      %893 = vmatpush1.msra.mxu0 0.0
      %894 = vmatprep.subr.mxu0 0.0
      %895 = vmatpush1.msra.mxu0 0.0
      %896 = vmatprep.subr.mxu0 0.0
      %897 = vmatpush1.msra.mxu0 %v859
      %898 = vmatprep.subr.mxu0 0.0
      %899 = vmatpush2.msra.mxu0 0.0
      %900 = vmatprep.subr.mxu0 0.0
      %901 = vmatpush2.msra.mxu0 0.0
      %902 = vmatprep.subr.mxu0 0.0
      %903 = vmatpush2.msra.mxu0 0.0
      %904 = vmatprep.subr.mxu0 0.0
      %905 = vmatpush2.msra.mxu0 0.0
      %906 = vmatprep.subr.mxu0 0.0
      %907 = vmatpush2.msra.mxu0 0.0
      %908 = vmatprep.subr.mxu0 0.0
      %909 = vmatpush2.msra.mxu0 0.0
      %910 = vmatprep.subr.mxu0 0.0
      %911 = vmatpush2.msra.mxu0 0.0
      %912 = vmatprep.subr.mxu0 0.0
      %913 = vmatpush2.msra.mxu0 0.0
      %914 = vmatprep.subr.mxu0 0.0
      %915 = vmatpush2.msra.mxu0 0.0
      %916 = vmatprep.subr.mxu0 0.0
      %917 = vmatpush2.msra.mxu0 0.0
      %918 = vmatprep.subr.mxu0 0.0
      %919 = vmatpush2.msra.mxu0 0.0
      %920 = vmatprep.subr.mxu0 0.0
      %921 = vmatpush2.msra.mxu0 0.0
      %922 = vmatprep.subr.mxu0 0.0
      %923 = vmatpush2.msra.mxu0 0.0
      %924 = vmatprep.subr.mxu0 0.0
      %925 = vmatpush2.msra.mxu0 0.0
      %926 = vmatprep.subr.mxu0 0.0
      %927 = vmatpush2.msra.mxu0 0.0
      %928 = vmatprep.subr.mxu0 0.0
      %929 = vmatpush2.msra.mxu0 0.0
      %930 = vmatprep.mubr.f32.mxu0 0.0
      %931 = vmatmul.mubr.f32.gmra.mxu0 %v861
      %v932 = vpop.f32.mrf.mxu0
      %v933 = vadd.f32 0.0, %v932
      %v934 = vpop.f32.mrf.mxu0
      %935 = vmatprep.mubr.f32.mxu0 0.0
      %936 = vmatmul.mubr.f32.gmra.mxu0 %v864
      %v937 = vpop.f32.mrf.mxu0
      %v938 = vadd.f32 0.0, %v937
      %v939 = vpop.f32.mrf.mxu0
      %940 = vdwg.mxu0
      %v941 = vld [vmem:[%s2] sm:$0xff]
      %v943 = vsel %vm179, %v933, 0
      %v946 = vsel %vm179, %v938, 0
      %948 = vmatprep.subr.mxu0 0.0
      %949 = vmatpush1.msra.mxu0 0.0
      %950 = vmatprep.subr.mxu0 0.0
      %951 = vmatpush1.msra.mxu0 0.0
      %952 = vmatprep.subr.mxu0 0.0
      %953 = vmatpush1.msra.mxu0 0.0
      %954 = vmatprep.subr.mxu0 0.0
      %955 = vmatpush1.msra.mxu0 0.0
      %956 = vmatprep.subr.mxu0 0.0
      %957 = vmatpush1.msra.mxu0 0.0
      %958 = vmatprep.subr.mxu0 0.0
      %959 = vmatpush1.msra.mxu0 0.0
      %960 = vmatprep.subr.mxu0 0.0
      %961 = vmatpush1.msra.mxu0 0.0
      %962 = vmatprep.subr.mxu0 0.0
      %963 = vmatpush1.msra.mxu0 0.0
      %964 = vmatprep.subr.mxu0 0.0
      %965 = vmatpush1.msra.mxu0 0.0
      %966 = vmatprep.subr.mxu0 0.0
      %967 = vmatpush1.msra.mxu0 0.0
      %968 = vmatprep.subr.mxu0 0.0
      %969 = vmatpush1.msra.mxu0 0.0
      %970 = vmatprep.subr.mxu0 0.0
      %971 = vmatpush1.msra.mxu0 0.0
      %972 = vmatprep.subr.mxu0 0.0
      %973 = vmatpush1.msra.mxu0 0.0
      %974 = vmatprep.subr.mxu0 0.0
      %975 = vmatpush1.msra.mxu0 0.0
      %976 = vmatprep.subr.mxu0 0.0
      %977 = vmatpush1.msra.mxu0 0.0
      %978 = vmatprep.subr.mxu0 0.0
      %979 = vmatpush1.msra.mxu0 %v941
      %980 = vmatprep.subr.mxu0 0.0
      %981 = vmatpush2.msra.mxu0 0.0
      %982 = vmatprep.subr.mxu0 0.0
      %983 = vmatpush2.msra.mxu0 0.0
      %984 = vmatprep.subr.mxu0 0.0
      %985 = vmatpush2.msra.mxu0 0.0
      %986 = vmatprep.subr.mxu0 0.0
      %987 = vmatpush2.msra.mxu0 0.0
      %988 = vmatprep.subr.mxu0 0.0
      %989 = vmatpush2.msra.mxu0 0.0
      %990 = vmatprep.subr.mxu0 0.0
      %991 = vmatpush2.msra.mxu0 0.0
      %992 = vmatprep.subr.mxu0 0.0
      %993 = vmatpush2.msra.mxu0 0.0
      %994 = vmatprep.subr.mxu0 0.0
      %995 = vmatpush2.msra.mxu0 0.0
      %996 = vmatprep.subr.mxu0 0.0
      %997 = vmatpush2.msra.mxu0 0.0
      %998 = vmatprep.subr.mxu0 0.0
      %999 = vmatpush2.msra.mxu0 0.0
      %1000 = vmatprep.subr.mxu0 0.0
      %1001 = vmatpush2.msra.mxu0 0.0
      %1002 = vmatprep.subr.mxu0 0.0
      %1003 = vmatpush2.msra.mxu0 0.0
      %1004 = vmatprep.subr.mxu0 0.0
      %1005 = vmatpush2.msra.mxu0 0.0
      %1006 = vmatprep.subr.mxu0 0.0
      %1007 = vmatpush2.msra.mxu0 0.0
      %1008 = vmatprep.subr.mxu0 0.0
      %1009 = vmatpush2.msra.mxu0 0.0
      %1010 = vmatprep.subr.mxu0 0.0
      %1011 = vmatpush2.msra.mxu0 0.0
      %1012 = vmatprep.mubr.f32.mxu0 0.0
      %1013 = vmatmul.mubr.f32.gmra.mxu0 %v943
      %v1014 = vpop.f32.mrf.mxu0
      %v1015 = vadd.f32 0.0, %v1014
      %v1016 = vpop.f32.mrf.mxu0
      %1017 = vmatprep.mubr.f32.mxu0 0.0
      %1018 = vmatmul.mubr.f32.gmra.mxu0 %v946
      %v1019 = vpop.f32.mrf.mxu0
      %v1020 = vadd.f32 0.0, %v1019
      %v1021 = vpop.f32.mrf.mxu0
      %1022 = vdwg.mxu0
      %s1023 = scalar_lea.vmem %s174, 64
      %1024 = vst.msk [vmem:[%s1023] sm:$0xff] %vm343, %v1015
      %1025 = vst.msk [vmem:[%s1023 + $0x8] sm:$0xff] %vm343, %v1020
      %v1026 = vld [vmem:[%s1] sm:$0xff]
      %v1027 = vld [vmem:[%s1 + $0x8] sm:$0xff]
      %s1028 = scalar_lea.vmem %s167, 40
      %v1029 = vld [vmem:[%s1028] sm:$0xff]
      %v1031 = vsel %vm179, %v1026, 0
      %v1034 = vsel %vm179, %v1027, 0
      %1036 = vmatprep.subr.mxu0 0.0
      %1037 = vmatpush1.msra.mxu0 0.0
      %1038 = vmatprep.subr.mxu0 0.0
      %1039 = vmatpush1.msra.mxu0 0.0
      %1040 = vmatprep.subr.mxu0 0.0
      %1041 = vmatpush1.msra.mxu0 0.0
      %1042 = vmatprep.subr.mxu0 0.0
      %1043 = vmatpush1.msra.mxu0 0.0
      %1044 = vmatprep.subr.mxu0 0.0
      %1045 = vmatpush1.msra.mxu0 0.0
      %1046 = vmatprep.subr.mxu0 0.0
      %1047 = vmatpush1.msra.mxu0 0.0
      %1048 = vmatprep.subr.mxu0 0.0
      %1049 = vmatpush1.msra.mxu0 0.0
      %1050 = vmatprep.subr.mxu0 0.0
      %1051 = vmatpush1.msra.mxu0 0.0
      %1052 = vmatprep.subr.mxu0 0.0
      %1053 = vmatpush1.msra.mxu0 0.0
      %1054 = vmatprep.subr.mxu0 0.0
      %1055 = vmatpush1.msra.mxu0 0.0
      %1056 = vmatprep.subr.mxu0 0.0
      %1057 = vmatpush1.msra.mxu0 0.0
      %1058 = vmatprep.subr.mxu0 0.0
      %1059 = vmatpush1.msra.mxu0 0.0
      %1060 = vmatprep.subr.mxu0 0.0
      %1061 = vmatpush1.msra.mxu0 0.0
      %1062 = vmatprep.subr.mxu0 0.0
      %1063 = vmatpush1.msra.mxu0 0.0
      %1064 = vmatprep.subr.mxu0 0.0
      %1065 = vmatpush1.msra.mxu0 0.0
      %1066 = vmatprep.subr.mxu0 0.0
      %1067 = vmatpush1.msra.mxu0 %v1029
      %1068 = vmatprep.subr.mxu0 0.0
      %1069 = vmatpush2.msra.mxu0 0.0
      %1070 = vmatprep.subr.mxu0 0.0
      %1071 = vmatpush2.msra.mxu0 0.0
      %1072 = vmatprep.subr.mxu0 0.0
      %1073 = vmatpush2.msra.mxu0 0.0
      %1074 = vmatprep.subr.mxu0 0.0
      %1075 = vmatpush2.msra.mxu0 0.0
      %1076 = vmatprep.subr.mxu0 0.0
      %1077 = vmatpush2.msra.mxu0 0.0
      %1078 = vmatprep.subr.mxu0 0.0
      %1079 = vmatpush2.msra.mxu0 0.0
      %1080 = vmatprep.subr.mxu0 0.0
      %1081 = vmatpush2.msra.mxu0 0.0
      %1082 = vmatprep.subr.mxu0 0.0
      %1083 = vmatpush2.msra.mxu0 0.0
      %1084 = vmatprep.subr.mxu0 0.0
      %1085 = vmatpush2.msra.mxu0 0.0
      %1086 = vmatprep.subr.mxu0 0.0
      %1087 = vmatpush2.msra.mxu0 0.0
      %1088 = vmatprep.subr.mxu0 0.0
      %1089 = vmatpush2.msra.mxu0 0.0
      %1090 = vmatprep.subr.mxu0 0.0
      %1091 = vmatpush2.msra.mxu0 0.0
      %1092 = vmatprep.subr.mxu0 0.0
      %1093 = vmatpush2.msra.mxu0 0.0
      %1094 = vmatprep.subr.mxu0 0.0
      %1095 = vmatpush2.msra.mxu0 0.0
      %1096 = vmatprep.subr.mxu0 0.0
      %1097 = vmatpush2.msra.mxu0 0.0
      %1098 = vmatprep.subr.mxu0 0.0
      %1099 = vmatpush2.msra.mxu0 0.0
      %1100 = vmatprep.mubr.f32.mxu0 0.0
      %1101 = vmatmul.mubr.f32.gmra.mxu0 %v1031
      %v1102 = vpop.f32.mrf.mxu0
      %v1103 = vadd.f32 0.0, %v1102
      %v1104 = vpop.f32.mrf.mxu0
      %1105 = vmatprep.mubr.f32.mxu0 0.0
      %1106 = vmatmul.mubr.f32.gmra.mxu0 %v1034
      %v1107 = vpop.f32.mrf.mxu0
      %v1108 = vadd.f32 0.0, %v1107
      %v1109 = vpop.f32.mrf.mxu0
      %1110 = vdwg.mxu0
      %v1111 = vld [vmem:[%s2] sm:$0xff]
      %v1113 = vsel %vm179, %v1103, 0
      %v1116 = vsel %vm179, %v1108, 0
      %1118 = vmatprep.subr.mxu0 0.0
      %1119 = vmatpush1.msra.mxu0 0.0
      %1120 = vmatprep.subr.mxu0 0.0
      %1121 = vmatpush1.msra.mxu0 0.0
      %1122 = vmatprep.subr.mxu0 0.0
      %1123 = vmatpush1.msra.mxu0 0.0
      %1124 = vmatprep.subr.mxu0 0.0
      %1125 = vmatpush1.msra.mxu0 0.0
      %1126 = vmatprep.subr.mxu0 0.0
      %1127 = vmatpush1.msra.mxu0 0.0
      %1128 = vmatprep.subr.mxu0 0.0
      %1129 = vmatpush1.msra.mxu0 0.0
      %1130 = vmatprep.subr.mxu0 0.0
      %1131 = vmatpush1.msra.mxu0 0.0
      %1132 = vmatprep.subr.mxu0 0.0
      %1133 = vmatpush1.msra.mxu0 0.0
      %1134 = vmatprep.subr.mxu0 0.0
      %1135 = vmatpush1.msra.mxu0 0.0
      %1136 = vmatprep.subr.mxu0 0.0
      %1137 = vmatpush1.msra.mxu0 0.0
      %1138 = vmatprep.subr.mxu0 0.0
      %1139 = vmatpush1.msra.mxu0 0.0
      %1140 = vmatprep.subr.mxu0 0.0
      %1141 = vmatpush1.msra.mxu0 0.0
      %1142 = vmatprep.subr.mxu0 0.0
      %1143 = vmatpush1.msra.mxu0 0.0
      %1144 = vmatprep.subr.mxu0 0.0
      %1145 = vmatpush1.msra.mxu0 0.0
      %1146 = vmatprep.subr.mxu0 0.0
      %1147 = vmatpush1.msra.mxu0 0.0
      %1148 = vmatprep.subr.mxu0 0.0
      %1149 = vmatpush1.msra.mxu0 %v1111
      %1150 = vmatprep.subr.mxu0 0.0
      %1151 = vmatpush2.msra.mxu0 0.0
      %1152 = vmatprep.subr.mxu0 0.0
      %1153 = vmatpush2.msra.mxu0 0.0
      %1154 = vmatprep.subr.mxu0 0.0
      %1155 = vmatpush2.msra.mxu0 0.0
      %1156 = vmatprep.subr.mxu0 0.0
      %1157 = vmatpush2.msra.mxu0 0.0
      %1158 = vmatprep.subr.mxu0 0.0
      %1159 = vmatpush2.msra.mxu0 0.0
      %1160 = vmatprep.subr.mxu0 0.0
      %1161 = vmatpush2.msra.mxu0 0.0
      %1162 = vmatprep.subr.mxu0 0.0
      %1163 = vmatpush2.msra.mxu0 0.0
      %1164 = vmatprep.subr.mxu0 0.0
      %1165 = vmatpush2.msra.mxu0 0.0
      %1166 = vmatprep.subr.mxu0 0.0
      %1167 = vmatpush2.msra.mxu0 0.0
      %1168 = vmatprep.subr.mxu0 0.0
      %1169 = vmatpush2.msra.mxu0 0.0
      %1170 = vmatprep.subr.mxu0 0.0
      %1171 = vmatpush2.msra.mxu0 0.0
      %1172 = vmatprep.subr.mxu0 0.0
      %1173 = vmatpush2.msra.mxu0 0.0
      %1174 = vmatprep.subr.mxu0 0.0
      %1175 = vmatpush2.msra.mxu0 0.0
      %1176 = vmatprep.subr.mxu0 0.0
      %1177 = vmatpush2.msra.mxu0 0.0
      %1178 = vmatprep.subr.mxu0 0.0
      %1179 = vmatpush2.msra.mxu0 0.0
      %1180 = vmatprep.subr.mxu0 0.0
      %1181 = vmatpush2.msra.mxu0 0.0
      %1182 = vmatprep.mubr.f32.mxu0 0.0
      %1183 = vmatmul.mubr.f32.gmra.mxu0 %v1113
      %v1184 = vpop.f32.mrf.mxu0
      %v1185 = vadd.f32 0.0, %v1184
      %v1186 = vpop.f32.mrf.mxu0
      %1187 = vmatprep.mubr.f32.mxu0 0.0
      %1188 = vmatmul.mubr.f32.gmra.mxu0 %v1116
      %v1189 = vpop.f32.mrf.mxu0
      %v1190 = vadd.f32 0.0, %v1189
      %v1191 = vpop.f32.mrf.mxu0
      %1192 = vdwg.mxu0
      %s1193 = scalar_lea.vmem %s174, 80
      %1194 = vst.msk [vmem:[%s1193] sm:$0xff] %vm343, %v1185
      %1195 = vst.msk [vmem:[%s1193 + $0x8] sm:$0xff] %vm343, %v1190
      %v1196 = vld [vmem:[%s1] sm:$0xff]
      %v1197 = vld [vmem:[%s1 + $0x8] sm:$0xff]
      %s1198 = scalar_lea.vmem %s167, 48
      %v1199 = vld [vmem:[%s1198] sm:$0xff]
      %v1201 = vsel %vm179, %v1196, 0
      %v1204 = vsel %vm179, %v1197, 0
      %1206 = vmatprep.subr.mxu0 0.0
      %1207 = vmatpush1.msra.mxu0 0.0
      %1208 = vmatprep.subr.mxu0 0.0
      %1209 = vmatpush1.msra.mxu0 0.0
      %1210 = vmatprep.subr.mxu0 0.0
      %1211 = vmatpush1.msra.mxu0 0.0
      %1212 = vmatprep.subr.mxu0 0.0
      %1213 = vmatpush1.msra.mxu0 0.0
      %1214 = vmatprep.subr.mxu0 0.0
      %1215 = vmatpush1.msra.mxu0 0.0
      %1216 = vmatprep.subr.mxu0 0.0
      %1217 = vmatpush1.msra.mxu0 0.0
      %1218 = vmatprep.subr.mxu0 0.0
      %1219 = vmatpush1.msra.mxu0 0.0
      %1220 = vmatprep.subr.mxu0 0.0
      %1221 = vmatpush1.msra.mxu0 0.0
      %1222 = vmatprep.subr.mxu0 0.0
      %1223 = vmatpush1.msra.mxu0 0.0
      %1224 = vmatprep.subr.mxu0 0.0
      %1225 = vmatpush1.msra.mxu0 0.0
      %1226 = vmatprep.subr.mxu0 0.0
      %1227 = vmatpush1.msra.mxu0 0.0
      %1228 = vmatprep.subr.mxu0 0.0
      %1229 = vmatpush1.msra.mxu0 0.0
      %1230 = vmatprep.subr.mxu0 0.0
      %1231 = vmatpush1.msra.mxu0 0.0
      %1232 = vmatprep.subr.mxu0 0.0
      %1233 = vmatpush1.msra.mxu0 0.0
      %1234 = vmatprep.subr.mxu0 0.0
      %1235 = vmatpush1.msra.mxu0 0.0
      %1236 = vmatprep.subr.mxu0 0.0
      %1237 = vmatpush1.msra.mxu0 %v1199
      %1238 = vmatprep.subr.mxu0 0.0
      %1239 = vmatpush2.msra.mxu0 0.0
      %1240 = vmatprep.subr.mxu0 0.0
      %1241 = vmatpush2.msra.mxu0 0.0
      %1242 = vmatprep.subr.mxu0 0.0
      %1243 = vmatpush2.msra.mxu0 0.0
      %1244 = vmatprep.subr.mxu0 0.0
      %1245 = vmatpush2.msra.mxu0 0.0
      %1246 = vmatprep.subr.mxu0 0.0
      %1247 = vmatpush2.msra.mxu0 0.0
      %1248 = vmatprep.subr.mxu0 0.0
      %1249 = vmatpush2.msra.mxu0 0.0
      %1250 = vmatprep.subr.mxu0 0.0
      %1251 = vmatpush2.msra.mxu0 0.0
      %1252 = vmatprep.subr.mxu0 0.0
      %1253 = vmatpush2.msra.mxu0 0.0
      %1254 = vmatprep.subr.mxu0 0.0
      %1255 = vmatpush2.msra.mxu0 0.0
      %1256 = vmatprep.subr.mxu0 0.0
      %1257 = vmatpush2.msra.mxu0 0.0
      %1258 = vmatprep.subr.mxu0 0.0
      %1259 = vmatpush2.msra.mxu0 0.0
      %1260 = vmatprep.subr.mxu0 0.0
      %1261 = vmatpush2.msra.mxu0 0.0
      %1262 = vmatprep.subr.mxu0 0.0
      %1263 = vmatpush2.msra.mxu0 0.0
      %1264 = vmatprep.subr.mxu0 0.0
      %1265 = vmatpush2.msra.mxu0 0.0
      %1266 = vmatprep.subr.mxu0 0.0
      %1267 = vmatpush2.msra.mxu0 0.0
      %1268 = vmatprep.subr.mxu0 0.0
      %1269 = vmatpush2.msra.mxu0 0.0
      %1270 = vmatprep.mubr.f32.mxu0 0.0
      %1271 = vmatmul.mubr.f32.gmra.mxu0 %v1201
      %v1272 = vpop.f32.mrf.mxu0
      %v1273 = vadd.f32 0.0, %v1272
      %v1274 = vpop.f32.mrf.mxu0
      %1275 = vmatprep.mubr.f32.mxu0 0.0
      %1276 = vmatmul.mubr.f32.gmra.mxu0 %v1204
      %v1277 = vpop.f32.mrf.mxu0
      %v1278 = vadd.f32 0.0, %v1277
      %v1279 = vpop.f32.mrf.mxu0
      %1280 = vdwg.mxu0
      %v1281 = vld [vmem:[%s2] sm:$0xff]
      %v1283 = vsel %vm179, %v1273, 0
      %v1286 = vsel %vm179, %v1278, 0
      %1288 = vmatprep.subr.mxu0 0.0
      %1289 = vmatpush1.msra.mxu0 0.0
      %1290 = vmatprep.subr.mxu0 0.0
      %1291 = vmatpush1.msra.mxu0 0.0
      %1292 = vmatprep.subr.mxu0 0.0
      %1293 = vmatpush1.msra.mxu0 0.0
      %1294 = vmatprep.subr.mxu0 0.0
      %1295 = vmatpush1.msra.mxu0 0.0
      %1296 = vmatprep.subr.mxu0 0.0
      %1297 = vmatpush1.msra.mxu0 0.0
      %1298 = vmatprep.subr.mxu0 0.0
      %1299 = vmatpush1.msra.mxu0 0.0
      %1300 = vmatprep.subr.mxu0 0.0
      %1301 = vmatpush1.msra.mxu0 0.0
      %1302 = vmatprep.subr.mxu0 0.0
      %1303 = vmatpush1.msra.mxu0 0.0
      %1304 = vmatprep.subr.mxu0 0.0
      %1305 = vmatpush1.msra.mxu0 0.0
      %1306 = vmatprep.subr.mxu0 0.0
      %1307 = vmatpush1.msra.mxu0 0.0
      %1308 = vmatprep.subr.mxu0 0.0
      %1309 = vmatpush1.msra.mxu0 0.0
      %1310 = vmatprep.subr.mxu0 0.0
      %1311 = vmatpush1.msra.mxu0 0.0
      %1312 = vmatprep.subr.mxu0 0.0
      %1313 = vmatpush1.msra.mxu0 0.0
      %1314 = vmatprep.subr.mxu0 0.0
      %1315 = vmatpush1.msra.mxu0 0.0
      %1316 = vmatprep.subr.mxu0 0.0
      %1317 = vmatpush1.msra.mxu0 0.0
      %1318 = vmatprep.subr.mxu0 0.0
      %1319 = vmatpush1.msra.mxu0 %v1281
      %1320 = vmatprep.subr.mxu0 0.0
      %1321 = vmatpush2.msra.mxu0 0.0
      %1322 = vmatprep.subr.mxu0 0.0
      %1323 = vmatpush2.msra.mxu0 0.0
      %1324 = vmatprep.subr.mxu0 0.0
      %1325 = vmatpush2.msra.mxu0 0.0
      %1326 = vmatprep.subr.mxu0 0.0
      %1327 = vmatpush2.msra.mxu0 0.0
      %1328 = vmatprep.subr.mxu0 0.0
      %1329 = vmatpush2.msra.mxu0 0.0
      %1330 = vmatprep.subr.mxu0 0.0
      %1331 = vmatpush2.msra.mxu0 0.0
      %1332 = vmatprep.subr.mxu0 0.0
      %1333 = vmatpush2.msra.mxu0 0.0
      %1334 = vmatprep.subr.mxu0 0.0
      %1335 = vmatpush2.msra.mxu0 0.0
      %1336 = vmatprep.subr.mxu0 0.0
      %1337 = vmatpush2.msra.mxu0 0.0
      %1338 = vmatprep.subr.mxu0 0.0
      %1339 = vmatpush2.msra.mxu0 0.0
      %1340 = vmatprep.subr.mxu0 0.0
      %1341 = vmatpush2.msra.mxu0 0.0
      %1342 = vmatprep.subr.mxu0 0.0
      %1343 = vmatpush2.msra.mxu0 0.0
      %1344 = vmatprep.subr.mxu0 0.0
      %1345 = vmatpush2.msra.mxu0 0.0
      %1346 = vmatprep.subr.mxu0 0.0
      %1347 = vmatpush2.msra.mxu0 0.0
      %1348 = vmatprep.subr.mxu0 0.0
      %1349 = vmatpush2.msra.mxu0 0.0
      %1350 = vmatprep.subr.mxu0 0.0
      %1351 = vmatpush2.msra.mxu0 0.0
      %1352 = vmatprep.mubr.f32.mxu0 0.0
      %1353 = vmatmul.mubr.f32.gmra.mxu0 %v1283
      %v1354 = vpop.f32.mrf.mxu0
      %v1355 = vadd.f32 0.0, %v1354
      %v1356 = vpop.f32.mrf.mxu0
      %1357 = vmatprep.mubr.f32.mxu0 0.0
      %1358 = vmatmul.mubr.f32.gmra.mxu0 %v1286
      %v1359 = vpop.f32.mrf.mxu0
      %v1360 = vadd.f32 0.0, %v1359
      %v1361 = vpop.f32.mrf.mxu0
      %1362 = vdwg.mxu0
      %s1363 = scalar_lea.vmem %s174, 96
      %1364 = vst.msk [vmem:[%s1363] sm:$0xff] %vm343, %v1355
      %1365 = vst.msk [vmem:[%s1363 + $0x8] sm:$0xff] %vm343, %v1360
      %v1366 = vld [vmem:[%s1] sm:$0xff]
      %v1367 = vld [vmem:[%s1 + $0x8] sm:$0xff]
      %s1368 = scalar_lea.vmem %s167, 56
      %v1369 = vld [vmem:[%s1368] sm:$0xff]
      %v1371 = vsel %vm179, %v1366, 0
      %v1374 = vsel %vm179, %v1367, 0
      %1376 = vmatprep.subr.mxu0 0.0
      %1377 = vmatpush1.msra.mxu0 0.0
      %1378 = vmatprep.subr.mxu0 0.0
      %1379 = vmatpush1.msra.mxu0 0.0
      %1380 = vmatprep.subr.mxu0 0.0
      %1381 = vmatpush1.msra.mxu0 0.0
      %1382 = vmatprep.subr.mxu0 0.0
      %1383 = vmatpush1.msra.mxu0 0.0
      %1384 = vmatprep.subr.mxu0 0.0
      %1385 = vmatpush1.msra.mxu0 0.0
      %1386 = vmatprep.subr.mxu0 0.0
      %1387 = vmatpush1.msra.mxu0 0.0
      %1388 = vmatprep.subr.mxu0 0.0
      %1389 = vmatpush1.msra.mxu0 0.0
      %1390 = vmatprep.subr.mxu0 0.0
      %1391 = vmatpush1.msra.mxu0 0.0
      %1392 = vmatprep.subr.mxu0 0.0
      %1393 = vmatpush1.msra.mxu0 0.0
      %1394 = vmatprep.subr.mxu0 0.0
      %1395 = vmatpush1.msra.mxu0 0.0
      %1396 = vmatprep.subr.mxu0 0.0
      %1397 = vmatpush1.msra.mxu0 0.0
      %1398 = vmatprep.subr.mxu0 0.0
      %1399 = vmatpush1.msra.mxu0 0.0
      %1400 = vmatprep.subr.mxu0 0.0
      %1401 = vmatpush1.msra.mxu0 0.0
      %1402 = vmatprep.subr.mxu0 0.0
      %1403 = vmatpush1.msra.mxu0 0.0
      %1404 = vmatprep.subr.mxu0 0.0
      %1405 = vmatpush1.msra.mxu0 0.0
      %1406 = vmatprep.subr.mxu0 0.0
      %1407 = vmatpush1.msra.mxu0 %v1369
      %1408 = vmatprep.subr.mxu0 0.0
      %1409 = vmatpush2.msra.mxu0 0.0
      %1410 = vmatprep.subr.mxu0 0.0
      %1411 = vmatpush2.msra.mxu0 0.0
      %1412 = vmatprep.subr.mxu0 0.0
      %1413 = vmatpush2.msra.mxu0 0.0
      %1414 = vmatprep.subr.mxu0 0.0
      %1415 = vmatpush2.msra.mxu0 0.0
      %1416 = vmatprep.subr.mxu0 0.0
      %1417 = vmatpush2.msra.mxu0 0.0
      %1418 = vmatprep.subr.mxu0 0.0
      %1419 = vmatpush2.msra.mxu0 0.0
      %1420 = vmatprep.subr.mxu0 0.0
      %1421 = vmatpush2.msra.mxu0 0.0
      %1422 = vmatprep.subr.mxu0 0.0
      %1423 = vmatpush2.msra.mxu0 0.0
      %1424 = vmatprep.subr.mxu0 0.0
      %1425 = vmatpush2.msra.mxu0 0.0
      %1426 = vmatprep.subr.mxu0 0.0
      %1427 = vmatpush2.msra.mxu0 0.0
      %1428 = vmatprep.subr.mxu0 0.0
      %1429 = vmatpush2.msra.mxu0 0.0
      %1430 = vmatprep.subr.mxu0 0.0
      %1431 = vmatpush2.msra.mxu0 0.0
      %1432 = vmatprep.subr.mxu0 0.0
      %1433 = vmatpush2.msra.mxu0 0.0
      %1434 = vmatprep.subr.mxu0 0.0
      %1435 = vmatpush2.msra.mxu0 0.0
      %1436 = vmatprep.subr.mxu0 0.0
      %1437 = vmatpush2.msra.mxu0 0.0
      %1438 = vmatprep.subr.mxu0 0.0
      %1439 = vmatpush2.msra.mxu0 0.0
      %1440 = vmatprep.mubr.f32.mxu0 0.0
      %1441 = vmatmul.mubr.f32.gmra.mxu0 %v1371
      %v1442 = vpop.f32.mrf.mxu0
      %v1443 = vadd.f32 0.0, %v1442
      %v1444 = vpop.f32.mrf.mxu0
      %1445 = vmatprep.mubr.f32.mxu0 0.0
      %1446 = vmatmul.mubr.f32.gmra.mxu0 %v1374
      %v1447 = vpop.f32.mrf.mxu0
      %v1448 = vadd.f32 0.0, %v1447
      %v1449 = vpop.f32.mrf.mxu0
      %1450 = vdwg.mxu0
      %v1451 = vld [vmem:[%s2] sm:$0xff]
      %v1453 = vsel %vm179, %v1443, 0
      %v1456 = vsel %vm179, %v1448, 0
      %1458 = vmatprep.subr.mxu0 0.0
      %1459 = vmatpush1.msra.mxu0 0.0
      %1460 = vmatprep.subr.mxu0 0.0
      %1461 = vmatpush1.msra.mxu0 0.0
      %1462 = vmatprep.subr.mxu0 0.0
      %1463 = vmatpush1.msra.mxu0 0.0
      %1464 = vmatprep.subr.mxu0 0.0
      %1465 = vmatpush1.msra.mxu0 0.0
      %1466 = vmatprep.subr.mxu0 0.0
      %1467 = vmatpush1.msra.mxu0 0.0
      %1468 = vmatprep.subr.mxu0 0.0
      %1469 = vmatpush1.msra.mxu0 0.0
      %1470 = vmatprep.subr.mxu0 0.0
      %1471 = vmatpush1.msra.mxu0 0.0
      %1472 = vmatprep.subr.mxu0 0.0
      %1473 = vmatpush1.msra.mxu0 0.0
      %1474 = vmatprep.subr.mxu0 0.0
      %1475 = vmatpush1.msra.mxu0 0.0
      %1476 = vmatprep.subr.mxu0 0.0
      %1477 = vmatpush1.msra.mxu0 0.0
      %1478 = vmatprep.subr.mxu0 0.0
      %1479 = vmatpush1.msra.mxu0 0.0
      %1480 = vmatprep.subr.mxu0 0.0
      %1481 = vmatpush1.msra.mxu0 0.0
      %1482 = vmatprep.subr.mxu0 0.0
      %1483 = vmatpush1.msra.mxu0 0.0
      %1484 = vmatprep.subr.mxu0 0.0
      %1485 = vmatpush1.msra.mxu0 0.0
      %1486 = vmatprep.subr.mxu0 0.0
      %1487 = vmatpush1.msra.mxu0 0.0
      %1488 = vmatprep.subr.mxu0 0.0
      %1489 = vmatpush1.msra.mxu0 %v1451
      %1490 = vmatprep.subr.mxu0 0.0
      %1491 = vmatpush2.msra.mxu0 0.0
      %1492 = vmatprep.subr.mxu0 0.0
      %1493 = vmatpush2.msra.mxu0 0.0
      %1494 = vmatprep.subr.mxu0 0.0
      %1495 = vmatpush2.msra.mxu0 0.0
      %1496 = vmatprep.subr.mxu0 0.0
      %1497 = vmatpush2.msra.mxu0 0.0
      %1498 = vmatprep.subr.mxu0 0.0
      %1499 = vmatpush2.msra.mxu0 0.0
      %1500 = vmatprep.subr.mxu0 0.0
      %1501 = vmatpush2.msra.mxu0 0.0
      %1502 = vmatprep.subr.mxu0 0.0
      %1503 = vmatpush2.msra.mxu0 0.0
      %1504 = vmatprep.subr.mxu0 0.0
      %1505 = vmatpush2.msra.mxu0 0.0
      %1506 = vmatprep.subr.mxu0 0.0
      %1507 = vmatpush2.msra.mxu0 0.0
      %1508 = vmatprep.subr.mxu0 0.0
      %1509 = vmatpush2.msra.mxu0 0.0
      %1510 = vmatprep.subr.mxu0 0.0
      %1511 = vmatpush2.msra.mxu0 0.0
      %1512 = vmatprep.subr.mxu0 0.0
      %1513 = vmatpush2.msra.mxu0 0.0
      %1514 = vmatprep.subr.mxu0 0.0
      %1515 = vmatpush2.msra.mxu0 0.0
      %1516 = vmatprep.subr.mxu0 0.0
      %1517 = vmatpush2.msra.mxu0 0.0
      %1518 = vmatprep.subr.mxu0 0.0
      %1519 = vmatpush2.msra.mxu0 0.0
      %1520 = vmatprep.subr.mxu0 0.0
      %1521 = vmatpush2.msra.mxu0 0.0
      %1522 = vmatprep.mubr.f32.mxu0 0.0
      %1523 = vmatmul.mubr.f32.gmra.mxu0 %v1453
      %v1524 = vpop.f32.mrf.mxu0
      %v1525 = vadd.f32 0.0, %v1524
      %v1526 = vpop.f32.mrf.mxu0
      %1527 = vmatprep.mubr.f32.mxu0 0.0
      %1528 = vmatmul.mubr.f32.gmra.mxu0 %v1456
      %v1529 = vpop.f32.mrf.mxu0
      %v1530 = vadd.f32 0.0, %v1529
      %v1531 = vpop.f32.mrf.mxu0
      %1532 = vdwg.mxu0
      %s1533 = scalar_lea.vmem %s174, 112
      %1534 = vst.msk [vmem:[%s1533] sm:$0xff] %vm343, %v1525
      %1535 = vst.msk [vmem:[%s1533 + $0x8] sm:$0xff] %vm343, %v1530
      %s1536 = smul.u32 8, %s14
      %p1537 = scmp.lt.s32.totalorder %s1536, 23
      %s1538 = scalar_select %p1537, %s1536, 23
      %s1539 = smul.addr %s1538, 2
      %s1540 = smul.addr %s1539, 8
      %s1541 = scalar_lea.vmem %s3, %s1540
      // Predicated region
      $region33: #{deeplabv3_forward.21} parent=31 // pred_check
        %p1542 = pneg %p100
      $region34: #{deeplabv3_forward.21} parent=31 // pred_check_branch
        %1544 = sbr.rel (%p1542) target = $region36
      $region35: #{deeplabv3_forward.21} parent=31 // pred_region
        %s1545 = smul.u32 8, %s14
      $region36: #{deeplabv3_forward.21} parent=31 // pred_fallthru
        _
    $region32: #{deeplabv3_forward.21} parent=5 // pred_fallthru
      _
    %p1546 = scmp.le.s32.totalorder 2, %s9
    // Predicated region
    $region37: #{deeplabv3_forward.21} parent=5 // pred_check
      %p1547 = pneg %p1546
    $region38: #{deeplabv3_forward.21} parent=5 // pred_check_branch
      %1549 = sbr.rel (%p1547) target = $region40
    $region39: #{deeplabv3_forward.21} parent=5 // pred_region
      %s1550 = ssub.s32 %s9, 2
      // Predicated region
      $region41: #{deeplabv3_forward.21} parent=39 // pred_check
        %p1551 = pneg %p106
      $region42: #{deeplabv3_forward.21} parent=39 // pred_check_branch
        %1553 = sbr.rel (%p1551) target = $region44
      $region43: #{deeplabv3_forward.21} parent=39 // pred_region
        %s1554 = smul.u32 8, %s15
        %p1555 = scmp.lt.s32.totalorder %s1554, 23
        %s1556 = scalar_select %p1555, %s1554, 23
        %s1557 = smul.addr %s1556, 2
        %s1558 = smul.addr %s1557, 8
        %s1559 = scalar_lea.vmem %s3, %s1558
      $region44: #{deeplabv3_forward.21} parent=39 // pred_fallthru
        _
    $region40: #{deeplabv3_forward.21} parent=5 // pred_fallthru
      _
  $region6: #{deeplabv3_forward.21} parent=0 // loop_footer
    %s13 = sadd.s32 1, %s9
  $region7: #{deeplabv3_forward.21} parent=0 // loop_footer_branch
    %8 = sbr.rel target = $region3
  $region8: #{deeplabv3_forward.21} parent=0 // loop_exit
    _

</llo_original>
